<compile_context>
chip_gen: v7x
topology: tpu7x:2x2x1
jax: 0.10.0
libtpu: 0.0.40
codegen_flags: <defaults>
</compile_context>

<pallas_src>
import jax
import jax.numpy as jnp
from jax import lax
from jax.experimental import pallas as pl
from jax.experimental.pallas import tpu as pltpu


def qnetwork_kernel(x_ref, w1_ref, b1_ref, w2_ref, b2_ref, w3_ref, b3_ref, o_ref):
    # Layer 1: Linear(23, 50) + ReLU        (TB, 23) @ (23, 50) -> (TB, 50)
    h1 = jnp.dot(x_ref[...], w1_ref[...], preferred_element_type=jnp.float32)
    h1 = jnp.maximum(h1 + b1_ref[...], 0.0)
    # Layer 2: Linear(50, 50) + ReLU        (TB, 50) @ (50, 50) -> (TB, 50)
    h2 = jnp.dot(h1, w2_ref[...], preferred_element_type=jnp.float32)
    h2 = jnp.maximum(h2 + b2_ref[...], 0.0)
    # Layer 3: Linear(50, 1), emitted lane-dense:
    #   (1, 50) contracted with (TB, 50) on the feature dim -> (1, TB)
    out_row = lax.dot_general(
        w3_ref[...], h2,
        dimension_numbers=(((1,), (1,)), ((), ())),
        preferred_element_type=jnp.float32,
    )
    o_ref[...] = (out_row + b3_ref[...]).astype(o_ref.dtype)


def qnetwork_forward(x, params, *, tile_b=2048):
    """x: (B, ...) float32 with 23 flattened features. Returns (B, 1) float32."""
    x = x.reshape(x.shape[0], -1).astype(jnp.float32)   # mirrors x.view(x.size(0), -1)
    B, F = x.shape
    assert F == 23, F
    assert tile_b % 128 == 0, tile_b                     # keep output stores lane-aligned

    num_blocks = pl.cdiv(B, tile_b)
    b_pad = num_blocks * tile_b
    if b_pad != B:
        x = jnp.pad(x, ((0, b_pad - B), (0, 0)))

    const = lambda i: (0, 0)   # parameters: same block every step -> stay VMEM-resident
    out = pl.pallas_call(
        qnetwork_kernel,
        out_shape=jax.ShapeDtypeStruct((1, b_pad), jnp.float32),
        grid=(num_blocks,),
        in_specs=[
            pl.BlockSpec((tile_b, 23), lambda i: (i, 0)),   # x: streamed per batch block
            pl.BlockSpec((23, 50), const),                   # w1 (= W1.T)
            pl.BlockSpec((1, 50), const),                    # b1
            pl.BlockSpec((50, 50), const),                   # w2 (= W2.T)
            pl.BlockSpec((1, 50), const),                    # b2
            pl.BlockSpec((1, 50), const),                    # w3 (PyTorch (out,in) layout)
            pl.BlockSpec((1, 1), const),                     # b3
        ],
        out_specs=pl.BlockSpec((1, tile_b), lambda i: (0, i)),  # lane-dense output chunks
        compiler_params=pltpu.CompilerParams(
            dimension_semantics=("parallel",),   # shard batch blocks across TCs (v7x)
            vmem_limit_bytes=32 * 1024 * 1024,
        ),
    )(
        x,
        params["w1"], params["b1"],
        params["w2"], params["b2"],
        params["w3"], params["b3"],
    )
    return out.reshape(-1)[:B].reshape(B, 1)


def init_params(key):
    """Deterministic init mimicking PyTorch nn.Linear default (uniform +-1/sqrt(fan_in)).
    w1, w2 stored as (in, out) = W.T; w3 stored in native PyTorch (out, in) = (1, 50)."""
    def linear_init(k, fan_in, fan_out, transpose):
        kw, kb = jax.random.split(k)
        bound = 1.0 / jnp.sqrt(jnp.float32(fan_in))
        shape = (fan_in, fan_out) if transpose else (fan_out, fan_in)
        w = jax.random.uniform(kw, shape, jnp.float32, -bound, bound)
        b = jax.random.uniform(kb, (1, fan_out), jnp.float32, -bound, bound)
        return w, b

    k1, k2, k3 = jax.random.split(key, 3)
    w1, b1 = linear_init(k1, 23, 50, transpose=True)
    w2, b2 = linear_init(k2, 50, 50, transpose=True)
    w3, b3 = linear_init(k3, 50, 1, transpose=False)   # (1, 50), bias (1, 1)
    return {"w1": w1, "b1": b1, "w2": w2, "b2": b2, "w3": w3, "b3": b3}


def reference_forward(x, params):
    x = x.reshape(x.shape[0], -1)
    h1 = jnp.maximum(x @ params["w1"] + params["b1"], 0.0)
    h2 = jnp.maximum(h1 @ params["w2"] + params["b2"], 0.0)
    return h2 @ params["w3"].T + params["b3"]


if __name__ == "__main__":
    key = jax.random.PRNGKey(0)
    kp, kx = jax.random.split(key)
    params = init_params(kp)

    B = 8
    x = jax.random.normal(kx, (B, 23), jnp.float32)  # state-action pair features

    out = qnetwork_forward(x, params)
    out = jax.block_until_ready(out)

    ref = reference_forward(x, params)
    assert out.shape == (B, 1), out.shape
    assert jnp.allclose(out, ref, atol=1e-5, rtol=1e-5), "mismatch vs reference"

    print("KERNEL_OK")
</pallas_src>

<mosaic_0001>
module attributes {stable_mosaic.version = 11 : i64} {
  func.func @qnetwork_kernel(%arg0: i32, %arg1: memref<2048x23xf32, #tpu.memory_space<vmem>>, %arg2: memref<23x50xf32, #tpu.memory_space<vmem>>, %arg3: memref<1x50xf32, #tpu.memory_space<vmem>>, %arg4: memref<50x50xf32, #tpu.memory_space<vmem>>, %arg5: memref<1x50xf32, #tpu.memory_space<vmem>>, %arg6: memref<1x50xf32, #tpu.memory_space<vmem>>, %arg7: memref<1x1xf32, #tpu.memory_space<vmem>>, %arg8: memref<1x2048xf32, #tpu.memory_space<vmem>>) attributes {dimension_semantics = [#tpu.dimension_semantics<parallel>], iteration_bounds = array<i64: 1>, scalar_prefetch = 0 : i64, scratch_operands = 0 : i64, tpu.core_type = #tpu.core_type<tc>, window_params = [{transform_indices = @transform_0, window_bounds = array<i64: 2048, 23>}, {pipeline_mode = #tpu.pipeline_mode<synchronous>, transform_indices = @transform_1, window_bounds = array<i64: 23, 50>}, {pipeline_mode = #tpu.pipeline_mode<synchronous>, transform_indices = @transform_2, window_bounds = array<i64: 1, 50>}, {pipeline_mode = #tpu.pipeline_mode<synchronous>, transform_indices = @transform_3, window_bounds = array<i64: 50, 50>}, {pipeline_mode = #tpu.pipeline_mode<synchronous>, transform_indices = @transform_4, window_bounds = array<i64: 1, 50>}, {pipeline_mode = #tpu.pipeline_mode<synchronous>, transform_indices = @transform_5, window_bounds = array<i64: 1, 50>}, {pipeline_mode = #tpu.pipeline_mode<synchronous>, transform_indices = @transform_6, window_bounds = array<i64: 1, 1>}, {transform_indices = @transform_7, window_bounds = array<i64: 1, 2048>}]} {
    %c0 = arith.constant 0 : index
    %c0_0 = arith.constant 0 : index
    %0 = vector.load %arg1[%c0, %c0_0] : memref<2048x23xf32, #tpu.memory_space<vmem>>, vector<2048x23xf32>
    %c0_1 = arith.constant 0 : index
    %c0_2 = arith.constant 0 : index
    %1 = vector.load %arg2[%c0_1, %c0_2] : memref<23x50xf32, #tpu.memory_space<vmem>>, vector<23x50xf32>
    %cst = arith.constant dense<0.000000e+00> : vector<2048x50xf32>
    %2 = tpu.matmul %0, %1, %cst {dimension_numbers = #tpu.dot_dimension_numbers<[1], [0], [0], [1], [0, 0, 1, 1], [], []>} : vector<2048x23xf32>, vector<23x50xf32>, vector<2048x50xf32> -> vector<2048x50xf32>
    %c0_3 = arith.constant 0 : index
    %c0_4 = arith.constant 0 : index
    %3 = vector.load %arg3[%c0_3, %c0_4] : memref<1x50xf32, #tpu.memory_space<vmem>>, vector<1x50xf32>
    %4 = vector.broadcast %3 : vector<1x50xf32> to vector<2048x50xf32>
    %5 = arith.addf %2, %4 : vector<2048x50xf32>
    %cst_5 = arith.constant 0.000000e+00 : f32
    %6 = vector.broadcast %cst_5 : f32 to vector<2048x50xf32>
    %7 = arith.maximumf %5, %6 : vector<2048x50xf32>
    %c0_6 = arith.constant 0 : index
    %c0_7 = arith.constant 0 : index
    %8 = vector.load %arg4[%c0_6, %c0_7] : memref<50x50xf32, #tpu.memory_space<vmem>>, vector<50x50xf32>
    %cst_8 = arith.constant dense<0.000000e+00> : vector<2048x50xf32>
    %9 = tpu.matmul %7, %8, %cst_8 {dimension_numbers = #tpu.dot_dimension_numbers<[1], [0], [0], [1], [0, 0, 1, 1], [], []>} : vector<2048x50xf32>, vector<50x50xf32>, vector<2048x50xf32> -> vector<2048x50xf32>
    %c0_9 = arith.constant 0 : index
    %c0_10 = arith.constant 0 : index
    %10 = vector.load %arg5[%c0_9, %c0_10] : memref<1x50xf32, #tpu.memory_space<vmem>>, vector<1x50xf32>
    %11 = vector.broadcast %10 : vector<1x50xf32> to vector<2048x50xf32>
    %12 = arith.addf %9, %11 : vector<2048x50xf32>
    %cst_11 = arith.constant 0.000000e+00 : f32
    %13 = vector.broadcast %cst_11 : f32 to vector<2048x50xf32>
    %14 = arith.maximumf %12, %13 : vector<2048x50xf32>
    %c0_12 = arith.constant 0 : index
    %c0_13 = arith.constant 0 : index
    %15 = vector.load %arg6[%c0_12, %c0_13] : memref<1x50xf32, #tpu.memory_space<vmem>>, vector<1x50xf32>
    %cst_14 = arith.constant dense<0.000000e+00> : vector<1x2048xf32>
    %16 = tpu.matmul %15, %14, %cst_14 {dimension_numbers = #tpu.dot_dimension_numbers<[1], [1], [0], [0], [0, 0, 1, 0], [], []>} : vector<1x50xf32>, vector<2048x50xf32>, vector<1x2048xf32> -> vector<1x2048xf32>
    %c0_15 = arith.constant 0 : index
    %c0_16 = arith.constant 0 : index
    %17 = vector.load %arg7[%c0_15, %c0_16] : memref<1x1xf32, #tpu.memory_space<vmem>>, vector<1x1xf32>
    %18 = vector.broadcast %17 : vector<1x1xf32> to vector<1x2048xf32>
    %19 = arith.addf %16, %18 : vector<1x2048xf32>
    %c0_17 = arith.constant 0 : index
    %c0_18 = arith.constant 0 : index
    %20 = vector.load %arg8[%c0_17, %c0_18] : memref<1x2048xf32, #tpu.memory_space<vmem>>, vector<1x2048xf32>
    tpu.vector_store %arg8[%c0_17, %c0_18], %19 {strides = array<i32>} : memref<1x2048xf32, #tpu.memory_space<vmem>>, vector<1x2048xf32>,
    return
  }
  func.func @transform_0(%arg0: i32) -> (i32, i32) {
    %c0_i32 = arith.constant 0 : i32
    %c0_i32_0 = arith.constant 0 : i32
    return %arg0, %c0_i32 : i32, i32
  }
  func.func @transform_1(%arg0: i32) -> (i32, i32) {
    %c0_i32 = arith.constant 0 : i32
    %c0_i32_0 = arith.constant 0 : i32
    %c0_i32_1 = arith.constant 0 : i32
    return %c0_i32, %c0_i32_0 : i32, i32
  }
  func.func @transform_2(%arg0: i32) -> (i32, i32) {
    %c0_i32 = arith.constant 0 : i32
    %c0_i32_0 = arith.constant 0 : i32
    %c0_i32_1 = arith.constant 0 : i32
    return %c0_i32, %c0_i32_0 : i32, i32
  }
  func.func @transform_3(%arg0: i32) -> (i32, i32) {
    %c0_i32 = arith.constant 0 : i32
    %c0_i32_0 = arith.constant 0 : i32
    %c0_i32_1 = arith.constant 0 : i32
    return %c0_i32, %c0_i32_0 : i32, i32
  }
  func.func @transform_4(%arg0: i32) -> (i32, i32) {
    %c0_i32 = arith.constant 0 : i32
    %c0_i32_0 = arith.constant 0 : i32
    %c0_i32_1 = arith.constant 0 : i32
    return %c0_i32, %c0_i32_0 : i32, i32
  }
  func.func @transform_5(%arg0: i32) -> (i32, i32) {
    %c0_i32 = arith.constant 0 : i32
    %c0_i32_0 = arith.constant 0 : i32
    %c0_i32_1 = arith.constant 0 : i32
    return %c0_i32, %c0_i32_0 : i32, i32
  }
  func.func @transform_6(%arg0: i32) -> (i32, i32) {
    %c0_i32 = arith.constant 0 : i32
    %c0_i32_0 = arith.constant 0 : i32
    %c0_i32_1 = arith.constant 0 : i32
    return %c0_i32, %c0_i32_0 : i32, i32
  }
  func.func @transform_7(%arg0: i32) -> (i32, i32) {
    %c0_i32 = arith.constant 0 : i32
    %c0_i32_0 = arith.constant 0 : i32
    return %c0_i32, %arg0 : i32, i32
  }
}

</mosaic_0001>

<llo_original>
// kernel: tpu_custom_call.1
$region0: #{tpu_custom_call.1}
  #allocation0 [shape = 'u32[]', space=smem, size = 0x4, offset = 0x4, fixed_abs, tag = 'smem constant byte address 0x4 - core index']
  #allocation1 [shape = 'u32[144,128]{1,0:T(1,128)}', space=vmem, size = 0x12000, scoped, tag = 'internal scratch']
  #allocation2 [shape = 'f32[1,1]{1,0:T(1,128)S(1)}', space=vmem, size = 0x200, scoped, tag = 'scoped memory for tpu_custom_call.1']
  %s0 = inlined_call_operand.vmem [shape: f32[2048,23], index: 0, kind: input, shape index: {}]
  %s1 = inlined_call_operand.vmem [shape: f32[23,50], index: 1, kind: input, shape index: {}]
  %s2 = inlined_call_operand.vmem [shape: f32[1,50], index: 2, kind: input, shape index: {}]
  %s3 = inlined_call_operand.vmem [shape: f32[50,50], index: 3, kind: input, shape index: {}]
  %s4 = inlined_call_operand.vmem [shape: f32[1,50], index: 4, kind: input, shape index: {}]
  %s5 = inlined_call_operand.vmem [shape: f32[1,50], index: 5, kind: input, shape index: {}]
  %s6 = inlined_call_operand.<no memory space> [shape: f32[1,1], index: 6, kind: input, shape index: {}]
  %s7 = inlined_call_operand.hbm [shape: f32[1,2048], index: 7, kind: output, shape index: {}]
  %s8 = sld [smem:[#allocation0]]
  $region38: #{tpu_custom_call.1} parent=0
    _
  %s10 = ssub.s32 1, %s8
  %s11 = scalar_select 0, %s10, %s8
  %v12 = vstv %s6
  %13 = vst [vmem:[#allocation2] sm:$0x1] %v12
  $region1: #{tpu_custom_call.1} parent=0
    #allocation3 [shape = 'u8[8192]{0}', space=vmem, size = 0x2000, scoped, tag = 'output window, operand 0, single buffered']
    #allocation4 [shape = 's32[1]{0}', space=sflag, size = 0x4, scoped, tag = 'scoped memory for tpu_custom_call.1']
    %14 = vsyncpa [#allocation4], 0
    // Predicated region
    $region2: #{tpu_custom_call.1} parent=1 // pred_check
      _
    $region3: #{tpu_custom_call.1} parent=1 // pred_check_branch
      %16 = sbr.rel (0) target = $region5
    $region4: #{tpu_custom_call.1} parent=1 // pred_region
      _
    $region5: #{tpu_custom_call.1} parent=1 // pred_fallthru
      _
    // Predicated region
    $region6: #{tpu_custom_call.1} parent=1 // pred_check
      _
    $region7: #{tpu_custom_call.1} parent=1 // pred_check_branch
      %18 = sbr.rel (0) target = $region9
    $region8: #{tpu_custom_call.1} parent=1 // pred_region
      _
    $region9: #{tpu_custom_call.1} parent=1 // pred_fallthru
      _
    // Predicated region
    $region10: #{tpu_custom_call.1} parent=1 // pred_check
      _
    $region11: #{tpu_custom_call.1} parent=1 // pred_check_branch
      %20 = sbr.rel (0) target = $region13
    $region12: #{tpu_custom_call.1} parent=1 // pred_region
      _
    $region13: #{tpu_custom_call.1} parent=1 // pred_fallthru
      _
    // Predicated region
    $region14: #{tpu_custom_call.1} parent=1 // pred_check
      _
    $region15: #{tpu_custom_call.1} parent=1 // pred_check_branch
      %22 = sbr.rel (0) target = $region17
    $region16: #{tpu_custom_call.1} parent=1 // pred_region
      _
    $region17: #{tpu_custom_call.1} parent=1 // pred_fallthru
      _
    // Predicated region
    $region18: #{tpu_custom_call.1} parent=1 // pred_check
      _
    $region19: #{tpu_custom_call.1} parent=1 // pred_check_branch
      %24 = sbr.rel (0) target = $region21
    $region20: #{tpu_custom_call.1} parent=1 // pred_region
      _
    $region21: #{tpu_custom_call.1} parent=1 // pred_fallthru
      _
    // Predicated region
    $region22: #{tpu_custom_call.1} parent=1 // pred_check
      _
    $region23: #{tpu_custom_call.1} parent=1 // pred_check_branch
      %26 = sbr.rel (0) target = $region25
    $region24: #{tpu_custom_call.1} parent=1 // pred_region
      _
    $region25: #{tpu_custom_call.1} parent=1 // pred_fallthru
      _
    // Predicated region
    $region26: #{tpu_custom_call.1} parent=1 // pred_check
      _
    $region27: #{tpu_custom_call.1} parent=1 // pred_check_branch
      %28 = sbr.rel (0) target = $region29
    $region28: #{tpu_custom_call.1} parent=1 // pred_region
      _
    $region29: #{tpu_custom_call.1} parent=1 // pred_fallthru
      _
    %v29 = vld [vmem:[%s0] sm:$0xff]
    %v30 = vld [vmem:[%s0 + $0x8] sm:$0xff]
    %v31 = vld [vmem:[%s0 + $0x10] sm:$0xff]
    %v32 = vld [vmem:[%s0 + $0x18] sm:$0xff]
    %v33 = vld [vmem:[%s0 + $0x20] sm:$0xff]
    %v34 = vld [vmem:[%s0 + $0x28] sm:$0xff]
    %v35 = vld [vmem:[%s0 + $0x30] sm:$0xff]
    %v36 = vld [vmem:[%s0 + $0x38] sm:$0xff]
    %v37 = vld [vmem:[%s0 + $0x40] sm:$0xff]
    %v38 = vld [vmem:[%s0 + $0x48] sm:$0xff]
    %v39 = vld [vmem:[%s0 + $0x50] sm:$0xff]
    %v40 = vld [vmem:[%s0 + $0x58] sm:$0xff]
    %v41 = vld [vmem:[%s0 + $0x60] sm:$0xff]
    %v42 = vld [vmem:[%s0 + $0x68] sm:$0xff]
    %v43 = vld [vmem:[%s0 + $0x70] sm:$0xff]
    %v44 = vld [vmem:[%s0 + $0x78] sm:$0xff]
    %v45 = vld [vmem:[%s0 + $0x80] sm:$0xff]
    %v46 = vld [vmem:[%s0 + $0x88] sm:$0xff]
    %v47 = vld [vmem:[%s0 + $0x90] sm:$0xff]
    %v48 = vld [vmem:[%s0 + $0x98] sm:$0xff]
    %v49 = vld [vmem:[%s0 + $0xa0] sm:$0xff]
    %v50 = vld [vmem:[%s0 + $0xa8] sm:$0xff]
    %v51 = vld [vmem:[%s0 + $0xb0] sm:$0xff]
    %v52 = vld [vmem:[%s0 + $0xb8] sm:$0xff]
    %v53 = vld [vmem:[%s0 + $0xc0] sm:$0xff]
    %v54 = vld [vmem:[%s0 + $0xc8] sm:$0xff]
    %v55 = vld [vmem:[%s0 + $0xd0] sm:$0xff]
    %v56 = vld [vmem:[%s0 + $0xd8] sm:$0xff]
    %v57 = vld [vmem:[%s0 + $0xe0] sm:$0xff]
    %v58 = vld [vmem:[%s0 + $0xe8] sm:$0xff]
    %v59 = vld [vmem:[%s0 + $0xf0] sm:$0xff]
    %v60 = vld [vmem:[%s0 + $0xf8] sm:$0xff]
    %v61 = vld [vmem:[%s0 + $0x100] sm:$0xff]
    %v62 = vld [vmem:[%s0 + $0x108] sm:$0xff]
    %v63 = vld [vmem:[%s0 + $0x110] sm:$0xff]
    %v64 = vld [vmem:[%s0 + $0x118] sm:$0xff]
    %v65 = vld [vmem:[%s0 + $0x120] sm:$0xff]
    %v66 = vld [vmem:[%s0 + $0x128] sm:$0xff]
    %v67 = vld [vmem:[%s0 + $0x130] sm:$0xff]
    %v68 = vld [vmem:[%s0 + $0x138] sm:$0xff]
    %v69 = vld [vmem:[%s0 + $0x140] sm:$0xff]
    %v70 = vld [vmem:[%s0 + $0x148] sm:$0xff]
    %v71 = vld [vmem:[%s0 + $0x150] sm:$0xff]
    %v72 = vld [vmem:[%s0 + $0x158] sm:$0xff]
    %v73 = vld [vmem:[%s0 + $0x160] sm:$0xff]
    %v74 = vld [vmem:[%s0 + $0x168] sm:$0xff]
    %v75 = vld [vmem:[%s0 + $0x170] sm:$0xff]
    %v76 = vld [vmem:[%s0 + $0x178] sm:$0xff]
    %v77 = vld [vmem:[%s0 + $0x180] sm:$0xff]
    %v78 = vld [vmem:[%s0 + $0x188] sm:$0xff]
    %v79 = vld [vmem:[%s0 + $0x190] sm:$0xff]
    %v80 = vld [vmem:[%s0 + $0x198] sm:$0xff]
    %v81 = vld [vmem:[%s0 + $0x1a0] sm:$0xff]
    %v82 = vld [vmem:[%s0 + $0x1a8] sm:$0xff]
    %v83 = vld [vmem:[%s0 + $0x1b0] sm:$0xff]
    %v84 = vld [vmem:[%s0 + $0x1b8] sm:$0xff]
    %v85 = vld [vmem:[%s0 + $0x1c0] sm:$0xff]
    %v86 = vld [vmem:[%s0 + $0x1c8] sm:$0xff]
    %v87 = vld [vmem:[%s0 + $0x1d0] sm:$0xff]
    %v88 = vld [vmem:[%s0 + $0x1d8] sm:$0xff]
    %v89 = vld [vmem:[%s0 + $0x1e0] sm:$0xff]
    %v90 = vld [vmem:[%s0 + $0x1e8] sm:$0xff]
    %v91 = vld [vmem:[%s0 + $0x1f0] sm:$0xff]
    %v92 = vld [vmem:[%s0 + $0x1f8] sm:$0xff]
    %v93 = vld [vmem:[%s0 + $0x200] sm:$0xff]
    %v94 = vld [vmem:[%s0 + $0x208] sm:$0xff]
    %v95 = vld [vmem:[%s0 + $0x210] sm:$0xff]
    %v96 = vld [vmem:[%s0 + $0x218] sm:$0xff]
    %v97 = vld [vmem:[%s0 + $0x220] sm:$0xff]
    %v98 = vld [vmem:[%s0 + $0x228] sm:$0xff]
    %v99 = vld [vmem:[%s0 + $0x230] sm:$0xff]
    %v100 = vld [vmem:[%s0 + $0x238] sm:$0xff]
    %v101 = vld [vmem:[%s0 + $0x240] sm:$0xff]
    %v102 = vld [vmem:[%s0 + $0x248] sm:$0xff]
    %v103 = vld [vmem:[%s0 + $0x250] sm:$0xff]
    %v104 = vld [vmem:[%s0 + $0x258] sm:$0xff]
    %v105 = vld [vmem:[%s0 + $0x260] sm:$0xff]
    %v106 = vld [vmem:[%s0 + $0x268] sm:$0xff]
    %v107 = vld [vmem:[%s0 + $0x270] sm:$0xff]
    %v108 = vld [vmem:[%s0 + $0x278] sm:$0xff]
    %v109 = vld [vmem:[%s0 + $0x280] sm:$0xff]
    %v110 = vld [vmem:[%s0 + $0x288] sm:$0xff]
    %v111 = vld [vmem:[%s0 + $0x290] sm:$0xff]
    %v112 = vld [vmem:[%s0 + $0x298] sm:$0xff]
    %v113 = vld [vmem:[%s0 + $0x2a0] sm:$0xff]
    %v114 = vld [vmem:[%s0 + $0x2a8] sm:$0xff]
    %v115 = vld [vmem:[%s0 + $0x2b0] sm:$0xff]
    %v116 = vld [vmem:[%s0 + $0x2b8] sm:$0xff]
    %v117 = vld [vmem:[%s0 + $0x2c0] sm:$0xff]
    %v118 = vld [vmem:[%s0 + $0x2c8] sm:$0xff]
    %v119 = vld [vmem:[%s0 + $0x2d0] sm:$0xff]
    %v120 = vld [vmem:[%s0 + $0x2d8] sm:$0xff]
    %v121 = vld [vmem:[%s0 + $0x2e0] sm:$0xff]
    %v122 = vld [vmem:[%s0 + $0x2e8] sm:$0xff]
    %v123 = vld [vmem:[%s0 + $0x2f0] sm:$0xff]
    %v124 = vld [vmem:[%s0 + $0x2f8] sm:$0xff]
    %v125 = vld [vmem:[%s0 + $0x300] sm:$0xff]
    %v126 = vld [vmem:[%s0 + $0x308] sm:$0xff]
    %v127 = vld [vmem:[%s0 + $0x310] sm:$0xff]
    %v128 = vld [vmem:[%s0 + $0x318] sm:$0xff]
    %v129 = vld [vmem:[%s0 + $0x320] sm:$0xff]
    %v130 = vld [vmem:[%s0 + $0x328] sm:$0xff]
    %v131 = vld [vmem:[%s0 + $0x330] sm:$0xff]
    %v132 = vld [vmem:[%s0 + $0x338] sm:$0xff]
    %v133 = vld [vmem:[%s0 + $0x340] sm:$0xff]
    %v134 = vld [vmem:[%s0 + $0x348] sm:$0xff]
    %v135 = vld [vmem:[%s0 + $0x350] sm:$0xff]
    %v136 = vld [vmem:[%s0 + $0x358] sm:$0xff]
    %v137 = vld [vmem:[%s0 + $0x360] sm:$0xff]
    %v138 = vld [vmem:[%s0 + $0x368] sm:$0xff]
    %v139 = vld [vmem:[%s0 + $0x370] sm:$0xff]
    %v140 = vld [vmem:[%s0 + $0x378] sm:$0xff]
    %v141 = vld [vmem:[%s0 + $0x380] sm:$0xff]
    %v142 = vld [vmem:[%s0 + $0x388] sm:$0xff]
    %v143 = vld [vmem:[%s0 + $0x390] sm:$0xff]
    %v144 = vld [vmem:[%s0 + $0x398] sm:$0xff]
    %v145 = vld [vmem:[%s0 + $0x3a0] sm:$0xff]
    %v146 = vld [vmem:[%s0 + $0x3a8] sm:$0xff]
    %v147 = vld [vmem:[%s0 + $0x3b0] sm:$0xff]
    %v148 = vld [vmem:[%s0 + $0x3b8] sm:$0xff]
    %v149 = vld [vmem:[%s0 + $0x3c0] sm:$0xff]
    %v150 = vld [vmem:[%s0 + $0x3c8] sm:$0xff]
    %v151 = vld [vmem:[%s0 + $0x3d0] sm:$0xff]
    %v152 = vld [vmem:[%s0 + $0x3d8] sm:$0xff]
    %v153 = vld [vmem:[%s0 + $0x3e0] sm:$0xff]
    %v154 = vld [vmem:[%s0 + $0x3e8] sm:$0xff]
    %v155 = vld [vmem:[%s0 + $0x3f0] sm:$0xff]
    %v156 = vld [vmem:[%s0 + $0x3f8] sm:$0xff]
    %v157 = vld [vmem:[%s0 + $0x400] sm:$0xff]
    %v158 = vld [vmem:[%s0 + $0x408] sm:$0xff]
    %v159 = vld [vmem:[%s0 + $0x410] sm:$0xff]
    %v160 = vld [vmem:[%s0 + $0x418] sm:$0xff]
    %v161 = vld [vmem:[%s0 + $0x420] sm:$0xff]
    %v162 = vld [vmem:[%s0 + $0x428] sm:$0xff]
    %v163 = vld [vmem:[%s0 + $0x430] sm:$0xff]
    %v164 = vld [vmem:[%s0 + $0x438] sm:$0xff]
    %v165 = vld [vmem:[%s0 + $0x440] sm:$0xff]
    %v166 = vld [vmem:[%s0 + $0x448] sm:$0xff]
    %v167 = vld [vmem:[%s0 + $0x450] sm:$0xff]
    %v168 = vld [vmem:[%s0 + $0x458] sm:$0xff]
    %v169 = vld [vmem:[%s0 + $0x460] sm:$0xff]
    %v170 = vld [vmem:[%s0 + $0x468] sm:$0xff]
    %v171 = vld [vmem:[%s0 + $0x470] sm:$0xff]
    %v172 = vld [vmem:[%s0 + $0x478] sm:$0xff]
    %v173 = vld [vmem:[%s0 + $0x480] sm:$0xff]
    %v174 = vld [vmem:[%s0 + $0x488] sm:$0xff]
    %v175 = vld [vmem:[%s0 + $0x490] sm:$0xff]
    %v176 = vld [vmem:[%s0 + $0x498] sm:$0xff]
    %v177 = vld [vmem:[%s0 + $0x4a0] sm:$0xff]
    %v178 = vld [vmem:[%s0 + $0x4a8] sm:$0xff]
    %v179 = vld [vmem:[%s0 + $0x4b0] sm:$0xff]
    %v180 = vld [vmem:[%s0 + $0x4b8] sm:$0xff]
    %v181 = vld [vmem:[%s0 + $0x4c0] sm:$0xff]
    %v182 = vld [vmem:[%s0 + $0x4c8] sm:$0xff]
    %v183 = vld [vmem:[%s0 + $0x4d0] sm:$0xff]
    %v184 = vld [vmem:[%s0 + $0x4d8] sm:$0xff]
    %v185 = vld [vmem:[%s0 + $0x4e0] sm:$0xff]
    %v186 = vld [vmem:[%s0 + $0x4e8] sm:$0xff]
    %v187 = vld [vmem:[%s0 + $0x4f0] sm:$0xff]
    %v188 = vld [vmem:[%s0 + $0x4f8] sm:$0xff]
    %v189 = vld [vmem:[%s0 + $0x500] sm:$0xff]
    %v190 = vld [vmem:[%s0 + $0x508] sm:$0xff]
    %v191 = vld [vmem:[%s0 + $0x510] sm:$0xff]
    %v192 = vld [vmem:[%s0 + $0x518] sm:$0xff]
    %v193 = vld [vmem:[%s0 + $0x520] sm:$0xff]
    %v194 = vld [vmem:[%s0 + $0x528] sm:$0xff]
    %v195 = vld [vmem:[%s0 + $0x530] sm:$0xff]
    %v196 = vld [vmem:[%s0 + $0x538] sm:$0xff]
    %v197 = vld [vmem:[%s0 + $0x540] sm:$0xff]
    %v198 = vld [vmem:[%s0 + $0x548] sm:$0xff]
    %v199 = vld [vmem:[%s0 + $0x550] sm:$0xff]
    %v200 = vld [vmem:[%s0 + $0x558] sm:$0xff]
    %v201 = vld [vmem:[%s0 + $0x560] sm:$0xff]
    %v202 = vld [vmem:[%s0 + $0x568] sm:$0xff]
    %v203 = vld [vmem:[%s0 + $0x570] sm:$0xff]
    %v204 = vld [vmem:[%s0 + $0x578] sm:$0xff]
    %v205 = vld [vmem:[%s0 + $0x580] sm:$0xff]
    %v206 = vld [vmem:[%s0 + $0x588] sm:$0xff]
    %v207 = vld [vmem:[%s0 + $0x590] sm:$0xff]
    %v208 = vld [vmem:[%s0 + $0x598] sm:$0xff]
    %v209 = vld [vmem:[%s0 + $0x5a0] sm:$0xff]
    %v210 = vld [vmem:[%s0 + $0x5a8] sm:$0xff]
    %v211 = vld [vmem:[%s0 + $0x5b0] sm:$0xff]
    %v212 = vld [vmem:[%s0 + $0x5b8] sm:$0xff]
    %v213 = vld [vmem:[%s0 + $0x5c0] sm:$0xff]
    %v214 = vld [vmem:[%s0 + $0x5c8] sm:$0xff]
    %v215 = vld [vmem:[%s0 + $0x5d0] sm:$0xff]
    %v216 = vld [vmem:[%s0 + $0x5d8] sm:$0xff]
    %v217 = vld [vmem:[%s0 + $0x5e0] sm:$0xff]
    %v218 = vld [vmem:[%s0 + $0x5e8] sm:$0xff]
    %v219 = vld [vmem:[%s0 + $0x5f0] sm:$0xff]
    %v220 = vld [vmem:[%s0 + $0x5f8] sm:$0xff]
    %v221 = vld [vmem:[%s0 + $0x600] sm:$0xff]
    %v222 = vld [vmem:[%s0 + $0x608] sm:$0xff]
    %v223 = vld [vmem:[%s0 + $0x610] sm:$0xff]
    %v224 = vld [vmem:[%s0 + $0x618] sm:$0xff]
    %v225 = vld [vmem:[%s0 + $0x620] sm:$0xff]
    %v226 = vld [vmem:[%s0 + $0x628] sm:$0xff]
    %v227 = vld [vmem:[%s0 + $0x630] sm:$0xff]
    %v228 = vld [vmem:[%s0 + $0x638] sm:$0xff]
    %v229 = vld [vmem:[%s0 + $0x640] sm:$0xff]
    %v230 = vld [vmem:[%s0 + $0x648] sm:$0xff]
    %v231 = vld [vmem:[%s0 + $0x650] sm:$0xff]
    %v232 = vld [vmem:[%s0 + $0x658] sm:$0xff]
    %v233 = vld [vmem:[%s0 + $0x660] sm:$0xff]
    %v234 = vld [vmem:[%s0 + $0x668] sm:$0xff]
    %v235 = vld [vmem:[%s0 + $0x670] sm:$0xff]
    %v236 = vld [vmem:[%s0 + $0x678] sm:$0xff]
    %v237 = vld [vmem:[%s0 + $0x680] sm:$0xff]
    %v238 = vld [vmem:[%s0 + $0x688] sm:$0xff]
    %v239 = vld [vmem:[%s0 + $0x690] sm:$0xff]
    %v240 = vld [vmem:[%s0 + $0x698] sm:$0xff]
    %v241 = vld [vmem:[%s0 + $0x6a0] sm:$0xff]
    %v242 = vld [vmem:[%s0 + $0x6a8] sm:$0xff]
    %v243 = vld [vmem:[%s0 + $0x6b0] sm:$0xff]
    %v244 = vld [vmem:[%s0 + $0x6b8] sm:$0xff]
    %v245 = vld [vmem:[%s0 + $0x6c0] sm:$0xff]
    %v246 = vld [vmem:[%s0 + $0x6c8] sm:$0xff]
    %v247 = vld [vmem:[%s0 + $0x6d0] sm:$0xff]
    %v248 = vld [vmem:[%s0 + $0x6d8] sm:$0xff]
    %v249 = vld [vmem:[%s0 + $0x6e0] sm:$0xff]
    %v250 = vld [vmem:[%s0 + $0x6e8] sm:$0xff]
    %v251 = vld [vmem:[%s0 + $0x6f0] sm:$0xff]
    %v252 = vld [vmem:[%s0 + $0x6f8] sm:$0xff]
    %v253 = vld [vmem:[%s0 + $0x700] sm:$0xff]
    %v254 = vld [vmem:[%s0 + $0x708] sm:$0xff]
    %v255 = vld [vmem:[%s0 + $0x710] sm:$0xff]
    %v256 = vld [vmem:[%s0 + $0x718] sm:$0xff]
    %v257 = vld [vmem:[%s0 + $0x720] sm:$0xff]
    %v258 = vld [vmem:[%s0 + $0x728] sm:$0xff]
    %v259 = vld [vmem:[%s0 + $0x730] sm:$0xff]
    %v260 = vld [vmem:[%s0 + $0x738] sm:$0xff]
    %v261 = vld [vmem:[%s0 + $0x740] sm:$0xff]
    %v262 = vld [vmem:[%s0 + $0x748] sm:$0xff]
    %v263 = vld [vmem:[%s0 + $0x750] sm:$0xff]
    %v264 = vld [vmem:[%s0 + $0x758] sm:$0xff]
    %v265 = vld [vmem:[%s0 + $0x760] sm:$0xff]
    %v266 = vld [vmem:[%s0 + $0x768] sm:$0xff]
    %v267 = vld [vmem:[%s0 + $0x770] sm:$0xff]
    %v268 = vld [vmem:[%s0 + $0x778] sm:$0xff]
    %v269 = vld [vmem:[%s0 + $0x780] sm:$0xff]
    %v270 = vld [vmem:[%s0 + $0x788] sm:$0xff]
    %v271 = vld [vmem:[%s0 + $0x790] sm:$0xff]
    %v272 = vld [vmem:[%s0 + $0x798] sm:$0xff]
    %v273 = vld [vmem:[%s0 + $0x7a0] sm:$0xff]
    %v274 = vld [vmem:[%s0 + $0x7a8] sm:$0xff]
    %v275 = vld [vmem:[%s0 + $0x7b0] sm:$0xff]
    %v276 = vld [vmem:[%s0 + $0x7b8] sm:$0xff]
    %v277 = vld [vmem:[%s0 + $0x7c0] sm:$0xff]
    %v278 = vld [vmem:[%s0 + $0x7c8] sm:$0xff]
    %v279 = vld [vmem:[%s0 + $0x7d0] sm:$0xff]
    %v280 = vld [vmem:[%s0 + $0x7d8] sm:$0xff]
    %v281 = vld [vmem:[%s0 + $0x7e0] sm:$0xff]
    %v282 = vld [vmem:[%s0 + $0x7e8] sm:$0xff]
    %v283 = vld [vmem:[%s0 + $0x7f0] sm:$0xff]
    %v284 = vld [vmem:[%s0 + $0x7f8] sm:$0xff]
    %v285 = vld [vmem:[%s1] sm:$0xff]
    %v286 = vld [vmem:[%s1 + $0x8] sm:$0xff]
    %v287 = vld [vmem:[%s1 + $0x10] sm:$0x7f]
    %v288 = vld [vmem:[%s2] sm:$0x1]
    %v290 = vlaneseq
    %v291 = vshrl.u32 %v290, 7
    %v292 = vsub.s32 0, %v291
    %v293 = vrot.slane %v288, %v292
    %vm295 = vcmask 187392
    %v297 = vsel %vm295, %v29, 0
    %v300 = vsel %vm295, %v30, 0
    %v303 = vsel %vm295, %v31, 0
    %v306 = vsel %vm295, %v32, 0
    %v309 = vsel %vm295, %v33, 0
    %v312 = vsel %vm295, %v34, 0
    %v315 = vsel %vm295, %v35, 0
    %v318 = vsel %vm295, %v36, 0
    %v321 = vsel %vm295, %v37, 0
    %v324 = vsel %vm295, %v38, 0
    %v327 = vsel %vm295, %v39, 0
    %v330 = vsel %vm295, %v40, 0
    %v333 = vsel %vm295, %v41, 0
    %v336 = vsel %vm295, %v42, 0
    %v339 = vsel %vm295, %v43, 0
    %v342 = vsel %vm295, %v44, 0
    %v345 = vsel %vm295, %v45, 0
    %v348 = vsel %vm295, %v46, 0
    %v351 = vsel %vm295, %v47, 0
    %v354 = vsel %vm295, %v48, 0
    %v357 = vsel %vm295, %v49, 0
    %v360 = vsel %vm295, %v50, 0
    %v363 = vsel %vm295, %v51, 0
    %v366 = vsel %vm295, %v52, 0
    %v369 = vsel %vm295, %v53, 0
    %v372 = vsel %vm295, %v54, 0
    %v375 = vsel %vm295, %v55, 0
    %v378 = vsel %vm295, %v56, 0
    %v381 = vsel %vm295, %v57, 0
    %v384 = vsel %vm295, %v58, 0
    %v387 = vsel %vm295, %v59, 0
    %v390 = vsel %vm295, %v60, 0
    %v393 = vsel %vm295, %v61, 0
    %v396 = vsel %vm295, %v62, 0
    %v399 = vsel %vm295, %v63, 0
    %v402 = vsel %vm295, %v64, 0
    %v405 = vsel %vm295, %v65, 0
    %v408 = vsel %vm295, %v66, 0
    %v411 = vsel %vm295, %v67, 0
    %v414 = vsel %vm295, %v68, 0
    %v417 = vsel %vm295, %v69, 0
    %v420 = vsel %vm295, %v70, 0
    %v423 = vsel %vm295, %v71, 0
    %v426 = vsel %vm295, %v72, 0
    %v429 = vsel %vm295, %v73, 0
    %v432 = vsel %vm295, %v74, 0
    %v435 = vsel %vm295, %v75, 0
    %v438 = vsel %vm295, %v76, 0
    %v441 = vsel %vm295, %v77, 0
    %v444 = vsel %vm295, %v78, 0
    %v447 = vsel %vm295, %v79, 0
    %v450 = vsel %vm295, %v80, 0
    %v453 = vsel %vm295, %v81, 0
    %v456 = vsel %vm295, %v82, 0
    %v459 = vsel %vm295, %v83, 0
    %v462 = vsel %vm295, %v84, 0
    %v465 = vsel %vm295, %v85, 0
    %v468 = vsel %vm295, %v86, 0
    %v471 = vsel %vm295, %v87, 0
    %v474 = vsel %vm295, %v88, 0
    %v477 = vsel %vm295, %v89, 0
    %v480 = vsel %vm295, %v90, 0
    %v483 = vsel %vm295, %v91, 0
    %v486 = vsel %vm295, %v92, 0
    %v489 = vsel %vm295, %v93, 0
    %v492 = vsel %vm295, %v94, 0
    %v495 = vsel %vm295, %v95, 0
    %v498 = vsel %vm295, %v96, 0
    %v501 = vsel %vm295, %v97, 0
    %v504 = vsel %vm295, %v98, 0
    %v507 = vsel %vm295, %v99, 0
    %v510 = vsel %vm295, %v100, 0
    %v513 = vsel %vm295, %v101, 0
    %v516 = vsel %vm295, %v102, 0
    %v519 = vsel %vm295, %v103, 0
    %v522 = vsel %vm295, %v104, 0
    %v525 = vsel %vm295, %v105, 0
    %v528 = vsel %vm295, %v106, 0
    %v531 = vsel %vm295, %v107, 0
    %v534 = vsel %vm295, %v108, 0
    %v537 = vsel %vm295, %v109, 0
    %v540 = vsel %vm295, %v110, 0
    %v543 = vsel %vm295, %v111, 0
    %v546 = vsel %vm295, %v112, 0
    %v549 = vsel %vm295, %v113, 0
    %v552 = vsel %vm295, %v114, 0
    %v555 = vsel %vm295, %v115, 0
    %v558 = vsel %vm295, %v116, 0
    %v561 = vsel %vm295, %v117, 0
    %v564 = vsel %vm295, %v118, 0
    %v567 = vsel %vm295, %v119, 0
    %v570 = vsel %vm295, %v120, 0
    %v573 = vsel %vm295, %v121, 0
    %v576 = vsel %vm295, %v122, 0
    %v579 = vsel %vm295, %v123, 0
    %v582 = vsel %vm295, %v124, 0
    %v585 = vsel %vm295, %v125, 0
    %v588 = vsel %vm295, %v126, 0
    %v591 = vsel %vm295, %v127, 0
    %v594 = vsel %vm295, %v128, 0
    %v597 = vsel %vm295, %v129, 0
    %v600 = vsel %vm295, %v130, 0
    %v603 = vsel %vm295, %v131, 0
    %v606 = vsel %vm295, %v132, 0
    %v609 = vsel %vm295, %v133, 0
    %v612 = vsel %vm295, %v134, 0
    %v615 = vsel %vm295, %v135, 0
    %v618 = vsel %vm295, %v136, 0
    %v621 = vsel %vm295, %v137, 0
    %v624 = vsel %vm295, %v138, 0
    %v627 = vsel %vm295, %v139, 0
    %v630 = vsel %vm295, %v140, 0
    %v633 = vsel %vm295, %v141, 0
    %v636 = vsel %vm295, %v142, 0
    %v639 = vsel %vm295, %v143, 0
    %v642 = vsel %vm295, %v144, 0
    %v645 = vsel %vm295, %v145, 0
    %v648 = vsel %vm295, %v146, 0
    %v651 = vsel %vm295, %v147, 0
    %v654 = vsel %vm295, %v148, 0
    %v657 = vsel %vm295, %v149, 0
    %v660 = vsel %vm295, %v150, 0
    %v663 = vsel %vm295, %v151, 0
    %v666 = vsel %vm295, %v152, 0
    %v669 = vsel %vm295, %v153, 0
    %v672 = vsel %vm295, %v154, 0
    %v675 = vsel %vm295, %v155, 0
    %v678 = vsel %vm295, %v156, 0
    %v681 = vsel %vm295, %v157, 0
    %v684 = vsel %vm295, %v158, 0
    %v687 = vsel %vm295, %v159, 0
    %v690 = vsel %vm295, %v160, 0
    %v693 = vsel %vm295, %v161, 0
    %v696 = vsel %vm295, %v162, 0
    %v699 = vsel %vm295, %v163, 0
    %v702 = vsel %vm295, %v164, 0
    %v705 = vsel %vm295, %v165, 0
    %v708 = vsel %vm295, %v166, 0
    %v711 = vsel %vm295, %v167, 0
    %v714 = vsel %vm295, %v168, 0
    %v717 = vsel %vm295, %v169, 0
    %v720 = vsel %vm295, %v170, 0
    %v723 = vsel %vm295, %v171, 0
    %v726 = vsel %vm295, %v172, 0
    %v729 = vsel %vm295, %v173, 0
    %v732 = vsel %vm295, %v174, 0
    %v735 = vsel %vm295, %v175, 0
    %v738 = vsel %vm295, %v176, 0
    %v741 = vsel %vm295, %v177, 0
    %v744 = vsel %vm295, %v178, 0
    %v747 = vsel %vm295, %v179, 0
    %v750 = vsel %vm295, %v180, 0
    %v753 = vsel %vm295, %v181, 0
    %v756 = vsel %vm295, %v182, 0
    %v759 = vsel %vm295, %v183, 0
    %v762 = vsel %vm295, %v184, 0
    %v765 = vsel %vm295, %v185, 0
    %v768 = vsel %vm295, %v186, 0
    %v771 = vsel %vm295, %v187, 0
    %v774 = vsel %vm295, %v188, 0
    %v777 = vsel %vm295, %v189, 0
    %v780 = vsel %vm295, %v190, 0
    %v783 = vsel %vm295, %v191, 0
    %v786 = vsel %vm295, %v192, 0
    %v789 = vsel %vm295, %v193, 0
    %v792 = vsel %vm295, %v194, 0
    %v795 = vsel %vm295, %v195, 0
    %v798 = vsel %vm295, %v196, 0
    %v801 = vsel %vm295, %v197, 0
    %v804 = vsel %vm295, %v198, 0
    %v807 = vsel %vm295, %v199, 0
    %v810 = vsel %vm295, %v200, 0
    %v813 = vsel %vm295, %v201, 0
    %v816 = vsel %vm295, %v202, 0
    %v819 = vsel %vm295, %v203, 0
    %v822 = vsel %vm295, %v204, 0
    %v825 = vsel %vm295, %v205, 0
    %v828 = vsel %vm295, %v206, 0
    %v831 = vsel %vm295, %v207, 0
    %v834 = vsel %vm295, %v208, 0
    %v837 = vsel %vm295, %v209, 0
    %v840 = vsel %vm295, %v210, 0
    %v843 = vsel %vm295, %v211, 0
    %v846 = vsel %vm295, %v212, 0
    %v849 = vsel %vm295, %v213, 0
    %v852 = vsel %vm295, %v214, 0
    %v855 = vsel %vm295, %v215, 0
    %v858 = vsel %vm295, %v216, 0
    %v861 = vsel %vm295, %v217, 0
    %v864 = vsel %vm295, %v218, 0
    %v867 = vsel %vm295, %v219, 0
    %v870 = vsel %vm295, %v220, 0
    %v873 = vsel %vm295, %v221, 0
    %v876 = vsel %vm295, %v222, 0
    %v879 = vsel %vm295, %v223, 0
    %v882 = vsel %vm295, %v224, 0
    %v885 = vsel %vm295, %v225, 0
    %v888 = vsel %vm295, %v226, 0
    %v891 = vsel %vm295, %v227, 0
    %v894 = vsel %vm295, %v228, 0
    %v897 = vsel %vm295, %v229, 0
    %v900 = vsel %vm295, %v230, 0
    %v903 = vsel %vm295, %v231, 0
    %v906 = vsel %vm295, %v232, 0
    %v909 = vsel %vm295, %v233, 0
    %v912 = vsel %vm295, %v234, 0
    %v915 = vsel %vm295, %v235, 0
    %v918 = vsel %vm295, %v236, 0
    %v921 = vsel %vm295, %v237, 0
    %v924 = vsel %vm295, %v238, 0
    %v927 = vsel %vm295, %v239, 0
    %v930 = vsel %vm295, %v240, 0
    %v933 = vsel %vm295, %v241, 0
    %v936 = vsel %vm295, %v242, 0
    %v939 = vsel %vm295, %v243, 0
    %v942 = vsel %vm295, %v244, 0
    %v945 = vsel %vm295, %v245, 0
    %v948 = vsel %vm295, %v246, 0
    %v951 = vsel %vm295, %v247, 0
    %v954 = vsel %vm295, %v248, 0
    %v957 = vsel %vm295, %v249, 0
    %v960 = vsel %vm295, %v250, 0
    %v963 = vsel %vm295, %v251, 0
    %v966 = vsel %vm295, %v252, 0
    %v969 = vsel %vm295, %v253, 0
    %v972 = vsel %vm295, %v254, 0
    %v975 = vsel %vm295, %v255, 0
    %v978 = vsel %vm295, %v256, 0
    %v981 = vsel %vm295, %v257, 0
    %v984 = vsel %vm295, %v258, 0
    %v987 = vsel %vm295, %v259, 0
    %v990 = vsel %vm295, %v260, 0
    %v993 = vsel %vm295, %v261, 0
    %v996 = vsel %vm295, %v262, 0
    %v999 = vsel %vm295, %v263, 0
    %v1002 = vsel %vm295, %v264, 0
    %v1005 = vsel %vm295, %v265, 0
    %v1008 = vsel %vm295, %v266, 0
    %v1011 = vsel %vm295, %v267, 0
    %v1014 = vsel %vm295, %v268, 0
    %v1017 = vsel %vm295, %v269, 0
    %v1020 = vsel %vm295, %v270, 0
    %v1023 = vsel %vm295, %v271, 0
    %v1026 = vsel %vm295, %v272, 0
    %v1029 = vsel %vm295, %v273, 0
    %v1032 = vsel %vm295, %v274, 0
    %v1035 = vsel %vm295, %v275, 0
    %v1038 = vsel %vm295, %v276, 0
    %v1041 = vsel %vm295, %v277, 0
    %v1044 = vsel %vm295, %v278, 0
    %v1047 = vsel %vm295, %v279, 0
    %v1050 = vsel %vm295, %v280, 0
    %v1053 = vsel %vm295, %v281, 0
    %v1056 = vsel %vm295, %v282, 0
    %v1059 = vsel %vm295, %v283, 0
    %v1062 = vsel %vm295, %v284, 0
    %vm1064 = vcmask 1046528
    %v1066 = vsel %vm1064, %v287, 0
    %1068 = vmatprep.subr.mxu0 0.0
    %1069 = vmatpush1.msra.mxu0 %v285
    %1070 = vmatprep.subr.mxu0 0.0
    %1071 = vmatpush1.msra.mxu0 %v286
    %1072 = vmatprep.subr.mxu0 0.0
    %1073 = vmatpush1.msra.mxu0 %v1066
    %1074 = vmatprep.subr.mxu0 0.0
    %1075 = vmatpush1.msra.mxu0 0.0
    %1076 = vmatprep.subr.mxu0 0.0
    %1077 = vmatpush1.msra.mxu0 0.0
    %1078 = vmatprep.subr.mxu0 0.0
    %1079 = vmatpush1.msra.mxu0 0.0
    %1080 = vmatprep.subr.mxu0 0.0
    %1081 = vmatpush1.msra.mxu0 0.0
    %1082 = vmatprep.subr.mxu0 0.0
    %1083 = vmatpush1.msra.mxu0 0.0
    %1084 = vmatprep.subr.mxu0 0.0
    %1085 = vmatpush1.msra.mxu0 0.0
    %1086 = vmatprep.subr.mxu0 0.0
    %1087 = vmatpush1.msra.mxu0 0.0
    %1088 = vmatprep.subr.mxu0 0.0
    %1089 = vmatpush1.msra.mxu0 0.0
    %1090 = vmatprep.subr.mxu0 0.0
    %1091 = vmatpush1.msra.mxu0 0.0
    %1092 = vmatprep.subr.mxu0 0.0
    %1093 = vmatpush1.msra.mxu0 0.0
    %1094 = vmatprep.subr.mxu0 0.0
    %1095 = vmatpush1.msra.mxu0 0.0
    %1096 = vmatprep.subr.mxu0 0.0
    %1097 = vmatpush1.msra.mxu0 0.0
    %1098 = vmatprep.subr.mxu0 0.0
    %1099 = vmatpush1.msra.mxu0 0.0
    %1100 = vmatprep.subr.mxu0 0.0
    %1101 = vmatpush1.msra.mxu0 0.0
    %1102 = vmatprep.subr.mxu0 0.0
    %1103 = vmatpush1.msra.mxu0 0.0
    %1104 = vmatprep.subr.mxu0 0.0
    %1105 = vmatpush1.msra.mxu0 0.0
    %1106 = vmatprep.subr.mxu0 0.0
    %1107 = vmatpush1.msra.mxu0 0.0
    %1108 = vmatprep.subr.mxu0 0.0
    %1109 = vmatpush1.msra.mxu0 0.0
    %1110 = vmatprep.subr.mxu0 0.0
    %1111 = vmatpush1.msra.mxu0 0.0
    %1112 = vmatprep.subr.mxu0 0.0
    %1113 = vmatpush1.msra.mxu0 0.0
    %1114 = vmatprep.subr.mxu0 0.0
    %1115 = vmatpush1.msra.mxu0 0.0
    %1116 = vmatprep.subr.mxu0 0.0
    %1117 = vmatpush1.msra.mxu0 0.0
    %1118 = vmatprep.subr.mxu0 0.0
    %1119 = vmatpush1.msra.mxu0 0.0
    %1120 = vmatprep.subr.mxu0 0.0
    %1121 = vmatpush1.msra.mxu0 0.0
    %1122 = vmatprep.subr.mxu0 0.0
    %1123 = vmatpush1.msra.mxu0 0.0
    %1124 = vmatprep.subr.mxu0 0.0
    %1125 = vmatpush1.msra.mxu0 0.0
    %1126 = vmatprep.subr.mxu0 0.0
    %1127 = vmatpush1.msra.mxu0 0.0
    %1128 = vmatprep.subr.mxu0 0.0
    %1129 = vmatpush1.msra.mxu0 0.0
    %1130 = vmatprep.subr.mxu0 0.0
    %1131 = vmatpush1.msra.mxu0 0.0
    %1132 = vmatprep.mubr.f32.mxu0 0.0
    %1133 = vmatmul.mubr.f32.gmra.mrb[0].mxu0 %v297
    %v1134 = vpop.f32.mrb[0].mxu0
    %v1135 = vadd.f32 %v293, %v1134
    %v1136 = vpop.f32.mrb[0].mxu0
    %1137 = vmatprep.mubr.f32.mxu0 0.0
    %1138 = vmatmul.mubr.f32.gmra.mrb[0].mxu0 %v300
    %v1139 = vpop.f32.mrb[0].mxu0
    %v1140 = vadd.f32 %v293, %v1139
    %v1141 = vpop.f32.mrb[0].mxu0
    %1142 = vmatprep.mubr.f32.mxu0 0.0
    %1143 = vmatmul.mubr.f32.gmra.mrb[0].mxu0 %v303
    %v1144 = vpop.f32.mrb[0].mxu0
    %v1145 = vadd.f32 %v293, %v1144
    %v1146 = vpop.f32.mrb[0].mxu0
    %1147 = vmatprep.mubr.f32.mxu0 0.0
    %1148 = vmatmul.mubr.f32.gmra.mrb[0].mxu0 %v306
    %v1149 = vpop.f32.mrb[0].mxu0
    %v1150 = vadd.f32 %v293, %v1149
    %v1151 = vpop.f32.mrb[0].mxu0
    %1152 = vmatprep.mubr.f32.mxu0 0.0
    %1153 = vmatmul.mubr.f32.gmra.mrb[0].mxu0 %v309
    %v1154 = vpop.f32.mrb[0].mxu0
    %v1155 = vadd.f32 %v293, %v1154
    %v1156 = vpop.f32.mrb[0].mxu0
    %1157 = vmatprep.mubr.f32.mxu0 0.0
    %1158 = vmatmul.mubr.f32.gmra.mrb[0].mxu0 %v312
    %v1159 = vpop.f32.mrb[0].mxu0
    %v1160 = vadd.f32 %v293, %v1159
    %v1161 = vpop.f32.mrb[0].mxu0
    %1162 = vmatprep.mubr.f32.mxu0 0.0
    %1163 = vmatmul.mubr.f32.gmra.mrb[0].mxu0 %v315
    %v1164 = vpop.f32.mrb[0].mxu0
    %v1165 = vadd.f32 %v293, %v1164
    %v1166 = vpop.f32.mrb[0].mxu0
    %1167 = vmatprep.mubr.f32.mxu0 0.0
    %1168 = vmatmul.mubr.f32.gmra.mrb[0].mxu0 %v318
    %v1169 = vpop.f32.mrb[0].mxu0
    %v1170 = vadd.f32 %v293, %v1169
    %v1171 = vpop.f32.mrb[0].mxu0
    %1172 = vmatprep.mubr.f32.mxu0 0.0
    %1173 = vmatmul.mubr.f32.gmra.mrb[0].mxu0 %v321
    %v1174 = vpop.f32.mrb[0].mxu0
    %v1175 = vadd.f32 %v293, %v1174
    %v1176 = vpop.f32.mrb[0].mxu0
    %1177 = vmatprep.mubr.f32.mxu0 0.0
    %1178 = vmatmul.mubr.f32.gmra.mrb[0].mxu0 %v324
    %v1179 = vpop.f32.mrb[0].mxu0
    %v1180 = vadd.f32 %v293, %v1179
    %v1181 = vpop.f32.mrb[0].mxu0
    %1182 = vmatprep.mubr.f32.mxu0 0.0
    %1183 = vmatmul.mubr.f32.gmra.mrb[0].mxu0 %v327
    %v1184 = vpop.f32.mrb[0].mxu0
    %v1185 = vadd.f32 %v293, %v1184
    %v1186 = vpop.f32.mrb[0].mxu0
    %1187 = vmatprep.mubr.f32.mxu0 0.0
    %1188 = vmatmul.mubr.f32.gmra.mrb[0].mxu0 %v330
    %v1189 = vpop.f32.mrb[0].mxu0
    %v1190 = vadd.f32 %v293, %v1189
    %v1191 = vpop.f32.mrb[0].mxu0
    %1192 = vmatprep.mubr.f32.mxu0 0.0
    %1193 = vmatmul.mubr.f32.gmra.mrb[0].mxu0 %v333
    %v1194 = vpop.f32.mrb[0].mxu0
    %v1195 = vadd.f32 %v293, %v1194
    %v1196 = vpop.f32.mrb[0].mxu0
    %1197 = vmatprep.mubr.f32.mxu0 0.0
    %1198 = vmatmul.mubr.f32.gmra.mrb[0].mxu0 %v336
    %v1199 = vpop.f32.mrb[0].mxu0
    %v1200 = vadd.f32 %v293, %v1199
    %v1201 = vpop.f32.mrb[0].mxu0
    %1202 = vmatprep.mubr.f32.mxu0 0.0
    %1203 = vmatmul.mubr.f32.gmra.mrb[0].mxu0 %v339
    %v1204 = vpop.f32.mrb[0].mxu0
    %v1205 = vadd.f32 %v293, %v1204
    %v1206 = vpop.f32.mrb[0].mxu0
    %1207 = vmatprep.mubr.f32.mxu0 0.0
    %1208 = vmatmul.mubr.f32.gmra.mrb[0].mxu0 %v342
    %v1209 = vpop.f32.mrb[0].mxu0
    %v1210 = vadd.f32 %v293, %v1209
    %v1211 = vpop.f32.mrb[0].mxu0
    %1212 = vmatprep.mubr.f32.mxu0 0.0
    %1213 = vmatmul.mubr.f32.gmra.mrb[0].mxu0 %v345
    %v1214 = vpop.f32.mrb[0].mxu0
    %v1215 = vadd.f32 %v293, %v1214
    %v1216 = vpop.f32.mrb[0].mxu0
    %1217 = vmatprep.mubr.f32.mxu0 0.0
    %1218 = vmatmul.mubr.f32.gmra.mrb[0].mxu0 %v348
    %v1219 = vpop.f32.mrb[0].mxu0
    %v1220 = vadd.f32 %v293, %v1219
    %v1221 = vpop.f32.mrb[0].mxu0
    %1222 = vmatprep.mubr.f32.mxu0 0.0
    %1223 = vmatmul.mubr.f32.gmra.mrb[0].mxu0 %v351
    %v1224 = vpop.f32.mrb[0].mxu0
    %v1225 = vadd.f32 %v293, %v1224
    %v1226 = vpop.f32.mrb[0].mxu0
    %1227 = vmatprep.mubr.f32.mxu0 0.0
    %1228 = vmatmul.mubr.f32.gmra.mrb[0].mxu0 %v354
    %v1229 = vpop.f32.mrb[0].mxu0
    %v1230 = vadd.f32 %v293, %v1229
    %v1231 = vpop.f32.mrb[0].mxu0
    %1232 = vmatprep.mubr.f32.mxu0 0.0
    %1233 = vmatmul.mubr.f32.gmra.mrb[0].mxu0 %v357
    %v1234 = vpop.f32.mrb[0].mxu0
    %v1235 = vadd.f32 %v293, %v1234
    %v1236 = vpop.f32.mrb[0].mxu0
    %1237 = vmatprep.mubr.f32.mxu0 0.0
    %1238 = vmatmul.mubr.f32.gmra.mrb[0].mxu0 %v360
    %v1239 = vpop.f32.mrb[0].mxu0
    %v1240 = vadd.f32 %v293, %v1239
    %v1241 = vpop.f32.mrb[0].mxu0
    %1242 = vmatprep.mubr.f32.mxu0 0.0
    %1243 = vmatmul.mubr.f32.gmra.mrb[0].mxu0 %v363
    %v1244 = vpop.f32.mrb[0].mxu0
    %v1245 = vadd.f32 %v293, %v1244
    %v1246 = vpop.f32.mrb[0].mxu0
    %1247 = vmatprep.mubr.f32.mxu0 0.0
    %1248 = vmatmul.mubr.f32.gmra.mrb[0].mxu0 %v366
    %v1249 = vpop.f32.mrb[0].mxu0
    %v1250 = vadd.f32 %v293, %v1249
    %v1251 = vpop.f32.mrb[0].mxu0
    %1252 = vmatprep.mubr.f32.mxu0 0.0
    %1253 = vmatmul.mubr.f32.gmra.mrb[0].mxu0 %v369
    %v1254 = vpop.f32.mrb[0].mxu0
    %v1255 = vadd.f32 %v293, %v1254
    %v1256 = vpop.f32.mrb[0].mxu0
    %1257 = vmatprep.mubr.f32.mxu0 0.0
    %1258 = vmatmul.mubr.f32.gmra.mrb[0].mxu0 %v372
    %v1259 = vpop.f32.mrb[0].mxu0
    %v1260 = vadd.f32 %v293, %v1259
    %v1261 = vpop.f32.mrb[0].mxu0
    %1262 = vmatprep.mubr.f32.mxu0 0.0
    %1263 = vmatmul.mubr.f32.gmra.mrb[0].mxu0 %v375
    %v1264 = vpop.f32.mrb[0].mxu0
    %v1265 = vadd.f32 %v293, %v1264
    %v1266 = vpop.f32.mrb[0].mxu0
    %1267 = vmatprep.mubr.f32.mxu0 0.0
    %1268 = vmatmul.mubr.f32.gmra.mrb[0].mxu0 %v378
    %v1269 = vpop.f32.mrb[0].mxu0
    %v1270 = vadd.f32 %v293, %v1269
    %v1271 = vpop.f32.mrb[0].mxu0
    %1272 = vmatprep.mubr.f32.mxu0 0.0
    %1273 = vmatmul.mubr.f32.gmra.mrb[0].mxu0 %v381
    %v1274 = vpop.f32.mrb[0].mxu0
    %v1275 = vadd.f32 %v293, %v1274
    %v1276 = vpop.f32.mrb[0].mxu0
    %1277 = vmatprep.mubr.f32.mxu0 0.0
    %1278 = vmatmul.mubr.f32.gmra.mrb[0].mxu0 %v384
    %v1279 = vpop.f32.mrb[0].mxu0
    %v1280 = vadd.f32 %v293, %v1279
    %v1281 = vpop.f32.mrb[0].mxu0
    %1282 = vmatprep.mubr.f32.mxu0 0.0
    %1283 = vmatmul.mubr.f32.gmra.mrb[0].mxu0 %v387
    %v1284 = vpop.f32.mrb[0].mxu0
    %v1285 = vadd.f32 %v293, %v1284
    %v1286 = vpop.f32.mrb[0].mxu0
    %1287 = vmatprep.mubr.f32.mxu0 0.0
    %1288 = vmatmul.mubr.f32.gmra.mrb[0].mxu0 %v390
    %v1289 = vpop.f32.mrb[0].mxu0
    %v1290 = vadd.f32 %v293, %v1289
    %v1291 = vpop.f32.mrb[0].mxu0
    %1292 = vmatprep.mubr.f32.mxu0 0.0
    %1293 = vmatmul.mubr.f32.gmra.mrb[0].mxu0 %v393
    %v1294 = vpop.f32.mrb[0].mxu0
    %v1295 = vadd.f32 %v293, %v1294
    %v1296 = vpop.f32.mrb[0].mxu0
    %1297 = vmatprep.mubr.f32.mxu0 0.0
    %1298 = vmatmul.mubr.f32.gmra.mrb[0].mxu0 %v396
    %v1299 = vpop.f32.mrb[0].mxu0
    %v1300 = vadd.f32 %v293, %v1299
    %v1301 = vpop.f32.mrb[0].mxu0
    %1302 = vmatprep.mubr.f32.mxu0 0.0
    %1303 = vmatmul.mubr.f32.gmra.mrb[0].mxu0 %v399
    %v1304 = vpop.f32.mrb[0].mxu0
    %v1305 = vadd.f32 %v293, %v1304
    %v1306 = vpop.f32.mrb[0].mxu0
    %1307 = vmatprep.mubr.f32.mxu0 0.0
    %1308 = vmatmul.mubr.f32.gmra.mrb[0].mxu0 %v402
    %v1309 = vpop.f32.mrb[0].mxu0
    %v1310 = vadd.f32 %v293, %v1309
    %v1311 = vpop.f32.mrb[0].mxu0
    %1312 = vmatprep.mubr.f32.mxu0 0.0
    %1313 = vmatmul.mubr.f32.gmra.mrb[0].mxu0 %v405
    %v1314 = vpop.f32.mrb[0].mxu0
    %v1315 = vadd.f32 %v293, %v1314
    %v1316 = vpop.f32.mrb[0].mxu0
    %1317 = vmatprep.mubr.f32.mxu0 0.0
    %1318 = vmatmul.mubr.f32.gmra.mrb[0].mxu0 %v408
    %v1319 = vpop.f32.mrb[0].mxu0
    %v1320 = vadd.f32 %v293, %v1319
    %v1321 = vpop.f32.mrb[0].mxu0
    %1322 = vmatprep.mubr.f32.mxu0 0.0
    %1323 = vmatmul.mubr.f32.gmra.mrb[0].mxu0 %v411
    %v1324 = vpop.f32.mrb[0].mxu0
    %v1325 = vadd.f32 %v293, %v1324
    %v1326 = vpop.f32.mrb[0].mxu0
    %1327 = vmatprep.mubr.f32.mxu0 0.0
    %1328 = vmatmul.mubr.f32.gmra.mrb[0].mxu0 %v414
    %v1329 = vpop.f32.mrb[0].mxu0
    %v1330 = vadd.f32 %v293, %v1329
    %v1331 = vpop.f32.mrb[0].mxu0
    %1332 = vmatprep.mubr.f32.mxu0 0.0
    %1333 = vmatmul.mubr.f32.gmra.mrb[0].mxu0 %v417
    %v1334 = vpop.f32.mrb[0].mxu0
    %v1335 = vadd.f32 %v293, %v1334
    %v1336 = vpop.f32.mrb[0].mxu0
    %1337 = vmatprep.mubr.f32.mxu0 0.0
    %1338 = vmatmul.mubr.f32.gmra.mrb[0].mxu0 %v420
    %v1339 = vpop.f32.mrb[0].mxu0
    %v1340 = vadd.f32 %v293, %v1339
    %v1341 = vpop.f32.mrb[0].mxu0
    %1342 = vmatprep.mubr.f32.mxu0 0.0
    %1343 = vmatmul.mubr.f32.gmra.mrb[0].mxu0 %v423
    %v1344 = vpop.f32.mrb[0].mxu0
    %v1345 = vadd.f32 %v293, %v1344
    %v1346 = vpop.f32.mrb[0].mxu0
    %1347 = vmatprep.mubr.f32.mxu0 0.0
    %1348 = vmatmul.mubr.f32.gmra.mrb[0].mxu0 %v426
    %v1349 = vpop.f32.mrb[0].mxu0
    %v1350 = vadd.f32 %v293, %v1349
    %v1351 = vpop.f32.mrb[0].mxu0
    %1352 = vmatprep.mubr.f32.mxu0 0.0
    %1353 = vmatmul.mubr.f32.gmra.mrb[0].mxu0 %v429
    %v1354 = vpop.f32.mrb[0].mxu0
    %v1355 = vadd.f32 %v293, %v1354
    %v1356 = vpop.f32.mrb[0].mxu0
    %1357 = vmatprep.mubr.f32.mxu0 0.0
    %1358 = vmatmul.mubr.f32.gmra.mrb[0].mxu0 %v432
    %v1359 = vpop.f32.mrb[0].mxu0
    %v1360 = vadd.f32 %v293, %v1359
    %v1361 = vpop.f32.mrb[0].mxu0
    %1362 = vmatprep.mubr.f32.mxu0 0.0
    %1363 = vmatmul.mubr.f32.gmra.mrb[0].mxu0 %v435
    %v1364 = vpop.f32.mrb[0].mxu0
    %v1365 = vadd.f32 %v293, %v1364
    %v1366 = vpop.f32.mrb[0].mxu0
    %1367 = vmatprep.mubr.f32.mxu0 0.0
    %1368 = vmatmul.mubr.f32.gmra.mrb[0].mxu0 %v438
    %v1369 = vpop.f32.mrb[0].mxu0
    %v1370 = vadd.f32 %v293, %v1369
    %v1371 = vpop.f32.mrb[0].mxu0
    %1372 = vmatprep.mubr.f32.mxu0 0.0
    %1373 = vmatmul.mubr.f32.gmra.mrb[0].mxu0 %v441
    %v1374 = vpop.f32.mrb[0].mxu0
    %v1375 = vadd.f32 %v293, %v1374
    %v1376 = vpop.f32.mrb[0].mxu0
    %1377 = vmatprep.mubr.f32.mxu0 0.0
    %1378 = vmatmul.mubr.f32.gmra.mrb[0].mxu0 %v444
    %v1379 = vpop.f32.mrb[0].mxu0
    %v1380 = vadd.f32 %v293, %v1379
    %v1381 = vpop.f32.mrb[0].mxu0
    %1382 = vmatprep.mubr.f32.mxu0 0.0
    %1383 = vmatmul.mubr.f32.gmra.mrb[0].mxu0 %v447
    %v1384 = vpop.f32.mrb[0].mxu0
    %v1385 = vadd.f32 %v293, %v1384
    %v1386 = vpop.f32.mrb[0].mxu0
    %1387 = vmatprep.mubr.f32.mxu0 0.0
    %1388 = vmatmul.mubr.f32.gmra.mrb[0].mxu0 %v450
    %v1389 = vpop.f32.mrb[0].mxu0
    %v1390 = vadd.f32 %v293, %v1389
    %v1391 = vpop.f32.mrb[0].mxu0
    %1392 = vmatprep.mubr.f32.mxu0 0.0
    %1393 = vmatmul.mubr.f32.gmra.mrb[0].mxu0 %v453
    %v1394 = vpop.f32.mrb[0].mxu0
    %v1395 = vadd.f32 %v293, %v1394
    %v1396 = vpop.f32.mrb[0].mxu0
    %1397 = vmatprep.mubr.f32.mxu0 0.0
    %1398 = vmatmul.mubr.f32.gmra.mrb[0].mxu0 %v456
    %v1399 = vpop.f32.mrb[0].mxu0
    %v1400 = vadd.f32 %v293, %v1399
    %v1401 = vpop.f32.mrb[0].mxu0
    %1402 = vmatprep.mubr.f32.mxu0 0.0
    %1403 = vmatmul.mubr.f32.gmra.mrb[0].mxu0 %v459
    %v1404 = vpop.f32.mrb[0].mxu0
    %v1405 = vadd.f32 %v293, %v1404
    %v1406 = vpop.f32.mrb[0].mxu0
    %1407 = vmatprep.mubr.f32.mxu0 0.0
    %1408 = vmatmul.mubr.f32.gmra.mrb[0].mxu0 %v462
    %v1409 = vpop.f32.mrb[0].mxu0
    %v1410 = vadd.f32 %v293, %v1409
    %v1411 = vpop.f32.mrb[0].mxu0
    %1412 = vmatprep.mubr.f32.mxu0 0.0
    %1413 = vmatmul.mubr.f32.gmra.mrb[0].mxu0 %v465
    %v1414 = vpop.f32.mrb[0].mxu0
    %v1415 = vadd.f32 %v293, %v1414
    %v1416 = vpop.f32.mrb[0].mxu0
    %1417 = vmatprep.mubr.f32.mxu0 0.0
    %1418 = vmatmul.mubr.f32.gmra.mrb[0].mxu0 %v468
    %v1419 = vpop.f32.mrb[0].mxu0
    %v1420 = vadd.f32 %v293, %v1419
    %v1421 = vpop.f32.mrb[0].mxu0
    %1422 = vmatprep.mubr.f32.mxu0 0.0
    %1423 = vmatmul.mubr.f32.gmra.mrb[0].mxu0 %v471
    %v1424 = vpop.f32.mrb[0].mxu0
    %v1425 = vadd.f32 %v293, %v1424
    %v1426 = vpop.f32.mrb[0].mxu0
    %1427 = vmatprep.mubr.f32.mxu0 0.0
    %1428 = vmatmul.mubr.f32.gmra.mrb[0].mxu0 %v474
    %v1429 = vpop.f32.mrb[0].mxu0
    %v1430 = vadd.f32 %v293, %v1429
    %v1431 = vpop.f32.mrb[0].mxu0
    %1432 = vmatprep.mubr.f32.mxu0 0.0
    %1433 = vmatmul.mubr.f32.gmra.mrb[0].mxu0 %v477
    %v1434 = vpop.f32.mrb[0].mxu0
    %v1435 = vadd.f32 %v293, %v1434
    %v1436 = vpop.f32.mrb[0].mxu0
    %1437 = vmatprep.mubr.f32.mxu0 0.0
    %1438 = vmatmul.mubr.f32.gmra.mrb[0].mxu0 %v480
    %v1439 = vpop.f32.mrb[0].mxu0
    %v1440 = vadd.f32 %v293, %v1439
    %v1441 = vpop.f32.mrb[0].mxu0
    %1442 = vmatprep.mubr.f32.mxu0 0.0
    %1443 = vmatmul.mubr.f32.gmra.mrb[0].mxu0 %v483
    %v1444 = vpop.f32.mrb[0].mxu0
    %v1445 = vadd.f32 %v293, %v1444
    %v1446 = vpop.f32.mrb[0].mxu0
    %1447 = vmatprep.mubr.f32.mxu0 0.0
    %1448 = vmatmul.mubr.f32.gmra.mrb[0].mxu0 %v486
    %v1449 = vpop.f32.mrb[0].mxu0
    %v1450 = vadd.f32 %v293, %v1449
    %v1451 = vpop.f32.mrb[0].mxu0
    %1452 = vmatprep.mubr.f32.mxu0 0.0
    %1453 = vmatmul.mubr.f32.gmra.mrb[0].mxu0 %v489
    %v1454 = vpop.f32.mrb[0].mxu0
    %v1455 = vadd.f32 %v293, %v1454
    %v1456 = vpop.f32.mrb[0].mxu0
    %1457 = vmatprep.mubr.f32.mxu0 0.0
    %1458 = vmatmul.mubr.f32.gmra.mrb[0].mxu0 %v492
    %v1459 = vpop.f32.mrb[0].mxu0
    %v1460 = vadd.f32 %v293, %v1459
    %v1461 = vpop.f32.mrb[0].mxu0
    %1462 = vmatprep.mubr.f32.mxu0 0.0
    %1463 = vmatmul.mubr.f32.gmra.mrb[0].mxu0 %v495
    %v1464 = vpop.f32.mrb[0].mxu0
    %v1465 = vadd.f32 %v293, %v1464
    %v1466 = vpop.f32.mrb[0].mxu0
    %1467 = vmatprep.mubr.f32.mxu0 0.0
    %1468 = vmatmul.mubr.f32.gmra.mrb[0].mxu0 %v498
    %v1469 = vpop.f32.mrb[0].mxu0
    %v1470 = vadd.f32 %v293, %v1469
    %v1471 = vpop.f32.mrb[0].mxu0
    %1472 = vmatprep.mubr.f32.mxu0 0.0
    %1473 = vmatmul.mubr.f32.gmra.mrb[0].mxu0 %v501
    %v1474 = vpop.f32.mrb[0].mxu0
    %v1475 = vadd.f32 %v293, %v1474
    %v1476 = vpop.f32.mrb[0].mxu0
    %1477 = vmatprep.mubr.f32.mxu0 0.0
    %1478 = vmatmul.mubr.f32.gmra.mrb[0].mxu0 %v504
    %v1479 = vpop.f32.mrb[0].mxu0
    %v1480 = vadd.f32 %v293, %v1479
    %v1481 = vpop.f32.mrb[0].mxu0
    %1482 = vmatprep.mubr.f32.mxu0 0.0
    %1483 = vmatmul.mubr.f32.gmra.mrb[0].mxu0 %v507
    %v1484 = vpop.f32.mrb[0].mxu0
    %v1485 = vadd.f32 %v293, %v1484
    %v1486 = vpop.f32.mrb[0].mxu0
    %1487 = vmatprep.mubr.f32.mxu0 0.0
    %1488 = vmatmul.mubr.f32.gmra.mrb[0].mxu0 %v510
    %v1489 = vpop.f32.mrb[0].mxu0
    %v1490 = vadd.f32 %v293, %v1489
    %v1491 = vpop.f32.mrb[0].mxu0
    %1492 = vmatprep.mubr.f32.mxu0 0.0
    %1493 = vmatmul.mubr.f32.gmra.mrb[0].mxu0 %v513
    %v1494 = vpop.f32.mrb[0].mxu0
    %v1495 = vadd.f32 %v293, %v1494
    %v1496 = vpop.f32.mrb[0].mxu0
    %1497 = vmatprep.mubr.f32.mxu0 0.0
    %1498 = vmatmul.mubr.f32.gmra.mrb[0].mxu0 %v516
    %v1499 = vpop.f32.mrb[0].mxu0
    %v1500 = vadd.f32 %v293, %v1499
    %v1501 = vpop.f32.mrb[0].mxu0
    %1502 = vmatprep.mubr.f32.mxu0 0.0
    %1503 = vmatmul.mubr.f32.gmra.mrb[0].mxu0 %v519
    %v1504 = vpop.f32.mrb[0].mxu0
    %v1505 = vadd.f32 %v293, %v1504
    %v1506 = vpop.f32.mrb[0].mxu0
    %1507 = vmatprep.mubr.f32.mxu0 0.0
    %1508 = vmatmul.mubr.f32.gmra.mrb[0].mxu0 %v522
    %v1509 = vpop.f32.mrb[0].mxu0
    %v1510 = vadd.f32 %v293, %v1509
    %v1511 = vpop.f32.mrb[0].mxu0
    %1512 = vmatprep.mubr.f32.mxu0 0.0
    %1513 = vmatmul.mubr.f32.gmra.mrb[0].mxu0 %v525
    %v1514 = vpop.f32.mrb[0].mxu0
    %v1515 = vadd.f32 %v293, %v1514
    %v1516 = vpop.f32.mrb[0].mxu0
    %1517 = vmatprep.mubr.f32.mxu0 0.0
    %1518 = vmatmul.mubr.f32.gmra.mrb[0].mxu0 %v528
    %v1519 = vpop.f32.mrb[0].mxu0
    %v1520 = vadd.f32 %v293, %v1519
    %v1521 = vpop.f32.mrb[0].mxu0
    %1522 = vmatprep.mubr.f32.mxu0 0.0
    %1523 = vmatmul.mubr.f32.gmra.mrb[0].mxu0 %v531
    %v1524 = vpop.f32.mrb[0].mxu0
    %v1525 = vadd.f32 %v293, %v1524
    %v1526 = vpop.f32.mrb[0].mxu0
    %1527 = vmatprep.mubr.f32.mxu0 0.0
    %1528 = vmatmul.mubr.f32.gmra.mrb[0].mxu0 %v534
    %v1529 = vpop.f32.mrb[0].mxu0
    %v1530 = vadd.f32 %v293, %v1529
    %v1531 = vpop.f32.mrb[0].mxu0
    %1532 = vmatprep.mubr.f32.mxu0 0.0
    %1533 = vmatmul.mubr.f32.gmra.mrb[0].mxu0 %v537
    %v1534 = vpop.f32.mrb[0].mxu0
    %v1535 = vadd.f32 %v293, %v1534
    %v1536 = vpop.f32.mrb[0].mxu0
    %1537 = vmatprep.mubr.f32.mxu0 0.0
    %1538 = vmatmul.mubr.f32.gmra.mrb[0].mxu0 %v540
    %v1539 = vpop.f32.mrb[0].mxu0
    %v1540 = vadd.f32 %v293, %v1539
    %v1541 = vpop.f32.mrb[0].mxu0
    %1542 = vmatprep.mubr.f32.mxu0 0.0
    %1543 = vmatmul.mubr.f32.gmra.mrb[0].mxu0 %v543
    %v1544 = vpop.f32.mrb[0].mxu0
    %v1545 = vadd.f32 %v293, %v1544
    %v1546 = vpop.f32.mrb[0].mxu0
    %1547 = vmatprep.mubr.f32.mxu0 0.0
    %1548 = vmatmul.mubr.f32.gmra.mrb[0].mxu0 %v546
    %v1549 = vpop.f32.mrb[0].mxu0
    %v1550 = vadd.f32 %v293, %v1549
    %v1551 = vpop.f32.mrb[0].mxu0
    %1552 = vmatprep.mubr.f32.mxu0 0.0
    %1553 = vmatmul.mubr.f32.gmra.mrb[0].mxu0 %v549
    %v1554 = vpop.f32.mrb[0].mxu0
    %v1555 = vadd.f32 %v293, %v1554
    %v1556 = vpop.f32.mrb[0].mxu0
    %1557 = vmatprep.mubr.f32.mxu0 0.0
    %1558 = vmatmul.mubr.f32.gmra.mrb[0].mxu0 %v552
    %v1559 = vpop.f32.mrb[0].mxu0
    %v1560 = vadd.f32 %v293, %v1559
    %v1561 = vpop.f32.mrb[0].mxu0
    %1562 = vmatprep.mubr.f32.mxu0 0.0
    %1563 = vmatmul.mubr.f32.gmra.mrb[0].mxu0 %v555
    %v1564 = vpop.f32.mrb[0].mxu0
    %v1565 = vadd.f32 %v293, %v1564
    %v1566 = vpop.f32.mrb[0].mxu0
    %1567 = vmatprep.mubr.f32.mxu0 0.0
    %1568 = vmatmul.mubr.f32.gmra.mrb[0].mxu0 %v558
    %v1569 = vpop.f32.mrb[0].mxu0
    %v1570 = vadd.f32 %v293, %v1569
    %v1571 = vpop.f32.mrb[0].mxu0
    %1572 = vmatprep.mubr.f32.mxu0 0.0
    %1573 = vmatmul.mubr.f32.gmra.mrb[0].mxu0 %v561
    %v1574 = vpop.f32.mrb[0].mxu0
    %v1575 = vadd.f32 %v293, %v1574
    %v1576 = vpop.f32.mrb[0].mxu0
    %1577 = vmatprep.mubr.f32.mxu0 0.0
    %1578 = vmatmul.mubr.f32.gmra.mrb[0].mxu0 %v564
    %v1579 = vpop.f32.mrb[0].mxu0
    %v1580 = vadd.f32 %v293, %v1579
    %v1581 = vpop.f32.mrb[0].mxu0
    %1582 = vmatprep.mubr.f32.mxu0 0.0
    %1583 = vmatmul.mubr.f32.gmra.mrb[0].mxu0 %v567
    %v1584 = vpop.f32.mrb[0].mxu0
    %v1585 = vadd.f32 %v293, %v1584
    %v1586 = vpop.f32.mrb[0].mxu0
    %1587 = vmatprep.mubr.f32.mxu0 0.0
    %1588 = vmatmul.mubr.f32.gmra.mrb[0].mxu0 %v570
    %v1589 = vpop.f32.mrb[0].mxu0
    %v1590 = vadd.f32 %v293, %v1589
    %v1591 = vpop.f32.mrb[0].mxu0
    %1592 = vmatprep.mubr.f32.mxu0 0.0
    %1593 = vmatmul.mubr.f32.gmra.mrb[0].mxu0 %v573
    %v1594 = vpop.f32.mrb[0].mxu0
    %v1595 = vadd.f32 %v293, %v1594
    %v1596 = vpop.f32.mrb[0].mxu0
    %1597 = vmatprep.mubr.f32.mxu0 0.0
    %1598 = vmatmul.mubr.f32.gmra.mrb[0].mxu0 %v576
    %v1599 = vpop.f32.mrb[0].mxu0
    %v1600 = vadd.f32 %v293, %v1599
    %v1601 = vpop.f32.mrb[0].mxu0
    %1602 = vmatprep.mubr.f32.mxu0 0.0
    %1603 = vmatmul.mubr.f32.gmra.mrb[0].mxu0 %v579
    %v1604 = vpop.f32.mrb[0].mxu0
    %v1605 = vadd.f32 %v293, %v1604
    %v1606 = vpop.f32.mrb[0].mxu0
    %1607 = vmatprep.mubr.f32.mxu0 0.0
    %1608 = vmatmul.mubr.f32.gmra.mrb[0].mxu0 %v582
    %v1609 = vpop.f32.mrb[0].mxu0
    %v1610 = vadd.f32 %v293, %v1609
    %v1611 = vpop.f32.mrb[0].mxu0
    %1612 = vmatprep.mubr.f32.mxu0 0.0
    %1613 = vmatmul.mubr.f32.gmra.mrb[0].mxu0 %v585
    %v1614 = vpop.f32.mrb[0].mxu0
    %v1615 = vadd.f32 %v293, %v1614
    %v1616 = vpop.f32.mrb[0].mxu0
    %1617 = vmatprep.mubr.f32.mxu0 0.0
    %1618 = vmatmul.mubr.f32.gmra.mrb[0].mxu0 %v588
    %v1619 = vpop.f32.mrb[0].mxu0
    %v1620 = vadd.f32 %v293, %v1619
    %v1621 = vpop.f32.mrb[0].mxu0
    %1622 = vmatprep.mubr.f32.mxu0 0.0
    %1623 = vmatmul.mubr.f32.gmra.mrb[0].mxu0 %v591
    %v1624 = vpop.f32.mrb[0].mxu0
    %v1625 = vadd.f32 %v293, %v1624
    %v1626 = vpop.f32.mrb[0].mxu0
    %1627 = vmatprep.mubr.f32.mxu0 0.0
    %1628 = vmatmul.mubr.f32.gmra.mrb[0].mxu0 %v594
    %v1629 = vpop.f32.mrb[0].mxu0
    %v1630 = vadd.f32 %v293, %v1629
    %v1631 = vpop.f32.mrb[0].mxu0
    %1632 = vmatprep.mubr.f32.mxu0 0.0
    %1633 = vmatmul.mubr.f32.gmra.mrb[0].mxu0 %v597
    %v1634 = vpop.f32.mrb[0].mxu0
    %v1635 = vadd.f32 %v293, %v1634
    %v1636 = vpop.f32.mrb[0].mxu0
    %1637 = vmatprep.mubr.f32.mxu0 0.0
    %1638 = vmatmul.mubr.f32.gmra.mrb[0].mxu0 %v600
    %v1639 = vpop.f32.mrb[0].mxu0
    %v1640 = vadd.f32 %v293, %v1639
    %v1641 = vpop.f32.mrb[0].mxu0
    %1642 = vmatprep.mubr.f32.mxu0 0.0
    %1643 = vmatmul.mubr.f32.gmra.mrb[0].mxu0 %v603
    %v1644 = vpop.f32.mrb[0].mxu0
    %v1645 = vadd.f32 %v293, %v1644
    %v1646 = vpop.f32.mrb[0].mxu0
    %1647 = vmatprep.mubr.f32.mxu0 0.0
    %1648 = vmatmul.mubr.f32.gmra.mrb[0].mxu0 %v606
    %v1649 = vpop.f32.mrb[0].mxu0
    %v1650 = vadd.f32 %v293, %v1649
    %v1651 = vpop.f32.mrb[0].mxu0
    %1652 = vmatprep.mubr.f32.mxu0 0.0
    %1653 = vmatmul.mubr.f32.gmra.mrb[0].mxu0 %v609
    %v1654 = vpop.f32.mrb[0].mxu0
    %v1655 = vadd.f32 %v293, %v1654
    %v1656 = vpop.f32.mrb[0].mxu0
    %1657 = vmatprep.mubr.f32.mxu0 0.0
    %1658 = vmatmul.mubr.f32.gmra.mrb[0].mxu0 %v612
    %v1659 = vpop.f32.mrb[0].mxu0
    %v1660 = vadd.f32 %v293, %v1659
    %v1661 = vpop.f32.mrb[0].mxu0
    %1662 = vmatprep.mubr.f32.mxu0 0.0
    %1663 = vmatmul.mubr.f32.gmra.mrb[0].mxu0 %v615
    %v1664 = vpop.f32.mrb[0].mxu0
    %v1665 = vadd.f32 %v293, %v1664
    %v1666 = vpop.f32.mrb[0].mxu0
    %1667 = vmatprep.mubr.f32.mxu0 0.0
    %1668 = vmatmul.mubr.f32.gmra.mrb[0].mxu0 %v618
    %v1669 = vpop.f32.mrb[0].mxu0
    %v1670 = vadd.f32 %v293, %v1669
    %v1671 = vpop.f32.mrb[0].mxu0
    %1672 = vmatprep.mubr.f32.mxu0 0.0
    %1673 = vmatmul.mubr.f32.gmra.mrb[0].mxu0 %v621
    %v1674 = vpop.f32.mrb[0].mxu0
    %v1675 = vadd.f32 %v293, %v1674
    %v1676 = vpop.f32.mrb[0].mxu0
    %1677 = vmatprep.mubr.f32.mxu0 0.0
    %1678 = vmatmul.mubr.f32.gmra.mrb[0].mxu0 %v624
    %v1679 = vpop.f32.mrb[0].mxu0
    %v1680 = vadd.f32 %v293, %v1679
    %v1681 = vpop.f32.mrb[0].mxu0
    %1682 = vmatprep.mubr.f32.mxu0 0.0
    %1683 = vmatmul.mubr.f32.gmra.mrb[0].mxu0 %v627
    %v1684 = vpop.f32.mrb[0].mxu0
    %v1685 = vadd.f32 %v293, %v1684
    %v1686 = vpop.f32.mrb[0].mxu0
    %1687 = vmatprep.mubr.f32.mxu0 0.0
    %1688 = vmatmul.mubr.f32.gmra.mrb[0].mxu0 %v630
    %v1689 = vpop.f32.mrb[0].mxu0
    %v1690 = vadd.f32 %v293, %v1689
    %v1691 = vpop.f32.mrb[0].mxu0
    %1692 = vmatprep.mubr.f32.mxu0 0.0
    %1693 = vmatmul.mubr.f32.gmra.mrb[0].mxu0 %v633
    %v1694 = vpop.f32.mrb[0].mxu0
    %v1695 = vadd.f32 %v293, %v1694
    %v1696 = vpop.f32.mrb[0].mxu0
    %1697 = vmatprep.mubr.f32.mxu0 0.0
    %1698 = vmatmul.mubr.f32.gmra.mrb[0].mxu0 %v636
    %v1699 = vpop.f32.mrb[0].mxu0
    %v1700 = vadd.f32 %v293, %v1699
    %v1701 = vpop.f32.mrb[0].mxu0
    %1702 = vmatprep.mubr.f32.mxu0 0.0
    %1703 = vmatmul.mubr.f32.gmra.mrb[0].mxu0 %v639
    %v1704 = vpop.f32.mrb[0].mxu0
    %v1705 = vadd.f32 %v293, %v1704
    %v1706 = vpop.f32.mrb[0].mxu0
    %1707 = vmatprep.mubr.f32.mxu0 0.0
    %1708 = vmatmul.mubr.f32.gmra.mrb[0].mxu0 %v642
    %v1709 = vpop.f32.mrb[0].mxu0
    %v1710 = vadd.f32 %v293, %v1709
    %v1711 = vpop.f32.mrb[0].mxu0
    %1712 = vmatprep.mubr.f32.mxu0 0.0
    %1713 = vmatmul.mubr.f32.gmra.mrb[0].mxu0 %v645
    %v1714 = vpop.f32.mrb[0].mxu0
    %v1715 = vadd.f32 %v293, %v1714
    %v1716 = vpop.f32.mrb[0].mxu0
    %1717 = vmatprep.mubr.f32.mxu0 0.0
    %1718 = vmatmul.mubr.f32.gmra.mrb[0].mxu0 %v648
    %v1719 = vpop.f32.mrb[0].mxu0
    %v1720 = vadd.f32 %v293, %v1719
    %v1721 = vpop.f32.mrb[0].mxu0
    %1722 = vmatprep.mubr.f32.mxu0 0.0
    %1723 = vmatmul.mubr.f32.gmra.mrb[0].mxu0 %v651
    %v1724 = vpop.f32.mrb[0].mxu0
    %v1725 = vadd.f32 %v293, %v1724
    %v1726 = vpop.f32.mrb[0].mxu0
    %1727 = vmatprep.mubr.f32.mxu0 0.0
    %1728 = vmatmul.mubr.f32.gmra.mrb[0].mxu0 %v654
    %v1729 = vpop.f32.mrb[0].mxu0
    %v1730 = vadd.f32 %v293, %v1729
    %v1731 = vpop.f32.mrb[0].mxu0
    %1732 = vmatprep.mubr.f32.mxu0 0.0
    %1733 = vmatmul.mubr.f32.gmra.mrb[0].mxu0 %v657
    %v1734 = vpop.f32.mrb[0].mxu0
    %v1735 = vadd.f32 %v293, %v1734
    %v1736 = vpop.f32.mrb[0].mxu0
    %1737 = vmatprep.mubr.f32.mxu0 0.0
    %1738 = vmatmul.mubr.f32.gmra.mrb[0].mxu0 %v660
    %v1739 = vpop.f32.mrb[0].mxu0
    %v1740 = vadd.f32 %v293, %v1739
    %v1741 = vpop.f32.mrb[0].mxu0
    %1742 = vmatprep.mubr.f32.mxu0 0.0
    %1743 = vmatmul.mubr.f32.gmra.mrb[0].mxu0 %v663
    %v1744 = vpop.f32.mrb[0].mxu0
    %v1745 = vadd.f32 %v293, %v1744
    %v1746 = vpop.f32.mrb[0].mxu0
    %1747 = vmatprep.mubr.f32.mxu0 0.0
    %1748 = vmatmul.mubr.f32.gmra.mrb[0].mxu0 %v666
    %v1749 = vpop.f32.mrb[0].mxu0
    %v1750 = vadd.f32 %v293, %v1749
    %v1751 = vpop.f32.mrb[0].mxu0
    %1752 = vmatprep.mubr.f32.mxu0 0.0
    %1753 = vmatmul.mubr.f32.gmra.mrb[0].mxu0 %v669
    %v1754 = vpop.f32.mrb[0].mxu0
    %v1755 = vadd.f32 %v293, %v1754
    %v1756 = vpop.f32.mrb[0].mxu0
    %1757 = vmatprep.mubr.f32.mxu0 0.0
    %1758 = vmatmul.mubr.f32.gmra.mrb[0].mxu0 %v672
    %v1759 = vpop.f32.mrb[0].mxu0
    %v1760 = vadd.f32 %v293, %v1759
    %v1761 = vpop.f32.mrb[0].mxu0
    %1762 = vmatprep.mubr.f32.mxu0 0.0
    %1763 = vmatmul.mubr.f32.gmra.mrb[0].mxu0 %v675
    %v1764 = vpop.f32.mrb[0].mxu0
    %v1765 = vadd.f32 %v293, %v1764
    %v1766 = vpop.f32.mrb[0].mxu0
    %1767 = vmatprep.mubr.f32.mxu0 0.0
    %1768 = vmatmul.mubr.f32.gmra.mrb[0].mxu0 %v678
    %v1769 = vpop.f32.mrb[0].mxu0
    %v1770 = vadd.f32 %v293, %v1769
    %v1771 = vpop.f32.mrb[0].mxu0
    %1772 = vmatprep.mubr.f32.mxu0 0.0
    %1773 = vmatmul.mubr.f32.gmra.mrb[0].mxu0 %v681
    %v1774 = vpop.f32.mrb[0].mxu0
    %v1775 = vadd.f32 %v293, %v1774
    %v1776 = vpop.f32.mrb[0].mxu0
    %1777 = vmatprep.mubr.f32.mxu0 0.0
    %1778 = vmatmul.mubr.f32.gmra.mrb[0].mxu0 %v684
    %v1779 = vpop.f32.mrb[0].mxu0
    %v1780 = vadd.f32 %v293, %v1779
    %v1781 = vpop.f32.mrb[0].mxu0
    %1782 = vmatprep.mubr.f32.mxu0 0.0
    %1783 = vmatmul.mubr.f32.gmra.mrb[0].mxu0 %v687
    %v1784 = vpop.f32.mrb[0].mxu0
    %v1785 = vadd.f32 %v293, %v1784
    %v1786 = vpop.f32.mrb[0].mxu0
    %1787 = vmatprep.mubr.f32.mxu0 0.0
    %1788 = vmatmul.mubr.f32.gmra.mrb[0].mxu0 %v690
    %v1789 = vpop.f32.mrb[0].mxu0
    %v1790 = vadd.f32 %v293, %v1789
    %v1791 = vpop.f32.mrb[0].mxu0
    %1792 = vmatprep.mubr.f32.mxu0 0.0
    %1793 = vmatmul.mubr.f32.gmra.mrb[0].mxu0 %v693
    %v1794 = vpop.f32.mrb[0].mxu0
    %v1795 = vadd.f32 %v293, %v1794
    %v1796 = vpop.f32.mrb[0].mxu0
    %1797 = vmatprep.mubr.f32.mxu0 0.0
    %1798 = vmatmul.mubr.f32.gmra.mrb[0].mxu0 %v696
    %v1799 = vpop.f32.mrb[0].mxu0
    %v1800 = vadd.f32 %v293, %v1799
    %v1801 = vpop.f32.mrb[0].mxu0
    %1802 = vmatprep.mubr.f32.mxu0 0.0
    %1803 = vmatmul.mubr.f32.gmra.mrb[0].mxu0 %v699
    %v1804 = vpop.f32.mrb[0].mxu0
    %v1805 = vadd.f32 %v293, %v1804
    %v1806 = vpop.f32.mrb[0].mxu0
    %1807 = vmatprep.mubr.f32.mxu0 0.0
    %1808 = vmatmul.mubr.f32.gmra.mrb[0].mxu0 %v702
    %v1809 = vpop.f32.mrb[0].mxu0
    %v1810 = vadd.f32 %v293, %v1809
    %v1811 = vpop.f32.mrb[0].mxu0
    %1812 = vmatprep.mubr.f32.mxu0 0.0
    %1813 = vmatmul.mubr.f32.gmra.mrb[0].mxu0 %v705
    %v1814 = vpop.f32.mrb[0].mxu0
    %v1815 = vadd.f32 %v293, %v1814
    %v1816 = vpop.f32.mrb[0].mxu0
    %1817 = vmatprep.mubr.f32.mxu0 0.0
    %1818 = vmatmul.mubr.f32.gmra.mrb[0].mxu0 %v708
    %v1819 = vpop.f32.mrb[0].mxu0
    %v1820 = vadd.f32 %v293, %v1819
    %v1821 = vpop.f32.mrb[0].mxu0
    %1822 = vmatprep.mubr.f32.mxu0 0.0
    %1823 = vmatmul.mubr.f32.gmra.mrb[0].mxu0 %v711
    %v1824 = vpop.f32.mrb[0].mxu0
    %v1825 = vadd.f32 %v293, %v1824
    %v1826 = vpop.f32.mrb[0].mxu0
    %1827 = vmatprep.mubr.f32.mxu0 0.0
    %1828 = vmatmul.mubr.f32.gmra.mrb[0].mxu0 %v714
    %v1829 = vpop.f32.mrb[0].mxu0
    %v1830 = vadd.f32 %v293, %v1829
    %v1831 = vpop.f32.mrb[0].mxu0
    %1832 = vmatprep.mubr.f32.mxu0 0.0
    %1833 = vmatmul.mubr.f32.gmra.mrb[0].mxu0 %v717
    %v1834 = vpop.f32.mrb[0].mxu0
    %v1835 = vadd.f32 %v293, %v1834
    %v1836 = vpop.f32.mrb[0].mxu0
    %1837 = vmatprep.mubr.f32.mxu0 0.0
    %1838 = vmatmul.mubr.f32.gmra.mrb[0].mxu0 %v720
    %v1839 = vpop.f32.mrb[0].mxu0
    %v1840 = vadd.f32 %v293, %v1839
    %v1841 = vpop.f32.mrb[0].mxu0
    %1842 = vmatprep.mubr.f32.mxu0 0.0
    %1843 = vmatmul.mubr.f32.gmra.mrb[0].mxu0 %v723
    %v1844 = vpop.f32.mrb[0].mxu0
    %v1845 = vadd.f32 %v293, %v1844
    %v1846 = vpop.f32.mrb[0].mxu0
    %1847 = vmatprep.mubr.f32.mxu0 0.0
    %1848 = vmatmul.mubr.f32.gmra.mrb[0].mxu0 %v726
    %v1849 = vpop.f32.mrb[0].mxu0
    %v1850 = vadd.f32 %v293, %v1849
    %v1851 = vpop.f32.mrb[0].mxu0
    %1852 = vmatprep.mubr.f32.mxu0 0.0
    %1853 = vmatmul.mubr.f32.gmra.mrb[0].mxu0 %v729
    %v1854 = vpop.f32.mrb[0].mxu0
    %v1855 = vadd.f32 %v293, %v1854
    %v1856 = vpop.f32.mrb[0].mxu0
    %1857 = vmatprep.mubr.f32.mxu0 0.0
    %1858 = vmatmul.mubr.f32.gmra.mrb[0].mxu0 %v732
    %v1859 = vpop.f32.mrb[0].mxu0
    %v1860 = vadd.f32 %v293, %v1859
    %v1861 = vpop.f32.mrb[0].mxu0
    %1862 = vmatprep.mubr.f32.mxu0 0.0
    %1863 = vmatmul.mubr.f32.gmra.mrb[0].mxu0 %v735
    %v1864 = vpop.f32.mrb[0].mxu0
    %v1865 = vadd.f32 %v293, %v1864
    %v1866 = vpop.f32.mrb[0].mxu0
    %1867 = vmatprep.mubr.f32.mxu0 0.0
    %1868 = vmatmul.mubr.f32.gmra.mrb[0].mxu0 %v738
    %v1869 = vpop.f32.mrb[0].mxu0
    %v1870 = vadd.f32 %v293, %v1869
    %v1871 = vpop.f32.mrb[0].mxu0
    %1872 = vmatprep.mubr.f32.mxu0 0.0
    %1873 = vmatmul.mubr.f32.gmra.mrb[0].mxu0 %v741
    %v1874 = vpop.f32.mrb[0].mxu0
    %v1875 = vadd.f32 %v293, %v1874
    %v1876 = vpop.f32.mrb[0].mxu0
    %1877 = vmatprep.mubr.f32.mxu0 0.0
    %1878 = vmatmul.mubr.f32.gmra.mrb[0].mxu0 %v744
    %v1879 = vpop.f32.mrb[0].mxu0
    %v1880 = vadd.f32 %v293, %v1879
    %v1881 = vpop.f32.mrb[0].mxu0
    %1882 = vmatprep.mubr.f32.mxu0 0.0
    %1883 = vmatmul.mubr.f32.gmra.mrb[0].mxu0 %v747
    %v1884 = vpop.f32.mrb[0].mxu0
    %v1885 = vadd.f32 %v293, %v1884
    %v1886 = vpop.f32.mrb[0].mxu0
    %1887 = vmatprep.mubr.f32.mxu0 0.0
    %1888 = vmatmul.mubr.f32.gmra.mrb[0].mxu0 %v750
    %v1889 = vpop.f32.mrb[0].mxu0
    %v1890 = vadd.f32 %v293, %v1889
    %v1891 = vpop.f32.mrb[0].mxu0
    %1892 = vmatprep.mubr.f32.mxu0 0.0
    %1893 = vmatmul.mubr.f32.gmra.mrb[0].mxu0 %v753
    %v1894 = vpop.f32.mrb[0].mxu0
    %v1895 = vadd.f32 %v293, %v1894
    %v1896 = vpop.f32.mrb[0].mxu0
    %1897 = vmatprep.mubr.f32.mxu0 0.0
    %1898 = vmatmul.mubr.f32.gmra.mrb[0].mxu0 %v756
    %v1899 = vpop.f32.mrb[0].mxu0
    %v1900 = vadd.f32 %v293, %v1899
    %v1901 = vpop.f32.mrb[0].mxu0
    %1902 = vmatprep.mubr.f32.mxu0 0.0
    %1903 = vmatmul.mubr.f32.gmra.mrb[0].mxu0 %v759
    %v1904 = vpop.f32.mrb[0].mxu0
    %v1905 = vadd.f32 %v293, %v1904
    %v1906 = vpop.f32.mrb[0].mxu0
    %1907 = vmatprep.mubr.f32.mxu0 0.0
    %1908 = vmatmul.mubr.f32.gmra.mrb[0].mxu0 %v762
    %v1909 = vpop.f32.mrb[0].mxu0
    %v1910 = vadd.f32 %v293, %v1909
    %v1911 = vpop.f32.mrb[0].mxu0
    %1912 = vmatprep.mubr.f32.mxu0 0.0
    %1913 = vmatmul.mubr.f32.gmra.mrb[0].mxu0 %v765
    %v1914 = vpop.f32.mrb[0].mxu0
    %v1915 = vadd.f32 %v293, %v1914
    %v1916 = vpop.f32.mrb[0].mxu0
    %1917 = vmatprep.mubr.f32.mxu0 0.0
    %1918 = vmatmul.mubr.f32.gmra.mrb[0].mxu0 %v768
    %v1919 = vpop.f32.mrb[0].mxu0
    %v1920 = vadd.f32 %v293, %v1919
    %v1921 = vpop.f32.mrb[0].mxu0
    %1922 = vmatprep.mubr.f32.mxu0 0.0
    %1923 = vmatmul.mubr.f32.gmra.mrb[0].mxu0 %v771
    %v1924 = vpop.f32.mrb[0].mxu0
    %v1925 = vadd.f32 %v293, %v1924
    %v1926 = vpop.f32.mrb[0].mxu0
    %1927 = vmatprep.mubr.f32.mxu0 0.0
    %1928 = vmatmul.mubr.f32.gmra.mrb[0].mxu0 %v774
    %v1929 = vpop.f32.mrb[0].mxu0
    %v1930 = vadd.f32 %v293, %v1929
    %v1931 = vpop.f32.mrb[0].mxu0
    %1932 = vmatprep.mubr.f32.mxu0 0.0
    %1933 = vmatmul.mubr.f32.gmra.mrb[0].mxu0 %v777
    %v1934 = vpop.f32.mrb[0].mxu0
    %v1935 = vadd.f32 %v293, %v1934
    %v1936 = vpop.f32.mrb[0].mxu0
    %1937 = vmatprep.mubr.f32.mxu0 0.0
    %1938 = vmatmul.mubr.f32.gmra.mrb[0].mxu0 %v780
    %v1939 = vpop.f32.mrb[0].mxu0
    %v1940 = vadd.f32 %v293, %v1939
    %v1941 = vpop.f32.mrb[0].mxu0
    %1942 = vmatprep.mubr.f32.mxu0 0.0
    %1943 = vmatmul.mubr.f32.gmra.mrb[0].mxu0 %v783
    %v1944 = vpop.f32.mrb[0].mxu0
    %v1945 = vadd.f32 %v293, %v1944
    %v1946 = vpop.f32.mrb[0].mxu0
    %1947 = vmatprep.mubr.f32.mxu0 0.0
    %1948 = vmatmul.mubr.f32.gmra.mrb[0].mxu0 %v786
    %v1949 = vpop.f32.mrb[0].mxu0
    %v1950 = vadd.f32 %v293, %v1949
    %v1951 = vpop.f32.mrb[0].mxu0
    %1952 = vmatprep.mubr.f32.mxu0 0.0
    %1953 = vmatmul.mubr.f32.gmra.mrb[0].mxu0 %v789
    %v1954 = vpop.f32.mrb[0].mxu0
    %v1955 = vadd.f32 %v293, %v1954
    %v1956 = vpop.f32.mrb[0].mxu0
    %1957 = vmatprep.mubr.f32.mxu0 0.0
    %1958 = vmatmul.mubr.f32.gmra.mrb[0].mxu0 %v792
    %v1959 = vpop.f32.mrb[0].mxu0
    %v1960 = vadd.f32 %v293, %v1959
    %v1961 = vpop.f32.mrb[0].mxu0
    %1962 = vmatprep.mubr.f32.mxu0 0.0
    %1963 = vmatmul.mubr.f32.gmra.mrb[0].mxu0 %v795
    %v1964 = vpop.f32.mrb[0].mxu0
    %v1965 = vadd.f32 %v293, %v1964
    %v1966 = vpop.f32.mrb[0].mxu0
    %1967 = vmatprep.mubr.f32.mxu0 0.0
    %1968 = vmatmul.mubr.f32.gmra.mrb[0].mxu0 %v798
    %v1969 = vpop.f32.mrb[0].mxu0
    %v1970 = vadd.f32 %v293, %v1969
    %v1971 = vpop.f32.mrb[0].mxu0
    %1972 = vmatprep.mubr.f32.mxu0 0.0
    %1973 = vmatmul.mubr.f32.gmra.mrb[0].mxu0 %v801
    %v1974 = vpop.f32.mrb[0].mxu0
    %v1975 = vadd.f32 %v293, %v1974
    %v1976 = vpop.f32.mrb[0].mxu0
    %1977 = vmatprep.mubr.f32.mxu0 0.0
    %1978 = vmatmul.mubr.f32.gmra.mrb[0].mxu0 %v804
    %v1979 = vpop.f32.mrb[0].mxu0
    %v1980 = vadd.f32 %v293, %v1979
    %v1981 = vpop.f32.mrb[0].mxu0
    %1982 = vmatprep.mubr.f32.mxu0 0.0
    %1983 = vmatmul.mubr.f32.gmra.mrb[0].mxu0 %v807
    %v1984 = vpop.f32.mrb[0].mxu0
    %v1985 = vadd.f32 %v293, %v1984
    %v1986 = vpop.f32.mrb[0].mxu0
    %1987 = vmatprep.mubr.f32.mxu0 0.0
    %1988 = vmatmul.mubr.f32.gmra.mrb[0].mxu0 %v810
    %v1989 = vpop.f32.mrb[0].mxu0
    %v1990 = vadd.f32 %v293, %v1989
    %v1991 = vpop.f32.mrb[0].mxu0
    %1992 = vmatprep.mubr.f32.mxu0 0.0
    %1993 = vmatmul.mubr.f32.gmra.mrb[0].mxu0 %v813
    %v1994 = vpop.f32.mrb[0].mxu0
    %v1995 = vadd.f32 %v293, %v1994
    %v1996 = vpop.f32.mrb[0].mxu0
    %1997 = vmatprep.mubr.f32.mxu0 0.0
    %1998 = vmatmul.mubr.f32.gmra.mrb[0].mxu0 %v816
    %v1999 = vpop.f32.mrb[0].mxu0
    %v2000 = vadd.f32 %v293, %v1999
    %v2001 = vpop.f32.mrb[0].mxu0
    %2002 = vmatprep.mubr.f32.mxu0 0.0
    %2003 = vmatmul.mubr.f32.gmra.mrb[0].mxu0 %v819
    %v2004 = vpop.f32.mrb[0].mxu0
    %v2005 = vadd.f32 %v293, %v2004
    %v2006 = vpop.f32.mrb[0].mxu0
    %2007 = vmatprep.mubr.f32.mxu0 0.0
    %2008 = vmatmul.mubr.f32.gmra.mrb[0].mxu0 %v822
    %v2009 = vpop.f32.mrb[0].mxu0
    %v2010 = vadd.f32 %v293, %v2009
    %v2011 = vpop.f32.mrb[0].mxu0
    %2012 = vmatprep.mubr.f32.mxu0 0.0
    %2013 = vmatmul.mubr.f32.gmra.mrb[0].mxu0 %v825
    %v2014 = vpop.f32.mrb[0].mxu0
    %v2015 = vadd.f32 %v293, %v2014
    %v2016 = vpop.f32.mrb[0].mxu0
    %2017 = vmatprep.mubr.f32.mxu0 0.0
    %2018 = vmatmul.mubr.f32.gmra.mrb[0].mxu0 %v828
    %v2019 = vpop.f32.mrb[0].mxu0
    %v2020 = vadd.f32 %v293, %v2019
    %v2021 = vpop.f32.mrb[0].mxu0
    %2022 = vmatprep.mubr.f32.mxu0 0.0
    %2023 = vmatmul.mubr.f32.gmra.mrb[0].mxu0 %v831
    %v2024 = vpop.f32.mrb[0].mxu0
    %v2025 = vadd.f32 %v293, %v2024
    %v2026 = vpop.f32.mrb[0].mxu0
    %2027 = vmatprep.mubr.f32.mxu0 0.0
    %2028 = vmatmul.mubr.f32.gmra.mrb[0].mxu0 %v834
    %v2029 = vpop.f32.mrb[0].mxu0
    %v2030 = vadd.f32 %v293, %v2029
    %v2031 = vpop.f32.mrb[0].mxu0
    %2032 = vmatprep.mubr.f32.mxu0 0.0
    %2033 = vmatmul.mubr.f32.gmra.mrb[0].mxu0 %v837
    %v2034 = vpop.f32.mrb[0].mxu0
    %v2035 = vadd.f32 %v293, %v2034
    %v2036 = vpop.f32.mrb[0].mxu0
    %2037 = vmatprep.mubr.f32.mxu0 0.0
    %2038 = vmatmul.mubr.f32.gmra.mrb[0].mxu0 %v840
    %v2039 = vpop.f32.mrb[0].mxu0
    %v2040 = vadd.f32 %v293, %v2039
    %v2041 = vpop.f32.mrb[0].mxu0
    %2042 = vmatprep.mubr.f32.mxu0 0.0
    %2043 = vmatmul.mubr.f32.gmra.mrb[0].mxu0 %v843
    %v2044 = vpop.f32.mrb[0].mxu0
    %v2045 = vadd.f32 %v293, %v2044
    %v2046 = vpop.f32.mrb[0].mxu0
    %2047 = vmatprep.mubr.f32.mxu0 0.0
    %2048 = vmatmul.mubr.f32.gmra.mrb[0].mxu0 %v846
    %v2049 = vpop.f32.mrb[0].mxu0
    %v2050 = vadd.f32 %v293, %v2049
    %v2051 = vpop.f32.mrb[0].mxu0
    %2052 = vmatprep.mubr.f32.mxu0 0.0
    %2053 = vmatmul.mubr.f32.gmra.mrb[0].mxu0 %v849
    %v2054 = vpop.f32.mrb[0].mxu0
    %v2055 = vadd.f32 %v293, %v2054
    %v2056 = vpop.f32.mrb[0].mxu0
    %2057 = vmatprep.mubr.f32.mxu0 0.0
    %2058 = vmatmul.mubr.f32.gmra.mrb[0].mxu0 %v852
    %v2059 = vpop.f32.mrb[0].mxu0
    %v2060 = vadd.f32 %v293, %v2059
    %v2061 = vpop.f32.mrb[0].mxu0
    %2062 = vmatprep.mubr.f32.mxu0 0.0
    %2063 = vmatmul.mubr.f32.gmra.mrb[0].mxu0 %v855
    %v2064 = vpop.f32.mrb[0].mxu0
    %v2065 = vadd.f32 %v293, %v2064
    %v2066 = vpop.f32.mrb[0].mxu0
    %2067 = vmatprep.mubr.f32.mxu0 0.0
    %2068 = vmatmul.mubr.f32.gmra.mrb[0].mxu0 %v858
    %v2069 = vpop.f32.mrb[0].mxu0
    %v2070 = vadd.f32 %v293, %v2069
    %v2071 = vpop.f32.mrb[0].mxu0
    %2072 = vmatprep.mubr.f32.mxu0 0.0
    %2073 = vmatmul.mubr.f32.gmra.mrb[0].mxu0 %v861
    %v2074 = vpop.f32.mrb[0].mxu0
    %v2075 = vadd.f32 %v293, %v2074
    %v2076 = vpop.f32.mrb[0].mxu0
    %2077 = vmatprep.mubr.f32.mxu0 0.0
    %2078 = vmatmul.mubr.f32.gmra.mrb[0].mxu0 %v864
    %v2079 = vpop.f32.mrb[0].mxu0
    %v2080 = vadd.f32 %v293, %v2079
    %v2081 = vpop.f32.mrb[0].mxu0
    %2082 = vmatprep.mubr.f32.mxu0 0.0
    %2083 = vmatmul.mubr.f32.gmra.mrb[0].mxu0 %v867
    %v2084 = vpop.f32.mrb[0].mxu0
    %v2085 = vadd.f32 %v293, %v2084
    %v2086 = vpop.f32.mrb[0].mxu0
    %2087 = vmatprep.mubr.f32.mxu0 0.0
    %2088 = vmatmul.mubr.f32.gmra.mrb[0].mxu0 %v870
    %v2089 = vpop.f32.mrb[0].mxu0
    %v2090 = vadd.f32 %v293, %v2089
    %v2091 = vpop.f32.mrb[0].mxu0
    %2092 = vmatprep.mubr.f32.mxu0 0.0
    %2093 = vmatmul.mubr.f32.gmra.mrb[0].mxu0 %v873
    %v2094 = vpop.f32.mrb[0].mxu0
    %v2095 = vadd.f32 %v293, %v2094
    %v2096 = vpop.f32.mrb[0].mxu0
    %2097 = vmatprep.mubr.f32.mxu0 0.0
    %2098 = vmatmul.mubr.f32.gmra.mrb[0].mxu0 %v876
    %v2099 = vpop.f32.mrb[0].mxu0
    %v2100 = vadd.f32 %v293, %v2099
    %v2101 = vpop.f32.mrb[0].mxu0
    %2102 = vmatprep.mubr.f32.mxu0 0.0
    %2103 = vmatmul.mubr.f32.gmra.mrb[0].mxu0 %v879
    %v2104 = vpop.f32.mrb[0].mxu0
    %v2105 = vadd.f32 %v293, %v2104
    %v2106 = vpop.f32.mrb[0].mxu0
    %2107 = vmatprep.mubr.f32.mxu0 0.0
    %2108 = vmatmul.mubr.f32.gmra.mrb[0].mxu0 %v882
    %v2109 = vpop.f32.mrb[0].mxu0
    %v2110 = vadd.f32 %v293, %v2109
    %v2111 = vpop.f32.mrb[0].mxu0
    %2112 = vmatprep.mubr.f32.mxu0 0.0
    %2113 = vmatmul.mubr.f32.gmra.mrb[0].mxu0 %v885
    %v2114 = vpop.f32.mrb[0].mxu0
    %v2115 = vadd.f32 %v293, %v2114
    %v2116 = vpop.f32.mrb[0].mxu0
    %2117 = vmatprep.mubr.f32.mxu0 0.0
    %2118 = vmatmul.mubr.f32.gmra.mrb[0].mxu0 %v888
    %v2119 = vpop.f32.mrb[0].mxu0
    %v2120 = vadd.f32 %v293, %v2119
    %v2121 = vpop.f32.mrb[0].mxu0
    %2122 = vmatprep.mubr.f32.mxu0 0.0
    %2123 = vmatmul.mubr.f32.gmra.mrb[0].mxu0 %v891
    %v2124 = vpop.f32.mrb[0].mxu0
    %v2125 = vadd.f32 %v293, %v2124
    %v2126 = vpop.f32.mrb[0].mxu0
    %2127 = vmatprep.mubr.f32.mxu0 0.0
    %2128 = vmatmul.mubr.f32.gmra.mrb[0].mxu0 %v894
    %v2129 = vpop.f32.mrb[0].mxu0
    %v2130 = vadd.f32 %v293, %v2129
    %v2131 = vpop.f32.mrb[0].mxu0
    %2132 = vmatprep.mubr.f32.mxu0 0.0
    %2133 = vmatmul.mubr.f32.gmra.mrb[0].mxu0 %v897
    %v2134 = vpop.f32.mrb[0].mxu0
    %v2135 = vadd.f32 %v293, %v2134
    %v2136 = vpop.f32.mrb[0].mxu0
    %2137 = vmatprep.mubr.f32.mxu0 0.0
    %2138 = vmatmul.mubr.f32.gmra.mrb[0].mxu0 %v900
    %v2139 = vpop.f32.mrb[0].mxu0
    %v2140 = vadd.f32 %v293, %v2139
    %v2141 = vpop.f32.mrb[0].mxu0
    %2142 = vmatprep.mubr.f32.mxu0 0.0
    %2143 = vmatmul.mubr.f32.gmra.mrb[0].mxu0 %v903
    %v2144 = vpop.f32.mrb[0].mxu0
    %v2145 = vadd.f32 %v293, %v2144
    %v2146 = vpop.f32.mrb[0].mxu0
    %2147 = vmatprep.mubr.f32.mxu0 0.0
    %2148 = vmatmul.mubr.f32.gmra.mrb[0].mxu0 %v906
    %v2149 = vpop.f32.mrb[0].mxu0
    %v2150 = vadd.f32 %v293, %v2149
    %v2151 = vpop.f32.mrb[0].mxu0
    %2152 = vmatprep.mubr.f32.mxu0 0.0
    %2153 = vmatmul.mubr.f32.gmra.mrb[0].mxu0 %v909
    %v2154 = vpop.f32.mrb[0].mxu0
    %v2155 = vadd.f32 %v293, %v2154
    %v2156 = vpop.f32.mrb[0].mxu0
    %2157 = vmatprep.mubr.f32.mxu0 0.0
    %2158 = vmatmul.mubr.f32.gmra.mrb[0].mxu0 %v912
    %v2159 = vpop.f32.mrb[0].mxu0
    %v2160 = vadd.f32 %v293, %v2159
    %v2161 = vpop.f32.mrb[0].mxu0
    %2162 = vmatprep.mubr.f32.mxu0 0.0
    %2163 = vmatmul.mubr.f32.gmra.mrb[0].mxu0 %v915
    %v2164 = vpop.f32.mrb[0].mxu0
    %v2165 = vadd.f32 %v293, %v2164
    %v2166 = vpop.f32.mrb[0].mxu0
    %2167 = vmatprep.mubr.f32.mxu0 0.0
    %2168 = vmatmul.mubr.f32.gmra.mrb[0].mxu0 %v918
    %v2169 = vpop.f32.mrb[0].mxu0
    %v2170 = vadd.f32 %v293, %v2169
    %v2171 = vpop.f32.mrb[0].mxu0
    %2172 = vmatprep.mubr.f32.mxu0 0.0
    %2173 = vmatmul.mubr.f32.gmra.mrb[0].mxu0 %v921
    %v2174 = vpop.f32.mrb[0].mxu0
    %v2175 = vadd.f32 %v293, %v2174
    %v2176 = vpop.f32.mrb[0].mxu0
    %2177 = vmatprep.mubr.f32.mxu0 0.0
    %2178 = vmatmul.mubr.f32.gmra.mrb[0].mxu0 %v924
    %v2179 = vpop.f32.mrb[0].mxu0
    %v2180 = vadd.f32 %v293, %v2179
    %v2181 = vpop.f32.mrb[0].mxu0
    %2182 = vmatprep.mubr.f32.mxu0 0.0
    %2183 = vmatmul.mubr.f32.gmra.mrb[0].mxu0 %v927
    %v2184 = vpop.f32.mrb[0].mxu0
    %v2185 = vadd.f32 %v293, %v2184
    %v2186 = vpop.f32.mrb[0].mxu0
    %2187 = vmatprep.mubr.f32.mxu0 0.0
    %2188 = vmatmul.mubr.f32.gmra.mrb[0].mxu0 %v930
    %v2189 = vpop.f32.mrb[0].mxu0
    %v2190 = vadd.f32 %v293, %v2189
    %v2191 = vpop.f32.mrb[0].mxu0
    %2192 = vmatprep.mubr.f32.mxu0 0.0
    %2193 = vmatmul.mubr.f32.gmra.mrb[0].mxu0 %v933
    %v2194 = vpop.f32.mrb[0].mxu0
    %v2195 = vadd.f32 %v293, %v2194
    %v2196 = vpop.f32.mrb[0].mxu0
    %2197 = vmatprep.mubr.f32.mxu0 0.0
    %2198 = vmatmul.mubr.f32.gmra.mrb[0].mxu0 %v936
    %v2199 = vpop.f32.mrb[0].mxu0
    %v2200 = vadd.f32 %v293, %v2199
    %v2201 = vpop.f32.mrb[0].mxu0
    %2202 = vmatprep.mubr.f32.mxu0 0.0
    %2203 = vmatmul.mubr.f32.gmra.mrb[0].mxu0 %v939
    %v2204 = vpop.f32.mrb[0].mxu0
    %v2205 = vadd.f32 %v293, %v2204
    %v2206 = vpop.f32.mrb[0].mxu0
    %2207 = vmatprep.mubr.f32.mxu0 0.0
    %2208 = vmatmul.mubr.f32.gmra.mrb[0].mxu0 %v942
    %v2209 = vpop.f32.mrb[0].mxu0
    %v2210 = vadd.f32 %v293, %v2209
    %v2211 = vpop.f32.mrb[0].mxu0
    %2212 = vmatprep.mubr.f32.mxu0 0.0
    %2213 = vmatmul.mubr.f32.gmra.mrb[0].mxu0 %v945
    %v2214 = vpop.f32.mrb[0].mxu0
    %v2215 = vadd.f32 %v293, %v2214
    %v2216 = vpop.f32.mrb[0].mxu0
    %2217 = vmatprep.mubr.f32.mxu0 0.0
    %2218 = vmatmul.mubr.f32.gmra.mrb[0].mxu0 %v948
    %v2219 = vpop.f32.mrb[0].mxu0
    %v2220 = vadd.f32 %v293, %v2219
    %v2221 = vpop.f32.mrb[0].mxu0
    %2222 = vmatprep.mubr.f32.mxu0 0.0
    %2223 = vmatmul.mubr.f32.gmra.mrb[0].mxu0 %v951
    %v2224 = vpop.f32.mrb[0].mxu0
    %v2225 = vadd.f32 %v293, %v2224
    %v2226 = vpop.f32.mrb[0].mxu0
    %2227 = vmatprep.mubr.f32.mxu0 0.0
    %2228 = vmatmul.mubr.f32.gmra.mrb[0].mxu0 %v954
    %v2229 = vpop.f32.mrb[0].mxu0
    %v2230 = vadd.f32 %v293, %v2229
    %v2231 = vpop.f32.mrb[0].mxu0
    %2232 = vmatprep.mubr.f32.mxu0 0.0
    %2233 = vmatmul.mubr.f32.gmra.mrb[0].mxu0 %v957
    %v2234 = vpop.f32.mrb[0].mxu0
    %v2235 = vadd.f32 %v293, %v2234
    %v2236 = vpop.f32.mrb[0].mxu0
    %2237 = vmatprep.mubr.f32.mxu0 0.0
    %2238 = vmatmul.mubr.f32.gmra.mrb[0].mxu0 %v960
    %v2239 = vpop.f32.mrb[0].mxu0
    %v2240 = vadd.f32 %v293, %v2239
    %v2241 = vpop.f32.mrb[0].mxu0
    %2242 = vmatprep.mubr.f32.mxu0 0.0
    %2243 = vmatmul.mubr.f32.gmra.mrb[0].mxu0 %v963
    %v2244 = vpop.f32.mrb[0].mxu0
    %v2245 = vadd.f32 %v293, %v2244
    %v2246 = vpop.f32.mrb[0].mxu0
    %2247 = vmatprep.mubr.f32.mxu0 0.0
    %2248 = vmatmul.mubr.f32.gmra.mrb[0].mxu0 %v966
    %v2249 = vpop.f32.mrb[0].mxu0
    %v2250 = vadd.f32 %v293, %v2249
    %v2251 = vpop.f32.mrb[0].mxu0
    %2252 = vmatprep.mubr.f32.mxu0 0.0
    %2253 = vmatmul.mubr.f32.gmra.mrb[0].mxu0 %v969
    %v2254 = vpop.f32.mrb[0].mxu0
    %v2255 = vadd.f32 %v293, %v2254
    %v2256 = vpop.f32.mrb[0].mxu0
    %2257 = vmatprep.mubr.f32.mxu0 0.0
    %2258 = vmatmul.mubr.f32.gmra.mrb[0].mxu0 %v972
    %v2259 = vpop.f32.mrb[0].mxu0
    %v2260 = vadd.f32 %v293, %v2259
    %v2261 = vpop.f32.mrb[0].mxu0
    %2262 = vmatprep.mubr.f32.mxu0 0.0
    %2263 = vmatmul.mubr.f32.gmra.mrb[0].mxu0 %v975
    %v2264 = vpop.f32.mrb[0].mxu0
    %v2265 = vadd.f32 %v293, %v2264
    %v2266 = vpop.f32.mrb[0].mxu0
    %2267 = vmatprep.mubr.f32.mxu0 0.0
    %2268 = vmatmul.mubr.f32.gmra.mrb[0].mxu0 %v978
    %v2269 = vpop.f32.mrb[0].mxu0
    %v2270 = vadd.f32 %v293, %v2269
    %v2271 = vpop.f32.mrb[0].mxu0
    %2272 = vmatprep.mubr.f32.mxu0 0.0
    %2273 = vmatmul.mubr.f32.gmra.mrb[0].mxu0 %v981
    %v2274 = vpop.f32.mrb[0].mxu0
    %v2275 = vadd.f32 %v293, %v2274
    %v2276 = vpop.f32.mrb[0].mxu0
    %2277 = vmatprep.mubr.f32.mxu0 0.0
    %2278 = vmatmul.mubr.f32.gmra.mrb[0].mxu0 %v984
    %v2279 = vpop.f32.mrb[0].mxu0
    %v2280 = vadd.f32 %v293, %v2279
    %v2281 = vpop.f32.mrb[0].mxu0
    %2282 = vmatprep.mubr.f32.mxu0 0.0
    %2283 = vmatmul.mubr.f32.gmra.mrb[0].mxu0 %v987
    %v2284 = vpop.f32.mrb[0].mxu0
    %v2285 = vadd.f32 %v293, %v2284
    %v2286 = vpop.f32.mrb[0].mxu0
    %2287 = vmatprep.mubr.f32.mxu0 0.0
    %2288 = vmatmul.mubr.f32.gmra.mrb[0].mxu0 %v990
    %v2289 = vpop.f32.mrb[0].mxu0
    %v2290 = vadd.f32 %v293, %v2289
    %v2291 = vpop.f32.mrb[0].mxu0
    %2292 = vmatprep.mubr.f32.mxu0 0.0
    %2293 = vmatmul.mubr.f32.gmra.mrb[0].mxu0 %v993
    %v2294 = vpop.f32.mrb[0].mxu0
    %v2295 = vadd.f32 %v293, %v2294
    %v2296 = vpop.f32.mrb[0].mxu0
    %2297 = vmatprep.mubr.f32.mxu0 0.0
    %2298 = vmatmul.mubr.f32.gmra.mrb[0].mxu0 %v996
    %v2299 = vpop.f32.mrb[0].mxu0
    %v2300 = vadd.f32 %v293, %v2299
    %v2301 = vpop.f32.mrb[0].mxu0
    %2302 = vmatprep.mubr.f32.mxu0 0.0
    %2303 = vmatmul.mubr.f32.gmra.mrb[0].mxu0 %v999
    %v2304 = vpop.f32.mrb[0].mxu0
    %v2305 = vadd.f32 %v293, %v2304
    %v2306 = vpop.f32.mrb[0].mxu0
    %2307 = vmatprep.mubr.f32.mxu0 0.0
    %2308 = vmatmul.mubr.f32.gmra.mrb[0].mxu0 %v1002
    %v2309 = vpop.f32.mrb[0].mxu0
    %v2310 = vadd.f32 %v293, %v2309
    %v2311 = vpop.f32.mrb[0].mxu0
    %2312 = vmatprep.mubr.f32.mxu0 0.0
    %2313 = vmatmul.mubr.f32.gmra.mrb[0].mxu0 %v1005
    %v2314 = vpop.f32.mrb[0].mxu0
    %v2315 = vadd.f32 %v293, %v2314
    %v2316 = vpop.f32.mrb[0].mxu0
    %2317 = vmatprep.mubr.f32.mxu0 0.0
    %2318 = vmatmul.mubr.f32.gmra.mrb[0].mxu0 %v1008
    %v2319 = vpop.f32.mrb[0].mxu0
    %v2320 = vadd.f32 %v293, %v2319
    %v2321 = vpop.f32.mrb[0].mxu0
    %2322 = vmatprep.mubr.f32.mxu0 0.0
    %2323 = vmatmul.mubr.f32.gmra.mrb[0].mxu0 %v1011
    %v2324 = vpop.f32.mrb[0].mxu0
    %v2325 = vadd.f32 %v293, %v2324
    %v2326 = vpop.f32.mrb[0].mxu0
    %2327 = vmatprep.mubr.f32.mxu0 0.0
    %2328 = vmatmul.mubr.f32.gmra.mrb[0].mxu0 %v1014
    %v2329 = vpop.f32.mrb[0].mxu0
    %v2330 = vadd.f32 %v293, %v2329
    %v2331 = vpop.f32.mrb[0].mxu0
    %2332 = vmatprep.mubr.f32.mxu0 0.0
    %2333 = vmatmul.mubr.f32.gmra.mrb[0].mxu0 %v1017
    %v2334 = vpop.f32.mrb[0].mxu0
    %v2335 = vadd.f32 %v293, %v2334
    %v2336 = vpop.f32.mrb[0].mxu0
    %2337 = vmatprep.mubr.f32.mxu0 0.0
    %2338 = vmatmul.mubr.f32.gmra.mrb[0].mxu0 %v1020
    %v2339 = vpop.f32.mrb[0].mxu0
    %v2340 = vadd.f32 %v293, %v2339
    %v2341 = vpop.f32.mrb[0].mxu0
    %2342 = vmatprep.mubr.f32.mxu0 0.0
    %2343 = vmatmul.mubr.f32.gmra.mrb[0].mxu0 %v1023
    %v2344 = vpop.f32.mrb[0].mxu0
    %v2345 = vadd.f32 %v293, %v2344
    %v2346 = vpop.f32.mrb[0].mxu0
    %2347 = vmatprep.mubr.f32.mxu0 0.0
    %2348 = vmatmul.mubr.f32.gmra.mrb[0].mxu0 %v1026
    %v2349 = vpop.f32.mrb[0].mxu0
    %v2350 = vadd.f32 %v293, %v2349
    %v2351 = vpop.f32.mrb[0].mxu0
    %2352 = vmatprep.mubr.f32.mxu0 0.0
    %2353 = vmatmul.mubr.f32.gmra.mrb[0].mxu0 %v1029
    %v2354 = vpop.f32.mrb[0].mxu0
    %v2355 = vadd.f32 %v293, %v2354
    %v2356 = vpop.f32.mrb[0].mxu0
    %2357 = vmatprep.mubr.f32.mxu0 0.0
    %2358 = vmatmul.mubr.f32.gmra.mrb[0].mxu0 %v1032
    %v2359 = vpop.f32.mrb[0].mxu0
    %v2360 = vadd.f32 %v293, %v2359
    %v2361 = vpop.f32.mrb[0].mxu0
    %2362 = vmatprep.mubr.f32.mxu0 0.0
    %2363 = vmatmul.mubr.f32.gmra.mrb[0].mxu0 %v1035
    %v2364 = vpop.f32.mrb[0].mxu0
    %v2365 = vadd.f32 %v293, %v2364
    %v2366 = vpop.f32.mrb[0].mxu0
    %2367 = vmatprep.mubr.f32.mxu0 0.0
    %2368 = vmatmul.mubr.f32.gmra.mrb[0].mxu0 %v1038
    %v2369 = vpop.f32.mrb[0].mxu0
    %v2370 = vadd.f32 %v293, %v2369
    %v2371 = vpop.f32.mrb[0].mxu0
    %2372 = vmatprep.mubr.f32.mxu0 0.0
    %2373 = vmatmul.mubr.f32.gmra.mrb[0].mxu0 %v1041
    %v2374 = vpop.f32.mrb[0].mxu0
    %v2375 = vadd.f32 %v293, %v2374
    %v2376 = vpop.f32.mrb[0].mxu0
    %2377 = vmatprep.mubr.f32.mxu0 0.0
    %2378 = vmatmul.mubr.f32.gmra.mrb[0].mxu0 %v1044
    %v2379 = vpop.f32.mrb[0].mxu0
    %v2380 = vadd.f32 %v293, %v2379
    %v2381 = vpop.f32.mrb[0].mxu0
    %2382 = vmatprep.mubr.f32.mxu0 0.0
    %2383 = vmatmul.mubr.f32.gmra.mrb[0].mxu0 %v1047
    %v2384 = vpop.f32.mrb[0].mxu0
    %v2385 = vadd.f32 %v293, %v2384
    %v2386 = vpop.f32.mrb[0].mxu0
    %2387 = vmatprep.mubr.f32.mxu0 0.0
    %2388 = vmatmul.mubr.f32.gmra.mrb[0].mxu0 %v1050
    %v2389 = vpop.f32.mrb[0].mxu0
    %v2390 = vadd.f32 %v293, %v2389
    %v2391 = vpop.f32.mrb[0].mxu0
    %2392 = vmatprep.mubr.f32.mxu0 0.0
    %2393 = vmatmul.mubr.f32.gmra.mrb[0].mxu0 %v1053
    %v2394 = vpop.f32.mrb[0].mxu0
    %v2395 = vadd.f32 %v293, %v2394
    %v2396 = vpop.f32.mrb[0].mxu0
    %2397 = vmatprep.mubr.f32.mxu0 0.0
    %2398 = vmatmul.mubr.f32.gmra.mrb[0].mxu0 %v1056
    %v2399 = vpop.f32.mrb[0].mxu0
    %v2400 = vadd.f32 %v293, %v2399
    %v2401 = vpop.f32.mrb[0].mxu0
    %2402 = vmatprep.mubr.f32.mxu0 0.0
    %2403 = vmatmul.mubr.f32.gmra.mrb[0].mxu0 %v1059
    %v2404 = vpop.f32.mrb[0].mxu0
    %v2405 = vadd.f32 %v293, %v2404
    %v2406 = vpop.f32.mrb[0].mxu0
    %2407 = vmatprep.mubr.f32.mxu0 0.0
    %2408 = vmatmul.mubr.f32.gmra.mrb[0].mxu0 %v1062
    %v2409 = vpop.f32.mrb[0].mxu0
    %v2410 = vadd.f32 %v293, %v2409
    %v2411 = vpop.f32.mrb[0].mxu0
    %2412 = vdwg.mxu0
    %v2413 = vmax.f32 %v1135, 0.0
    %v2414 = vmax.f32 %v1140, 0.0
    %v2415 = vmax.f32 %v1145, 0.0
    %v2416 = vmax.f32 %v1150, 0.0
    %v2417 = vmax.f32 %v1155, 0.0
    %v2418 = vmax.f32 %v1160, 0.0
    %v2419 = vmax.f32 %v1165, 0.0
    %v2420 = vmax.f32 %v1170, 0.0
    %v2421 = vmax.f32 %v1175, 0.0
    %v2422 = vmax.f32 %v1180, 0.0
    %v2423 = vmax.f32 %v1185, 0.0
    %v2424 = vmax.f32 %v1190, 0.0
    %v2425 = vmax.f32 %v1195, 0.0
    %v2426 = vmax.f32 %v1200, 0.0
    %v2427 = vmax.f32 %v1205, 0.0
    %v2428 = vmax.f32 %v1210, 0.0
    %v2429 = vmax.f32 %v1215, 0.0
    %v2430 = vmax.f32 %v1220, 0.0
    %v2431 = vmax.f32 %v1225, 0.0
    %v2432 = vmax.f32 %v1230, 0.0
    %v2433 = vmax.f32 %v1235, 0.0
    %v2434 = vmax.f32 %v1240, 0.0
    %v2435 = vmax.f32 %v1245, 0.0
    %v2436 = vmax.f32 %v1250, 0.0
    %v2437 = vmax.f32 %v1255, 0.0
    %v2438 = vmax.f32 %v1260, 0.0
    %v2439 = vmax.f32 %v1265, 0.0
    %v2440 = vmax.f32 %v1270, 0.0
    %v2441 = vmax.f32 %v1275, 0.0
    %v2442 = vmax.f32 %v1280, 0.0
    %v2443 = vmax.f32 %v1285, 0.0
    %v2444 = vmax.f32 %v1290, 0.0
    %v2445 = vmax.f32 %v1295, 0.0
    %v2446 = vmax.f32 %v1300, 0.0
    %v2447 = vmax.f32 %v1305, 0.0
    %v2448 = vmax.f32 %v1310, 0.0
    %v2449 = vmax.f32 %v1315, 0.0
    %v2450 = vmax.f32 %v1320, 0.0
    %v2451 = vmax.f32 %v1325, 0.0
    %v2452 = vmax.f32 %v1330, 0.0
    %v2453 = vmax.f32 %v1335, 0.0
    %v2454 = vmax.f32 %v1340, 0.0
    %v2455 = vmax.f32 %v1345, 0.0
    %v2456 = vmax.f32 %v1350, 0.0
    %v2457 = vmax.f32 %v1355, 0.0
    %v2458 = vmax.f32 %v1360, 0.0
    %v2459 = vmax.f32 %v1365, 0.0
    %v2460 = vmax.f32 %v1370, 0.0
    %v2461 = vmax.f32 %v1375, 0.0
    %v2462 = vmax.f32 %v1380, 0.0
    %v2463 = vmax.f32 %v1385, 0.0
    %v2464 = vmax.f32 %v1390, 0.0
    %v2465 = vmax.f32 %v1395, 0.0
    %v2466 = vmax.f32 %v1400, 0.0
    %v2467 = vmax.f32 %v1405, 0.0
    %v2468 = vmax.f32 %v1410, 0.0
    %v2469 = vmax.f32 %v1415, 0.0
    %v2470 = vmax.f32 %v1420, 0.0
    %v2471 = vmax.f32 %v1425, 0.0
    %v2472 = vmax.f32 %v1430, 0.0
    %v2473 = vmax.f32 %v1435, 0.0
    %v2474 = vmax.f32 %v1440, 0.0
    %v2475 = vmax.f32 %v1445, 0.0
    %v2476 = vmax.f32 %v1450, 0.0
    %v2477 = vmax.f32 %v1455, 0.0
    %v2478 = vmax.f32 %v1460, 0.0
    %v2479 = vmax.f32 %v1465, 0.0
    %v2480 = vmax.f32 %v1470, 0.0
    %v2481 = vmax.f32 %v1475, 0.0
    %v2482 = vmax.f32 %v1480, 0.0
    %v2483 = vmax.f32 %v1485, 0.0
    %v2484 = vmax.f32 %v1490, 0.0
    %v2485 = vmax.f32 %v1495, 0.0
    %v2486 = vmax.f32 %v1500, 0.0
    %v2487 = vmax.f32 %v1505, 0.0
    %v2488 = vmax.f32 %v1510, 0.0
    %v2489 = vmax.f32 %v1515, 0.0
    %v2490 = vmax.f32 %v1520, 0.0
    %v2491 = vmax.f32 %v1525, 0.0
    %v2492 = vmax.f32 %v1530, 0.0
    %v2493 = vmax.f32 %v1535, 0.0
    %v2494 = vmax.f32 %v1540, 0.0
    %v2495 = vmax.f32 %v1545, 0.0
    %v2496 = vmax.f32 %v1550, 0.0
    %v2497 = vmax.f32 %v1555, 0.0
    %v2498 = vmax.f32 %v1560, 0.0
    %v2499 = vmax.f32 %v1565, 0.0
    %v2500 = vmax.f32 %v1570, 0.0
    %v2501 = vmax.f32 %v1575, 0.0
    %v2502 = vmax.f32 %v1580, 0.0
    %v2503 = vmax.f32 %v1585, 0.0
    %v2504 = vmax.f32 %v1590, 0.0
    %v2505 = vmax.f32 %v1595, 0.0
    %v2506 = vmax.f32 %v1600, 0.0
    %v2507 = vmax.f32 %v1605, 0.0
    %v2508 = vmax.f32 %v1610, 0.0
    %v2509 = vmax.f32 %v1615, 0.0
    %v2510 = vmax.f32 %v1620, 0.0
    %v2511 = vmax.f32 %v1625, 0.0
    %v2512 = vmax.f32 %v1630, 0.0
    %v2513 = vmax.f32 %v1635, 0.0
    %v2514 = vmax.f32 %v1640, 0.0
    %v2515 = vmax.f32 %v1645, 0.0
    %v2516 = vmax.f32 %v1650, 0.0
    %v2517 = vmax.f32 %v1655, 0.0
    %v2518 = vmax.f32 %v1660, 0.0
    %v2519 = vmax.f32 %v1665, 0.0
    %v2520 = vmax.f32 %v1670, 0.0
    %v2521 = vmax.f32 %v1675, 0.0
    %v2522 = vmax.f32 %v1680, 0.0
    %v2523 = vmax.f32 %v1685, 0.0
    %v2524 = vmax.f32 %v1690, 0.0
    %v2525 = vmax.f32 %v1695, 0.0
    %v2526 = vmax.f32 %v1700, 0.0
    %v2527 = vmax.f32 %v1705, 0.0
    %v2528 = vmax.f32 %v1710, 0.0
    %v2529 = vmax.f32 %v1715, 0.0
    %v2530 = vmax.f32 %v1720, 0.0
    %v2531 = vmax.f32 %v1725, 0.0
    %v2532 = vmax.f32 %v1730, 0.0
    %v2533 = vmax.f32 %v1735, 0.0
    %v2534 = vmax.f32 %v1740, 0.0
    %v2535 = vmax.f32 %v1745, 0.0
    %v2536 = vmax.f32 %v1750, 0.0
    %v2537 = vmax.f32 %v1755, 0.0
    %v2538 = vmax.f32 %v1760, 0.0
    %v2539 = vmax.f32 %v1765, 0.0
    %v2540 = vmax.f32 %v1770, 0.0
    %v2541 = vmax.f32 %v1775, 0.0
    %v2542 = vmax.f32 %v1780, 0.0
    %v2543 = vmax.f32 %v1785, 0.0
    %v2544 = vmax.f32 %v1790, 0.0
    %v2545 = vmax.f32 %v1795, 0.0
    %v2546 = vmax.f32 %v1800, 0.0
    %v2547 = vmax.f32 %v1805, 0.0
    %v2548 = vmax.f32 %v1810, 0.0
    %v2549 = vmax.f32 %v1815, 0.0
    %v2550 = vmax.f32 %v1820, 0.0
    %v2551 = vmax.f32 %v1825, 0.0
    %v2552 = vmax.f32 %v1830, 0.0
    %v2553 = vmax.f32 %v1835, 0.0
    %v2554 = vmax.f32 %v1840, 0.0
    %v2555 = vmax.f32 %v1845, 0.0
    %v2556 = vmax.f32 %v1850, 0.0
    %v2557 = vmax.f32 %v1855, 0.0
    %v2558 = vmax.f32 %v1860, 0.0
    %v2559 = vmax.f32 %v1865, 0.0
    %v2560 = vmax.f32 %v1870, 0.0
    %v2561 = vmax.f32 %v1875, 0.0
    %v2562 = vmax.f32 %v1880, 0.0
    %v2563 = vmax.f32 %v1885, 0.0
    %v2564 = vmax.f32 %v1890, 0.0
    %v2565 = vmax.f32 %v1895, 0.0
    %v2566 = vmax.f32 %v1900, 0.0
    %v2567 = vmax.f32 %v1905, 0.0
    %v2568 = vmax.f32 %v1910, 0.0
    %v2569 = vmax.f32 %v1915, 0.0
    %v2570 = vmax.f32 %v1920, 0.0
    %v2571 = vmax.f32 %v1925, 0.0
    %v2572 = vmax.f32 %v1930, 0.0
    %v2573 = vmax.f32 %v1935, 0.0
    %v2574 = vmax.f32 %v1940, 0.0
    %v2575 = vmax.f32 %v1945, 0.0
    %v2576 = vmax.f32 %v1950, 0.0
    %v2577 = vmax.f32 %v1955, 0.0
    %v2578 = vmax.f32 %v1960, 0.0
    %v2579 = vmax.f32 %v1965, 0.0
    %v2580 = vmax.f32 %v1970, 0.0
    %v2581 = vmax.f32 %v1975, 0.0
    %v2582 = vmax.f32 %v1980, 0.0
    %v2583 = vmax.f32 %v1985, 0.0
    %v2584 = vmax.f32 %v1990, 0.0
    %v2585 = vmax.f32 %v1995, 0.0
    %v2586 = vmax.f32 %v2000, 0.0
    %v2587 = vmax.f32 %v2005, 0.0
    %v2588 = vmax.f32 %v2010, 0.0
    %v2589 = vmax.f32 %v2015, 0.0
    %v2590 = vmax.f32 %v2020, 0.0
    %v2591 = vmax.f32 %v2025, 0.0
    %v2592 = vmax.f32 %v2030, 0.0
    %v2593 = vmax.f32 %v2035, 0.0
    %v2594 = vmax.f32 %v2040, 0.0
    %v2595 = vmax.f32 %v2045, 0.0
    %v2596 = vmax.f32 %v2050, 0.0
    %v2597 = vmax.f32 %v2055, 0.0
    %v2598 = vmax.f32 %v2060, 0.0
    %v2599 = vmax.f32 %v2065, 0.0
    %v2600 = vmax.f32 %v2070, 0.0
    %v2601 = vmax.f32 %v2075, 0.0
    %v2602 = vmax.f32 %v2080, 0.0
    %v2603 = vmax.f32 %v2085, 0.0
    %v2604 = vmax.f32 %v2090, 0.0
    %v2605 = vmax.f32 %v2095, 0.0
    %v2606 = vmax.f32 %v2100, 0.0
    %v2607 = vmax.f32 %v2105, 0.0
    %v2608 = vmax.f32 %v2110, 0.0
    %v2609 = vmax.f32 %v2115, 0.0
    %v2610 = vmax.f32 %v2120, 0.0
    %v2611 = vmax.f32 %v2125, 0.0
    %v2612 = vmax.f32 %v2130, 0.0
    %v2613 = vmax.f32 %v2135, 0.0
    %v2614 = vmax.f32 %v2140, 0.0
    %v2615 = vmax.f32 %v2145, 0.0
    %v2616 = vmax.f32 %v2150, 0.0
    %v2617 = vmax.f32 %v2155, 0.0
    %v2618 = vmax.f32 %v2160, 0.0
    %v2619 = vmax.f32 %v2165, 0.0
    %v2620 = vmax.f32 %v2170, 0.0
    %v2621 = vmax.f32 %v2175, 0.0
    %v2622 = vmax.f32 %v2180, 0.0
    %v2623 = vmax.f32 %v2185, 0.0
    %v2624 = vmax.f32 %v2190, 0.0
    %v2625 = vmax.f32 %v2195, 0.0
    %v2626 = vmax.f32 %v2200, 0.0
    %v2627 = vmax.f32 %v2205, 0.0
    %v2628 = vmax.f32 %v2210, 0.0
    %v2629 = vmax.f32 %v2215, 0.0
    %v2630 = vmax.f32 %v2220, 0.0
    %v2631 = vmax.f32 %v2225, 0.0
    %v2632 = vmax.f32 %v2230, 0.0
    %v2633 = vmax.f32 %v2235, 0.0
    %v2634 = vmax.f32 %v2240, 0.0
    %v2635 = vmax.f32 %v2245, 0.0
    %v2636 = vmax.f32 %v2250, 0.0
    %v2637 = vmax.f32 %v2255, 0.0
    %v2638 = vmax.f32 %v2260, 0.0
    %v2639 = vmax.f32 %v2265, 0.0
    %v2640 = vmax.f32 %v2270, 0.0
    %v2641 = vmax.f32 %v2275, 0.0
    %v2642 = vmax.f32 %v2280, 0.0
    %v2643 = vmax.f32 %v2285, 0.0
    %v2644 = vmax.f32 %v2290, 0.0
    %v2645 = vmax.f32 %v2295, 0.0
    %v2646 = vmax.f32 %v2300, 0.0
    %v2647 = vmax.f32 %v2305, 0.0
    %v2648 = vmax.f32 %v2310, 0.0
    %v2649 = vmax.f32 %v2315, 0.0
    %v2650 = vmax.f32 %v2320, 0.0
    %v2651 = vmax.f32 %v2325, 0.0
    %v2652 = vmax.f32 %v2330, 0.0
    %v2653 = vmax.f32 %v2335, 0.0
    %v2654 = vmax.f32 %v2340, 0.0
    %v2655 = vmax.f32 %v2345, 0.0
    %v2656 = vmax.f32 %v2350, 0.0
    %v2657 = vmax.f32 %v2355, 0.0
    %v2658 = vmax.f32 %v2360, 0.0
    %v2659 = vmax.f32 %v2365, 0.0
    %v2660 = vmax.f32 %v2370, 0.0
    %v2661 = vmax.f32 %v2375, 0.0
    %v2662 = vmax.f32 %v2380, 0.0
    %v2663 = vmax.f32 %v2385, 0.0
    %v2664 = vmax.f32 %v2390, 0.0
    %v2665 = vmax.f32 %v2395, 0.0
    %v2666 = vmax.f32 %v2400, 0.0
    %v2667 = vmax.f32 %v2405, 0.0
    %v2668 = vmax.f32 %v2410, 0.0
    %v2669 = vld [vmem:[%s3] sm:$0xff]
    %v2670 = vld [vmem:[%s3 + $0x8] sm:$0xff]
    %v2671 = vld [vmem:[%s3 + $0x10] sm:$0xff]
    %v2672 = vld [vmem:[%s3 + $0x18] sm:$0xff]
    %v2673 = vld [vmem:[%s3 + $0x20] sm:$0xff]
    %v2674 = vld [vmem:[%s3 + $0x28] sm:$0xff]
    %v2675 = vld [vmem:[%s3 + $0x30] sm:$0x3]
    %v2676 = vld [vmem:[%s4] sm:$0x1]
    %v2678 = vlaneseq
    %v2679 = vshrl.u32 %v2678, 7
    %v2680 = vsub.s32 0, %v2679
    %v2681 = vrot.slane %v2676, %v2680
    %vm2683 = vcmask 408576
    %v2685 = vsel %vm2683, %v2413, 0
    %v2688 = vsel %vm2683, %v2414, 0
    %v2691 = vsel %vm2683, %v2415, 0
    %v2694 = vsel %vm2683, %v2416, 0
    %v2697 = vsel %vm2683, %v2417, 0
    %v2700 = vsel %vm2683, %v2418, 0
    %v2703 = vsel %vm2683, %v2419, 0
    %v2706 = vsel %vm2683, %v2420, 0
    %v2709 = vsel %vm2683, %v2421, 0
    %v2712 = vsel %vm2683, %v2422, 0
    %v2715 = vsel %vm2683, %v2423, 0
    %v2718 = vsel %vm2683, %v2424, 0
    %v2721 = vsel %vm2683, %v2425, 0
    %v2724 = vsel %vm2683, %v2426, 0
    %v2727 = vsel %vm2683, %v2427, 0
    %v2730 = vsel %vm2683, %v2428, 0
    %v2733 = vsel %vm2683, %v2429, 0
    %v2736 = vsel %vm2683, %v2430, 0
    %v2739 = vsel %vm2683, %v2431, 0
    %v2742 = vsel %vm2683, %v2432, 0
    %v2745 = vsel %vm2683, %v2433, 0
    %v2748 = vsel %vm2683, %v2434, 0
    %v2751 = vsel %vm2683, %v2435, 0
    %v2754 = vsel %vm2683, %v2436, 0
    %v2757 = vsel %vm2683, %v2437, 0
    %v2760 = vsel %vm2683, %v2438, 0
    %v2763 = vsel %vm2683, %v2439, 0
    %v2766 = vsel %vm2683, %v2440, 0
    %v2769 = vsel %vm2683, %v2441, 0
    %v2772 = vsel %vm2683, %v2442, 0
    %v2775 = vsel %vm2683, %v2443, 0
    %v2778 = vsel %vm2683, %v2444, 0
    %v2781 = vsel %vm2683, %v2445, 0
    %v2784 = vsel %vm2683, %v2446, 0
    %v2787 = vsel %vm2683, %v2447, 0
    %v2790 = vsel %vm2683, %v2448, 0
    %v2793 = vsel %vm2683, %v2449, 0
    %v2796 = vsel %vm2683, %v2450, 0
    %v2799 = vsel %vm2683, %v2451, 0
    %v2802 = vsel %vm2683, %v2452, 0
    %v2805 = vsel %vm2683, %v2453, 0
    %v2808 = vsel %vm2683, %v2454, 0
    %v2811 = vsel %vm2683, %v2455, 0
    %v2814 = vsel %vm2683, %v2456, 0
    %v2817 = vsel %vm2683, %v2457, 0
    %v2820 = vsel %vm2683, %v2458, 0
    %v2823 = vsel %vm2683, %v2459, 0
    %v2826 = vsel %vm2683, %v2460, 0
    %v2829 = vsel %vm2683, %v2461, 0
    %v2832 = vsel %vm2683, %v2462, 0
    %v2835 = vsel %vm2683, %v2463, 0
    %v2838 = vsel %vm2683, %v2464, 0
    %v2841 = vsel %vm2683, %v2465, 0
    %v2844 = vsel %vm2683, %v2466, 0
    %v2847 = vsel %vm2683, %v2467, 0
    %v2850 = vsel %vm2683, %v2468, 0
    %v2853 = vsel %vm2683, %v2469, 0
    %v2856 = vsel %vm2683, %v2470, 0
    %v2859 = vsel %vm2683, %v2471, 0
    %v2862 = vsel %vm2683, %v2472, 0
    %v2865 = vsel %vm2683, %v2473, 0
    %v2868 = vsel %vm2683, %v2474, 0
    %v2871 = vsel %vm2683, %v2475, 0
    %v2874 = vsel %vm2683, %v2476, 0
    %v2877 = vsel %vm2683, %v2477, 0
    %v2880 = vsel %vm2683, %v2478, 0
    %v2883 = vsel %vm2683, %v2479, 0
    %v2886 = vsel %vm2683, %v2480, 0
    %v2889 = vsel %vm2683, %v2481, 0
    %v2892 = vsel %vm2683, %v2482, 0
    %v2895 = vsel %vm2683, %v2483, 0
    %v2898 = vsel %vm2683, %v2484, 0
    %v2901 = vsel %vm2683, %v2485, 0
    %v2904 = vsel %vm2683, %v2486, 0
    %v2907 = vsel %vm2683, %v2487, 0
    %v2910 = vsel %vm2683, %v2488, 0
    %v2913 = vsel %vm2683, %v2489, 0
    %v2916 = vsel %vm2683, %v2490, 0
    %v2919 = vsel %vm2683, %v2491, 0
    %v2922 = vsel %vm2683, %v2492, 0
    %v2925 = vsel %vm2683, %v2493, 0
    %v2928 = vsel %vm2683, %v2494, 0
    %v2931 = vsel %vm2683, %v2495, 0
    %v2934 = vsel %vm2683, %v2496, 0
    %v2937 = vsel %vm2683, %v2497, 0
    %v2940 = vsel %vm2683, %v2498, 0
    %v2943 = vsel %vm2683, %v2499, 0
    %v2946 = vsel %vm2683, %v2500, 0
    %v2949 = vsel %vm2683, %v2501, 0
    %v2952 = vsel %vm2683, %v2502, 0
    %v2955 = vsel %vm2683, %v2503, 0
    %v2958 = vsel %vm2683, %v2504, 0
    %v2961 = vsel %vm2683, %v2505, 0
    %v2964 = vsel %vm2683, %v2506, 0
    %v2967 = vsel %vm2683, %v2507, 0
    %v2970 = vsel %vm2683, %v2508, 0
    %v2973 = vsel %vm2683, %v2509, 0
    %v2976 = vsel %vm2683, %v2510, 0
    %v2979 = vsel %vm2683, %v2511, 0
    %v2982 = vsel %vm2683, %v2512, 0
    %v2985 = vsel %vm2683, %v2513, 0
    %v2988 = vsel %vm2683, %v2514, 0
    %v2991 = vsel %vm2683, %v2515, 0
    %v2994 = vsel %vm2683, %v2516, 0
    %v2997 = vsel %vm2683, %v2517, 0
    %v3000 = vsel %vm2683, %v2518, 0
    %v3003 = vsel %vm2683, %v2519, 0
    %v3006 = vsel %vm2683, %v2520, 0
    %v3009 = vsel %vm2683, %v2521, 0
    %v3012 = vsel %vm2683, %v2522, 0
    %v3015 = vsel %vm2683, %v2523, 0
    %v3018 = vsel %vm2683, %v2524, 0
    %v3021 = vsel %vm2683, %v2525, 0
    %v3024 = vsel %vm2683, %v2526, 0
    %v3027 = vsel %vm2683, %v2527, 0
    %v3030 = vsel %vm2683, %v2528, 0
    %v3033 = vsel %vm2683, %v2529, 0
    %v3036 = vsel %vm2683, %v2530, 0
    %v3039 = vsel %vm2683, %v2531, 0
    %v3042 = vsel %vm2683, %v2532, 0
    %v3045 = vsel %vm2683, %v2533, 0
    %v3048 = vsel %vm2683, %v2534, 0
    %v3051 = vsel %vm2683, %v2535, 0
    %v3054 = vsel %vm2683, %v2536, 0
    %v3057 = vsel %vm2683, %v2537, 0
    %v3060 = vsel %vm2683, %v2538, 0
    %v3063 = vsel %vm2683, %v2539, 0
    %v3066 = vsel %vm2683, %v2540, 0
    %v3069 = vsel %vm2683, %v2541, 0
    %v3072 = vsel %vm2683, %v2542, 0
    %v3075 = vsel %vm2683, %v2543, 0
    %v3078 = vsel %vm2683, %v2544, 0
    %v3081 = vsel %vm2683, %v2545, 0
    %v3084 = vsel %vm2683, %v2546, 0
    %v3087 = vsel %vm2683, %v2547, 0
    %v3090 = vsel %vm2683, %v2548, 0
    %v3093 = vsel %vm2683, %v2549, 0
    %v3096 = vsel %vm2683, %v2550, 0
    %v3099 = vsel %vm2683, %v2551, 0
    %v3102 = vsel %vm2683, %v2552, 0
    %v3105 = vsel %vm2683, %v2553, 0
    %v3108 = vsel %vm2683, %v2554, 0
    %v3111 = vsel %vm2683, %v2555, 0
    %v3114 = vsel %vm2683, %v2556, 0
    %v3117 = vsel %vm2683, %v2557, 0
    %v3120 = vsel %vm2683, %v2558, 0
    %v3123 = vsel %vm2683, %v2559, 0
    %v3126 = vsel %vm2683, %v2560, 0
    %v3129 = vsel %vm2683, %v2561, 0
    %v3132 = vsel %vm2683, %v2562, 0
    %v3135 = vsel %vm2683, %v2563, 0
    %v3138 = vsel %vm2683, %v2564, 0
    %v3141 = vsel %vm2683, %v2565, 0
    %v3144 = vsel %vm2683, %v2566, 0
    %v3147 = vsel %vm2683, %v2567, 0
    %v3150 = vsel %vm2683, %v2568, 0
    %v3153 = vsel %vm2683, %v2569, 0
    %v3156 = vsel %vm2683, %v2570, 0
    %v3159 = vsel %vm2683, %v2571, 0
    %v3162 = vsel %vm2683, %v2572, 0
    %v3165 = vsel %vm2683, %v2573, 0
    %v3168 = vsel %vm2683, %v2574, 0
    %v3171 = vsel %vm2683, %v2575, 0
    %v3174 = vsel %vm2683, %v2576, 0
    %v3177 = vsel %vm2683, %v2577, 0
    %v3180 = vsel %vm2683, %v2578, 0
    %v3183 = vsel %vm2683, %v2579, 0
    %v3186 = vsel %vm2683, %v2580, 0
    %v3189 = vsel %vm2683, %v2581, 0
    %v3192 = vsel %vm2683, %v2582, 0
    %v3195 = vsel %vm2683, %v2583, 0
    %v3198 = vsel %vm2683, %v2584, 0
    %v3201 = vsel %vm2683, %v2585, 0
    %v3204 = vsel %vm2683, %v2586, 0
    %v3207 = vsel %vm2683, %v2587, 0
    %v3210 = vsel %vm2683, %v2588, 0
    %v3213 = vsel %vm2683, %v2589, 0
    %v3216 = vsel %vm2683, %v2590, 0
    %v3219 = vsel %vm2683, %v2591, 0
    %v3222 = vsel %vm2683, %v2592, 0
    %v3225 = vsel %vm2683, %v2593, 0
    %v3228 = vsel %vm2683, %v2594, 0
    %v3231 = vsel %vm2683, %v2595, 0
    %v3234 = vsel %vm2683, %v2596, 0
    %v3237 = vsel %vm2683, %v2597, 0
    %v3240 = vsel %vm2683, %v2598, 0
    %v3243 = vsel %vm2683, %v2599, 0
    %v3246 = vsel %vm2683, %v2600, 0
    %v3249 = vsel %vm2683, %v2601, 0
    %v3252 = vsel %vm2683, %v2602, 0
    %v3255 = vsel %vm2683, %v2603, 0
    %v3258 = vsel %vm2683, %v2604, 0
    %v3261 = vsel %vm2683, %v2605, 0
    %v3264 = vsel %vm2683, %v2606, 0
    %v3267 = vsel %vm2683, %v2607, 0
    %v3270 = vsel %vm2683, %v2608, 0
    %v3273 = vsel %vm2683, %v2609, 0
    %v3276 = vsel %vm2683, %v2610, 0
    %v3279 = vsel %vm2683, %v2611, 0
    %v3282 = vsel %vm2683, %v2612, 0
    %v3285 = vsel %vm2683, %v2613, 0
    %v3288 = vsel %vm2683, %v2614, 0
    %v3291 = vsel %vm2683, %v2615, 0
    %v3294 = vsel %vm2683, %v2616, 0
    %v3297 = vsel %vm2683, %v2617, 0
    %v3300 = vsel %vm2683, %v2618, 0
    %v3303 = vsel %vm2683, %v2619, 0
    %v3306 = vsel %vm2683, %v2620, 0
    %v3309 = vsel %vm2683, %v2621, 0
    %v3312 = vsel %vm2683, %v2622, 0
    %v3315 = vsel %vm2683, %v2623, 0
    %v3318 = vsel %vm2683, %v2624, 0
    %v3321 = vsel %vm2683, %v2625, 0
    %v3324 = vsel %vm2683, %v2626, 0
    %v3327 = vsel %vm2683, %v2627, 0
    %v3330 = vsel %vm2683, %v2628, 0
    %v3333 = vsel %vm2683, %v2629, 0
    %v3336 = vsel %vm2683, %v2630, 0
    %v3339 = vsel %vm2683, %v2631, 0
    %v3342 = vsel %vm2683, %v2632, 0
    %v3345 = vsel %vm2683, %v2633, 0
    %v3348 = vsel %vm2683, %v2634, 0
    %v3351 = vsel %vm2683, %v2635, 0
    %v3354 = vsel %vm2683, %v2636, 0
    %v3357 = vsel %vm2683, %v2637, 0
    %v3360 = vsel %vm2683, %v2638, 0
    %v3363 = vsel %vm2683, %v2639, 0
    %v3366 = vsel %vm2683, %v2640, 0
    %v3369 = vsel %vm2683, %v2641, 0
    %v3372 = vsel %vm2683, %v2642, 0
    %v3375 = vsel %vm2683, %v2643, 0
    %v3378 = vsel %vm2683, %v2644, 0
    %v3381 = vsel %vm2683, %v2645, 0
    %v3384 = vsel %vm2683, %v2646, 0
    %v3387 = vsel %vm2683, %v2647, 0
    %v3390 = vsel %vm2683, %v2648, 0
    %v3393 = vsel %vm2683, %v2649, 0
    %v3396 = vsel %vm2683, %v2650, 0
    %v3399 = vsel %vm2683, %v2651, 0
    %v3402 = vsel %vm2683, %v2652, 0
    %v3405 = vsel %vm2683, %v2653, 0
    %v3408 = vsel %vm2683, %v2654, 0
    %v3411 = vsel %vm2683, %v2655, 0
    %v3414 = vsel %vm2683, %v2656, 0
    %v3417 = vsel %vm2683, %v2657, 0
    %v3420 = vsel %vm2683, %v2658, 0
    %v3423 = vsel %vm2683, %v2659, 0
    %v3426 = vsel %vm2683, %v2660, 0
    %v3429 = vsel %vm2683, %v2661, 0
    %v3432 = vsel %vm2683, %v2662, 0
    %v3435 = vsel %vm2683, %v2663, 0
    %v3438 = vsel %vm2683, %v2664, 0
    %v3441 = vsel %vm2683, %v2665, 0
    %v3444 = vsel %vm2683, %v2666, 0
    %v3447 = vsel %vm2683, %v2667, 0
    %v3450 = vsel %vm2683, %v2668, 0
    %vm3452 = vcmask 1041408
    %v3454 = vsel %vm3452, %v2675, 0
    %3456 = vmatprep.subr.mxu0 0.0
    %3457 = vmatpush1.msra.mxu0 %v2669
    %3458 = vmatprep.subr.mxu0 0.0
    %3459 = vmatpush1.msra.mxu0 %v2670
    %3460 = vmatprep.subr.mxu0 0.0
    %3461 = vmatpush1.msra.mxu0 %v2671
    %3462 = vmatprep.subr.mxu0 0.0
    %3463 = vmatpush1.msra.mxu0 %v2672
    %3464 = vmatprep.subr.mxu0 0.0
    %3465 = vmatpush1.msra.mxu0 %v2673
    %3466 = vmatprep.subr.mxu0 0.0
    %3467 = vmatpush1.msra.mxu0 %v2674
    %3468 = vmatprep.subr.mxu0 0.0
    %3469 = vmatpush1.msra.mxu0 %v3454
    %3470 = vmatprep.subr.mxu0 0.0
    %3471 = vmatpush1.msra.mxu0 0.0
    %3472 = vmatprep.subr.mxu0 0.0
    %3473 = vmatpush1.msra.mxu0 0.0
    %3474 = vmatprep.subr.mxu0 0.0
    %3475 = vmatpush1.msra.mxu0 0.0
    %3476 = vmatprep.subr.mxu0 0.0
    %3477 = vmatpush1.msra.mxu0 0.0
    %3478 = vmatprep.subr.mxu0 0.0
    %3479 = vmatpush1.msra.mxu0 0.0
    %3480 = vmatprep.subr.mxu0 0.0
    %3481 = vmatpush1.msra.mxu0 0.0
    %3482 = vmatprep.subr.mxu0 0.0
    %3483 = vmatpush1.msra.mxu0 0.0
    %3484 = vmatprep.subr.mxu0 0.0
    %3485 = vmatpush1.msra.mxu0 0.0
    %3486 = vmatprep.subr.mxu0 0.0
    %3487 = vmatpush1.msra.mxu0 0.0
    %3488 = vmatprep.subr.mxu0 0.0
    %3489 = vmatpush1.msra.mxu0 0.0
    %3490 = vmatprep.subr.mxu0 0.0
    %3491 = vmatpush1.msra.mxu0 0.0
    %3492 = vmatprep.subr.mxu0 0.0
    %3493 = vmatpush1.msra.mxu0 0.0
    %3494 = vmatprep.subr.mxu0 0.0
    %3495 = vmatpush1.msra.mxu0 0.0
    %3496 = vmatprep.subr.mxu0 0.0
    %3497 = vmatpush1.msra.mxu0 0.0
    %3498 = vmatprep.subr.mxu0 0.0
    %3499 = vmatpush1.msra.mxu0 0.0
    %3500 = vmatprep.subr.mxu0 0.0
    %3501 = vmatpush1.msra.mxu0 0.0
    %3502 = vmatprep.subr.mxu0 0.0
    %3503 = vmatpush1.msra.mxu0 0.0
    %3504 = vmatprep.subr.mxu0 0.0
    %3505 = vmatpush1.msra.mxu0 0.0
    %3506 = vmatprep.subr.mxu0 0.0
    %3507 = vmatpush1.msra.mxu0 0.0
    %3508 = vmatprep.subr.mxu0 0.0
    %3509 = vmatpush1.msra.mxu0 0.0
    %3510 = vmatprep.subr.mxu0 0.0
    %3511 = vmatpush1.msra.mxu0 0.0
    %3512 = vmatprep.subr.mxu0 0.0
    %3513 = vmatpush1.msra.mxu0 0.0
    %3514 = vmatprep.subr.mxu0 0.0
    %3515 = vmatpush1.msra.mxu0 0.0
    %3516 = vmatprep.subr.mxu0 0.0
    %3517 = vmatpush1.msra.mxu0 0.0
    %3518 = vmatprep.subr.mxu0 0.0
    %3519 = vmatpush1.msra.mxu0 0.0
    %3520 = vmatprep.mubr.f32.mxu0 0.0
    %3521 = vmatmul.mubr.f32.gmra.mrb[0].mxu0 %v2685
    %v3522 = vpop.f32.mrb[0].mxu0
    %v3523 = vadd.f32 %v2681, %v3522
    %v3524 = vpop.f32.mrb[0].mxu0
    %3525 = vmatprep.mubr.f32.mxu0 0.0
    %3526 = vmatmul.mubr.f32.gmra.mrb[0].mxu0 %v2688
    %v3527 = vpop.f32.mrb[0].mxu0
    %v3528 = vadd.f32 %v2681, %v3527
    %v3529 = vpop.f32.mrb[0].mxu0
    %3530 = vmatprep.mubr.f32.mxu0 0.0
    %3531 = vmatmul.mubr.f32.gmra.mrb[0].mxu0 %v2691
    %v3532 = vpop.f32.mrb[0].mxu0
    %v3533 = vadd.f32 %v2681, %v3532
    %v3534 = vpop.f32.mrb[0].mxu0
    %3535 = vmatprep.mubr.f32.mxu0 0.0
    %3536 = vmatmul.mubr.f32.gmra.mrb[0].mxu0 %v2694
    %v3537 = vpop.f32.mrb[0].mxu0
    %v3538 = vadd.f32 %v2681, %v3537
    %v3539 = vpop.f32.mrb[0].mxu0
    %3540 = vmatprep.mubr.f32.mxu0 0.0
    %3541 = vmatmul.mubr.f32.gmra.mrb[0].mxu0 %v2697
    %v3542 = vpop.f32.mrb[0].mxu0
    %v3543 = vadd.f32 %v2681, %v3542
    %v3544 = vpop.f32.mrb[0].mxu0
    %3545 = vmatprep.mubr.f32.mxu0 0.0
    %3546 = vmatmul.mubr.f32.gmra.mrb[0].mxu0 %v2700
    %v3547 = vpop.f32.mrb[0].mxu0
    %v3548 = vadd.f32 %v2681, %v3547
    %v3549 = vpop.f32.mrb[0].mxu0
    %3550 = vmatprep.mubr.f32.mxu0 0.0
    %3551 = vmatmul.mubr.f32.gmra.mrb[0].mxu0 %v2703
    %v3552 = vpop.f32.mrb[0].mxu0
    %v3553 = vadd.f32 %v2681, %v3552
    %v3554 = vpop.f32.mrb[0].mxu0
    %3555 = vmatprep.mubr.f32.mxu0 0.0
    %3556 = vmatmul.mubr.f32.gmra.mrb[0].mxu0 %v2706
    %v3557 = vpop.f32.mrb[0].mxu0
    %v3558 = vadd.f32 %v2681, %v3557
    %v3559 = vpop.f32.mrb[0].mxu0
    %3560 = vmatprep.mubr.f32.mxu0 0.0
    %3561 = vmatmul.mubr.f32.gmra.mrb[0].mxu0 %v2709
    %v3562 = vpop.f32.mrb[0].mxu0
    %v3563 = vadd.f32 %v2681, %v3562
    %v3564 = vpop.f32.mrb[0].mxu0
    %3565 = vmatprep.mubr.f32.mxu0 0.0
    %3566 = vmatmul.mubr.f32.gmra.mrb[0].mxu0 %v2712
    %v3567 = vpop.f32.mrb[0].mxu0
    %v3568 = vadd.f32 %v2681, %v3567
    %v3569 = vpop.f32.mrb[0].mxu0
    %3570 = vmatprep.mubr.f32.mxu0 0.0
    %3571 = vmatmul.mubr.f32.gmra.mrb[0].mxu0 %v2715
    %v3572 = vpop.f32.mrb[0].mxu0
    %v3573 = vadd.f32 %v2681, %v3572
    %v3574 = vpop.f32.mrb[0].mxu0
    %3575 = vmatprep.mubr.f32.mxu0 0.0
    %3576 = vmatmul.mubr.f32.gmra.mrb[0].mxu0 %v2718
    %v3577 = vpop.f32.mrb[0].mxu0
    %v3578 = vadd.f32 %v2681, %v3577
    %v3579 = vpop.f32.mrb[0].mxu0
    %3580 = vmatprep.mubr.f32.mxu0 0.0
    %3581 = vmatmul.mubr.f32.gmra.mrb[0].mxu0 %v2721
    %v3582 = vpop.f32.mrb[0].mxu0
    %v3583 = vadd.f32 %v2681, %v3582
    %v3584 = vpop.f32.mrb[0].mxu0
    %3585 = vmatprep.mubr.f32.mxu0 0.0
    %3586 = vmatmul.mubr.f32.gmra.mrb[0].mxu0 %v2724
    %v3587 = vpop.f32.mrb[0].mxu0
    %v3588 = vadd.f32 %v2681, %v3587
    %v3589 = vpop.f32.mrb[0].mxu0
    %3590 = vmatprep.mubr.f32.mxu0 0.0
    %3591 = vmatmul.mubr.f32.gmra.mrb[0].mxu0 %v2727
    %v3592 = vpop.f32.mrb[0].mxu0
    %v3593 = vadd.f32 %v2681, %v3592
    %v3594 = vpop.f32.mrb[0].mxu0
    %3595 = vmatprep.mubr.f32.mxu0 0.0
    %3596 = vmatmul.mubr.f32.gmra.mrb[0].mxu0 %v2730
    %v3597 = vpop.f32.mrb[0].mxu0
    %v3598 = vadd.f32 %v2681, %v3597
    %v3599 = vpop.f32.mrb[0].mxu0
    %3600 = vmatprep.mubr.f32.mxu0 0.0
    %3601 = vmatmul.mubr.f32.gmra.mrb[0].mxu0 %v2733
    %v3602 = vpop.f32.mrb[0].mxu0
    %v3603 = vadd.f32 %v2681, %v3602
    %v3604 = vpop.f32.mrb[0].mxu0
    %3605 = vmatprep.mubr.f32.mxu0 0.0
    %3606 = vmatmul.mubr.f32.gmra.mrb[0].mxu0 %v2736
    %v3607 = vpop.f32.mrb[0].mxu0
    %v3608 = vadd.f32 %v2681, %v3607
    %v3609 = vpop.f32.mrb[0].mxu0
    %3610 = vmatprep.mubr.f32.mxu0 0.0
    %3611 = vmatmul.mubr.f32.gmra.mrb[0].mxu0 %v2739
    %v3612 = vpop.f32.mrb[0].mxu0
    %v3613 = vadd.f32 %v2681, %v3612
    %v3614 = vpop.f32.mrb[0].mxu0
    %3615 = vmatprep.mubr.f32.mxu0 0.0
    %3616 = vmatmul.mubr.f32.gmra.mrb[0].mxu0 %v2742
    %v3617 = vpop.f32.mrb[0].mxu0
    %v3618 = vadd.f32 %v2681, %v3617
    %v3619 = vpop.f32.mrb[0].mxu0
    %3620 = vmatprep.mubr.f32.mxu0 0.0
    %3621 = vmatmul.mubr.f32.gmra.mrb[0].mxu0 %v2745
    %v3622 = vpop.f32.mrb[0].mxu0
    %v3623 = vadd.f32 %v2681, %v3622
    %v3624 = vpop.f32.mrb[0].mxu0
    %3625 = vmatprep.mubr.f32.mxu0 0.0
    %3626 = vmatmul.mubr.f32.gmra.mrb[0].mxu0 %v2748
    %v3627 = vpop.f32.mrb[0].mxu0
    %v3628 = vadd.f32 %v2681, %v3627
    %v3629 = vpop.f32.mrb[0].mxu0
    %3630 = vmatprep.mubr.f32.mxu0 0.0
    %3631 = vmatmul.mubr.f32.gmra.mrb[0].mxu0 %v2751
    %v3632 = vpop.f32.mrb[0].mxu0
    %v3633 = vadd.f32 %v2681, %v3632
    %v3634 = vpop.f32.mrb[0].mxu0
    %3635 = vmatprep.mubr.f32.mxu0 0.0
    %3636 = vmatmul.mubr.f32.gmra.mrb[0].mxu0 %v2754
    %v3637 = vpop.f32.mrb[0].mxu0
    %v3638 = vadd.f32 %v2681, %v3637
    %v3639 = vpop.f32.mrb[0].mxu0
    %3640 = vmatprep.mubr.f32.mxu0 0.0
    %3641 = vmatmul.mubr.f32.gmra.mrb[0].mxu0 %v2757
    %v3642 = vpop.f32.mrb[0].mxu0
    %v3643 = vadd.f32 %v2681, %v3642
    %v3644 = vpop.f32.mrb[0].mxu0
    %3645 = vmatprep.mubr.f32.mxu0 0.0
    %3646 = vmatmul.mubr.f32.gmra.mrb[0].mxu0 %v2760
    %v3647 = vpop.f32.mrb[0].mxu0
    %v3648 = vadd.f32 %v2681, %v3647
    %v3649 = vpop.f32.mrb[0].mxu0
    %3650 = vmatprep.mubr.f32.mxu0 0.0
    %3651 = vmatmul.mubr.f32.gmra.mrb[0].mxu0 %v2763
    %v3652 = vpop.f32.mrb[0].mxu0
    %v3653 = vadd.f32 %v2681, %v3652
    %v3654 = vpop.f32.mrb[0].mxu0
    %3655 = vmatprep.mubr.f32.mxu0 0.0
    %3656 = vmatmul.mubr.f32.gmra.mrb[0].mxu0 %v2766
    %v3657 = vpop.f32.mrb[0].mxu0
    %v3658 = vadd.f32 %v2681, %v3657
    %v3659 = vpop.f32.mrb[0].mxu0
    %3660 = vmatprep.mubr.f32.mxu0 0.0
    %3661 = vmatmul.mubr.f32.gmra.mrb[0].mxu0 %v2769
    %v3662 = vpop.f32.mrb[0].mxu0
    %v3663 = vadd.f32 %v2681, %v3662
    %v3664 = vpop.f32.mrb[0].mxu0
    %3665 = vmatprep.mubr.f32.mxu0 0.0
    %3666 = vmatmul.mubr.f32.gmra.mrb[0].mxu0 %v2772
    %v3667 = vpop.f32.mrb[0].mxu0
    %v3668 = vadd.f32 %v2681, %v3667
    %v3669 = vpop.f32.mrb[0].mxu0
    %3670 = vmatprep.mubr.f32.mxu0 0.0
    %3671 = vmatmul.mubr.f32.gmra.mrb[0].mxu0 %v2775
    %v3672 = vpop.f32.mrb[0].mxu0
    %v3673 = vadd.f32 %v2681, %v3672
    %v3674 = vpop.f32.mrb[0].mxu0
    %3675 = vmatprep.mubr.f32.mxu0 0.0
    %3676 = vmatmul.mubr.f32.gmra.mrb[0].mxu0 %v2778
    %v3677 = vpop.f32.mrb[0].mxu0
    %v3678 = vadd.f32 %v2681, %v3677
    %v3679 = vpop.f32.mrb[0].mxu0
    %3680 = vmatprep.mubr.f32.mxu0 0.0
    %3681 = vmatmul.mubr.f32.gmra.mrb[0].mxu0 %v2781
    %v3682 = vpop.f32.mrb[0].mxu0
    %v3683 = vadd.f32 %v2681, %v3682
    %v3684 = vpop.f32.mrb[0].mxu0
    %3685 = vmatprep.mubr.f32.mxu0 0.0
    %3686 = vmatmul.mubr.f32.gmra.mrb[0].mxu0 %v2784
    %v3687 = vpop.f32.mrb[0].mxu0
    %v3688 = vadd.f32 %v2681, %v3687
    %v3689 = vpop.f32.mrb[0].mxu0
    %3690 = vmatprep.mubr.f32.mxu0 0.0
    %3691 = vmatmul.mubr.f32.gmra.mrb[0].mxu0 %v2787
    %v3692 = vpop.f32.mrb[0].mxu0
    %v3693 = vadd.f32 %v2681, %v3692
    %v3694 = vpop.f32.mrb[0].mxu0
    %3695 = vmatprep.mubr.f32.mxu0 0.0
    %3696 = vmatmul.mubr.f32.gmra.mrb[0].mxu0 %v2790
    %v3697 = vpop.f32.mrb[0].mxu0
    %v3698 = vadd.f32 %v2681, %v3697
    %v3699 = vpop.f32.mrb[0].mxu0
    %3700 = vmatprep.mubr.f32.mxu0 0.0
    %3701 = vmatmul.mubr.f32.gmra.mrb[0].mxu0 %v2793
    %v3702 = vpop.f32.mrb[0].mxu0
    %v3703 = vadd.f32 %v2681, %v3702
    %v3704 = vpop.f32.mrb[0].mxu0
    %3705 = vmatprep.mubr.f32.mxu0 0.0
    %3706 = vmatmul.mubr.f32.gmra.mrb[0].mxu0 %v2796
    %v3707 = vpop.f32.mrb[0].mxu0
    %v3708 = vadd.f32 %v2681, %v3707
    %v3709 = vpop.f32.mrb[0].mxu0
    %3710 = vmatprep.mubr.f32.mxu0 0.0
    %3711 = vmatmul.mubr.f32.gmra.mrb[0].mxu0 %v2799
    %v3712 = vpop.f32.mrb[0].mxu0
    %v3713 = vadd.f32 %v2681, %v3712
    %v3714 = vpop.f32.mrb[0].mxu0
    %3715 = vmatprep.mubr.f32.mxu0 0.0
    %3716 = vmatmul.mubr.f32.gmra.mrb[0].mxu0 %v2802
    %v3717 = vpop.f32.mrb[0].mxu0
    %v3718 = vadd.f32 %v2681, %v3717
    %v3719 = vpop.f32.mrb[0].mxu0
    %3720 = vmatprep.mubr.f32.mxu0 0.0
    %3721 = vmatmul.mubr.f32.gmra.mrb[0].mxu0 %v2805
    %v3722 = vpop.f32.mrb[0].mxu0
    %v3723 = vadd.f32 %v2681, %v3722
    %v3724 = vpop.f32.mrb[0].mxu0
    %3725 = vmatprep.mubr.f32.mxu0 0.0
    %3726 = vmatmul.mubr.f32.gmra.mrb[0].mxu0 %v2808
    %v3727 = vpop.f32.mrb[0].mxu0
    %v3728 = vadd.f32 %v2681, %v3727
    %v3729 = vpop.f32.mrb[0].mxu0
    %3730 = vmatprep.mubr.f32.mxu0 0.0
    %3731 = vmatmul.mubr.f32.gmra.mrb[0].mxu0 %v2811
    %v3732 = vpop.f32.mrb[0].mxu0
    %v3733 = vadd.f32 %v2681, %v3732
    %v3734 = vpop.f32.mrb[0].mxu0
    %3735 = vmatprep.mubr.f32.mxu0 0.0
    %3736 = vmatmul.mubr.f32.gmra.mrb[0].mxu0 %v2814
    %v3737 = vpop.f32.mrb[0].mxu0
    %v3738 = vadd.f32 %v2681, %v3737
    %v3739 = vpop.f32.mrb[0].mxu0
    %3740 = vmatprep.mubr.f32.mxu0 0.0
    %3741 = vmatmul.mubr.f32.gmra.mrb[0].mxu0 %v2817
    %v3742 = vpop.f32.mrb[0].mxu0
    %v3743 = vadd.f32 %v2681, %v3742
    %v3744 = vpop.f32.mrb[0].mxu0
    %3745 = vmatprep.mubr.f32.mxu0 0.0
    %3746 = vmatmul.mubr.f32.gmra.mrb[0].mxu0 %v2820
    %v3747 = vpop.f32.mrb[0].mxu0
    %v3748 = vadd.f32 %v2681, %v3747
    %v3749 = vpop.f32.mrb[0].mxu0
    %3750 = vmatprep.mubr.f32.mxu0 0.0
    %3751 = vmatmul.mubr.f32.gmra.mrb[0].mxu0 %v2823
    %v3752 = vpop.f32.mrb[0].mxu0
    %v3753 = vadd.f32 %v2681, %v3752
    %v3754 = vpop.f32.mrb[0].mxu0
    %3755 = vmatprep.mubr.f32.mxu0 0.0
    %3756 = vmatmul.mubr.f32.gmra.mrb[0].mxu0 %v2826
    %v3757 = vpop.f32.mrb[0].mxu0
    %v3758 = vadd.f32 %v2681, %v3757
    %v3759 = vpop.f32.mrb[0].mxu0
    %3760 = vmatprep.mubr.f32.mxu0 0.0
    %3761 = vmatmul.mubr.f32.gmra.mrb[0].mxu0 %v2829
    %v3762 = vpop.f32.mrb[0].mxu0
    %v3763 = vadd.f32 %v2681, %v3762
    %v3764 = vpop.f32.mrb[0].mxu0
    %3765 = vmatprep.mubr.f32.mxu0 0.0
    %3766 = vmatmul.mubr.f32.gmra.mrb[0].mxu0 %v2832
    %v3767 = vpop.f32.mrb[0].mxu0
    %v3768 = vadd.f32 %v2681, %v3767
    %v3769 = vpop.f32.mrb[0].mxu0
    %3770 = vmatprep.mubr.f32.mxu0 0.0
    %3771 = vmatmul.mubr.f32.gmra.mrb[0].mxu0 %v2835
    %v3772 = vpop.f32.mrb[0].mxu0
    %v3773 = vadd.f32 %v2681, %v3772
    %v3774 = vpop.f32.mrb[0].mxu0
    %3775 = vmatprep.mubr.f32.mxu0 0.0
    %3776 = vmatmul.mubr.f32.gmra.mrb[0].mxu0 %v2838
    %v3777 = vpop.f32.mrb[0].mxu0
    %v3778 = vadd.f32 %v2681, %v3777
    %v3779 = vpop.f32.mrb[0].mxu0
    %3780 = vmatprep.mubr.f32.mxu0 0.0
    %3781 = vmatmul.mubr.f32.gmra.mrb[0].mxu0 %v2841
    %v3782 = vpop.f32.mrb[0].mxu0
    %v3783 = vadd.f32 %v2681, %v3782
    %v3784 = vpop.f32.mrb[0].mxu0
    %3785 = vmatprep.mubr.f32.mxu0 0.0
    %3786 = vmatmul.mubr.f32.gmra.mrb[0].mxu0 %v2844
    %v3787 = vpop.f32.mrb[0].mxu0
    %v3788 = vadd.f32 %v2681, %v3787
    %v3789 = vpop.f32.mrb[0].mxu0
    %3790 = vmatprep.mubr.f32.mxu0 0.0
    %3791 = vmatmul.mubr.f32.gmra.mrb[0].mxu0 %v2847
    %v3792 = vpop.f32.mrb[0].mxu0
    %v3793 = vadd.f32 %v2681, %v3792
    %v3794 = vpop.f32.mrb[0].mxu0
    %3795 = vmatprep.mubr.f32.mxu0 0.0
    %3796 = vmatmul.mubr.f32.gmra.mrb[0].mxu0 %v2850
    %v3797 = vpop.f32.mrb[0].mxu0
    %v3798 = vadd.f32 %v2681, %v3797
    %v3799 = vpop.f32.mrb[0].mxu0
    %3800 = vmatprep.mubr.f32.mxu0 0.0
    %3801 = vmatmul.mubr.f32.gmra.mrb[0].mxu0 %v2853
    %v3802 = vpop.f32.mrb[0].mxu0
    %v3803 = vadd.f32 %v2681, %v3802
    %v3804 = vpop.f32.mrb[0].mxu0
    %3805 = vmatprep.mubr.f32.mxu0 0.0
    %3806 = vmatmul.mubr.f32.gmra.mrb[0].mxu0 %v2856
    %v3807 = vpop.f32.mrb[0].mxu0
    %v3808 = vadd.f32 %v2681, %v3807
    %v3809 = vpop.f32.mrb[0].mxu0
    %3810 = vmatprep.mubr.f32.mxu0 0.0
    %3811 = vmatmul.mubr.f32.gmra.mrb[0].mxu0 %v2859
    %v3812 = vpop.f32.mrb[0].mxu0
    %v3813 = vadd.f32 %v2681, %v3812
    %v3814 = vpop.f32.mrb[0].mxu0
    %3815 = vmatprep.mubr.f32.mxu0 0.0
    %3816 = vmatmul.mubr.f32.gmra.mrb[0].mxu0 %v2862
    %v3817 = vpop.f32.mrb[0].mxu0
    %v3818 = vadd.f32 %v2681, %v3817
    %v3819 = vpop.f32.mrb[0].mxu0
    %3820 = vmatprep.mubr.f32.mxu0 0.0
    %3821 = vmatmul.mubr.f32.gmra.mrb[0].mxu0 %v2865
    %v3822 = vpop.f32.mrb[0].mxu0
    %v3823 = vadd.f32 %v2681, %v3822
    %v3824 = vpop.f32.mrb[0].mxu0
    %3825 = vmatprep.mubr.f32.mxu0 0.0
    %3826 = vmatmul.mubr.f32.gmra.mrb[0].mxu0 %v2868
    %v3827 = vpop.f32.mrb[0].mxu0
    %v3828 = vadd.f32 %v2681, %v3827
    %v3829 = vpop.f32.mrb[0].mxu0
    %3830 = vmatprep.mubr.f32.mxu0 0.0
    %3831 = vmatmul.mubr.f32.gmra.mrb[0].mxu0 %v2871
    %v3832 = vpop.f32.mrb[0].mxu0
    %v3833 = vadd.f32 %v2681, %v3832
    %v3834 = vpop.f32.mrb[0].mxu0
    %3835 = vmatprep.mubr.f32.mxu0 0.0
    %3836 = vmatmul.mubr.f32.gmra.mrb[0].mxu0 %v2874
    %v3837 = vpop.f32.mrb[0].mxu0
    %v3838 = vadd.f32 %v2681, %v3837
    %v3839 = vpop.f32.mrb[0].mxu0
    %3840 = vmatprep.mubr.f32.mxu0 0.0
    %3841 = vmatmul.mubr.f32.gmra.mrb[0].mxu0 %v2877
    %v3842 = vpop.f32.mrb[0].mxu0
    %v3843 = vadd.f32 %v2681, %v3842
    %v3844 = vpop.f32.mrb[0].mxu0
    %3845 = vmatprep.mubr.f32.mxu0 0.0
    %3846 = vmatmul.mubr.f32.gmra.mrb[0].mxu0 %v2880
    %v3847 = vpop.f32.mrb[0].mxu0
    %v3848 = vadd.f32 %v2681, %v3847
    %v3849 = vpop.f32.mrb[0].mxu0
    %3850 = vmatprep.mubr.f32.mxu0 0.0
    %3851 = vmatmul.mubr.f32.gmra.mrb[0].mxu0 %v2883
    %v3852 = vpop.f32.mrb[0].mxu0
    %v3853 = vadd.f32 %v2681, %v3852
    %v3854 = vpop.f32.mrb[0].mxu0
    %3855 = vmatprep.mubr.f32.mxu0 0.0
    %3856 = vmatmul.mubr.f32.gmra.mrb[0].mxu0 %v2886
    %v3857 = vpop.f32.mrb[0].mxu0
    %v3858 = vadd.f32 %v2681, %v3857
    %v3859 = vpop.f32.mrb[0].mxu0
    %3860 = vmatprep.mubr.f32.mxu0 0.0
    %3861 = vmatmul.mubr.f32.gmra.mrb[0].mxu0 %v2889
    %v3862 = vpop.f32.mrb[0].mxu0
    %v3863 = vadd.f32 %v2681, %v3862
    %v3864 = vpop.f32.mrb[0].mxu0
    %3865 = vmatprep.mubr.f32.mxu0 0.0
    %3866 = vmatmul.mubr.f32.gmra.mrb[0].mxu0 %v2892
    %v3867 = vpop.f32.mrb[0].mxu0
    %v3868 = vadd.f32 %v2681, %v3867
    %v3869 = vpop.f32.mrb[0].mxu0
    %3870 = vmatprep.mubr.f32.mxu0 0.0
    %3871 = vmatmul.mubr.f32.gmra.mrb[0].mxu0 %v2895
    %v3872 = vpop.f32.mrb[0].mxu0
    %v3873 = vadd.f32 %v2681, %v3872
    %v3874 = vpop.f32.mrb[0].mxu0
    %3875 = vmatprep.mubr.f32.mxu0 0.0
    %3876 = vmatmul.mubr.f32.gmra.mrb[0].mxu0 %v2898
    %v3877 = vpop.f32.mrb[0].mxu0
    %v3878 = vadd.f32 %v2681, %v3877
    %v3879 = vpop.f32.mrb[0].mxu0
    %3880 = vmatprep.mubr.f32.mxu0 0.0
    %3881 = vmatmul.mubr.f32.gmra.mrb[0].mxu0 %v2901
    %v3882 = vpop.f32.mrb[0].mxu0
    %v3883 = vadd.f32 %v2681, %v3882
    %v3884 = vpop.f32.mrb[0].mxu0
    %3885 = vmatprep.mubr.f32.mxu0 0.0
    %3886 = vmatmul.mubr.f32.gmra.mrb[0].mxu0 %v2904
    %v3887 = vpop.f32.mrb[0].mxu0
    %v3888 = vadd.f32 %v2681, %v3887
    %v3889 = vpop.f32.mrb[0].mxu0
    %3890 = vmatprep.mubr.f32.mxu0 0.0
    %3891 = vmatmul.mubr.f32.gmra.mrb[0].mxu0 %v2907
    %v3892 = vpop.f32.mrb[0].mxu0
    %v3893 = vadd.f32 %v2681, %v3892
    %v3894 = vpop.f32.mrb[0].mxu0
    %3895 = vmatprep.mubr.f32.mxu0 0.0
    %3896 = vmatmul.mubr.f32.gmra.mrb[0].mxu0 %v2910
    %v3897 = vpop.f32.mrb[0].mxu0
    %v3898 = vadd.f32 %v2681, %v3897
    %v3899 = vpop.f32.mrb[0].mxu0
    %3900 = vmatprep.mubr.f32.mxu0 0.0
    %3901 = vmatmul.mubr.f32.gmra.mrb[0].mxu0 %v2913
    %v3902 = vpop.f32.mrb[0].mxu0
    %v3903 = vadd.f32 %v2681, %v3902
    %v3904 = vpop.f32.mrb[0].mxu0
    %3905 = vmatprep.mubr.f32.mxu0 0.0
    %3906 = vmatmul.mubr.f32.gmra.mrb[0].mxu0 %v2916
    %v3907 = vpop.f32.mrb[0].mxu0
    %v3908 = vadd.f32 %v2681, %v3907
    %v3909 = vpop.f32.mrb[0].mxu0
    %3910 = vmatprep.mubr.f32.mxu0 0.0
    %3911 = vmatmul.mubr.f32.gmra.mrb[0].mxu0 %v2919
    %v3912 = vpop.f32.mrb[0].mxu0
    %v3913 = vadd.f32 %v2681, %v3912
    %v3914 = vpop.f32.mrb[0].mxu0
    %3915 = vmatprep.mubr.f32.mxu0 0.0
    %3916 = vmatmul.mubr.f32.gmra.mrb[0].mxu0 %v2922
    %v3917 = vpop.f32.mrb[0].mxu0
    %v3918 = vadd.f32 %v2681, %v3917
    %v3919 = vpop.f32.mrb[0].mxu0
    %3920 = vmatprep.mubr.f32.mxu0 0.0
    %3921 = vmatmul.mubr.f32.gmra.mrb[0].mxu0 %v2925
    %v3922 = vpop.f32.mrb[0].mxu0
    %v3923 = vadd.f32 %v2681, %v3922
    %v3924 = vpop.f32.mrb[0].mxu0
    %3925 = vmatprep.mubr.f32.mxu0 0.0
    %3926 = vmatmul.mubr.f32.gmra.mrb[0].mxu0 %v2928
    %v3927 = vpop.f32.mrb[0].mxu0
    %v3928 = vadd.f32 %v2681, %v3927
    %v3929 = vpop.f32.mrb[0].mxu0
    %3930 = vmatprep.mubr.f32.mxu0 0.0
    %3931 = vmatmul.mubr.f32.gmra.mrb[0].mxu0 %v2931
    %v3932 = vpop.f32.mrb[0].mxu0
    %v3933 = vadd.f32 %v2681, %v3932
    %v3934 = vpop.f32.mrb[0].mxu0
    %3935 = vmatprep.mubr.f32.mxu0 0.0
    %3936 = vmatmul.mubr.f32.gmra.mrb[0].mxu0 %v2934
    %v3937 = vpop.f32.mrb[0].mxu0
    %v3938 = vadd.f32 %v2681, %v3937
    %v3939 = vpop.f32.mrb[0].mxu0
    %3940 = vmatprep.mubr.f32.mxu0 0.0
    %3941 = vmatmul.mubr.f32.gmra.mrb[0].mxu0 %v2937
    %v3942 = vpop.f32.mrb[0].mxu0
    %v3943 = vadd.f32 %v2681, %v3942
    %v3944 = vpop.f32.mrb[0].mxu0
    %3945 = vmatprep.mubr.f32.mxu0 0.0
    %3946 = vmatmul.mubr.f32.gmra.mrb[0].mxu0 %v2940
    %v3947 = vpop.f32.mrb[0].mxu0
    %v3948 = vadd.f32 %v2681, %v3947
    %v3949 = vpop.f32.mrb[0].mxu0
    %3950 = vmatprep.mubr.f32.mxu0 0.0
    %3951 = vmatmul.mubr.f32.gmra.mrb[0].mxu0 %v2943
    %v3952 = vpop.f32.mrb[0].mxu0
    %v3953 = vadd.f32 %v2681, %v3952
    %v3954 = vpop.f32.mrb[0].mxu0
    %3955 = vmatprep.mubr.f32.mxu0 0.0
    %3956 = vmatmul.mubr.f32.gmra.mrb[0].mxu0 %v2946
    %v3957 = vpop.f32.mrb[0].mxu0
    %v3958 = vadd.f32 %v2681, %v3957
    %v3959 = vpop.f32.mrb[0].mxu0
    %3960 = vmatprep.mubr.f32.mxu0 0.0
    %3961 = vmatmul.mubr.f32.gmra.mrb[0].mxu0 %v2949
    %v3962 = vpop.f32.mrb[0].mxu0
    %v3963 = vadd.f32 %v2681, %v3962
    %v3964 = vpop.f32.mrb[0].mxu0
    %3965 = vmatprep.mubr.f32.mxu0 0.0
    %3966 = vmatmul.mubr.f32.gmra.mrb[0].mxu0 %v2952
    %v3967 = vpop.f32.mrb[0].mxu0
    %v3968 = vadd.f32 %v2681, %v3967
    %v3969 = vpop.f32.mrb[0].mxu0
    %3970 = vmatprep.mubr.f32.mxu0 0.0
    %3971 = vmatmul.mubr.f32.gmra.mrb[0].mxu0 %v2955
    %v3972 = vpop.f32.mrb[0].mxu0
    %v3973 = vadd.f32 %v2681, %v3972
    %v3974 = vpop.f32.mrb[0].mxu0
    %3975 = vmatprep.mubr.f32.mxu0 0.0
    %3976 = vmatmul.mubr.f32.gmra.mrb[0].mxu0 %v2958
    %v3977 = vpop.f32.mrb[0].mxu0
    %v3978 = vadd.f32 %v2681, %v3977
    %v3979 = vpop.f32.mrb[0].mxu0
    %3980 = vmatprep.mubr.f32.mxu0 0.0
    %3981 = vmatmul.mubr.f32.gmra.mrb[0].mxu0 %v2961
    %v3982 = vpop.f32.mrb[0].mxu0
    %v3983 = vadd.f32 %v2681, %v3982
    %v3984 = vpop.f32.mrb[0].mxu0
    %3985 = vmatprep.mubr.f32.mxu0 0.0
    %3986 = vmatmul.mubr.f32.gmra.mrb[0].mxu0 %v2964
    %v3987 = vpop.f32.mrb[0].mxu0
    %v3988 = vadd.f32 %v2681, %v3987
    %v3989 = vpop.f32.mrb[0].mxu0
    %3990 = vmatprep.mubr.f32.mxu0 0.0
    %3991 = vmatmul.mubr.f32.gmra.mrb[0].mxu0 %v2967
    %v3992 = vpop.f32.mrb[0].mxu0
    %v3993 = vadd.f32 %v2681, %v3992
    %v3994 = vpop.f32.mrb[0].mxu0
    %3995 = vmatprep.mubr.f32.mxu0 0.0
    %3996 = vmatmul.mubr.f32.gmra.mrb[0].mxu0 %v2970
    %v3997 = vpop.f32.mrb[0].mxu0
    %v3998 = vadd.f32 %v2681, %v3997
    %v3999 = vpop.f32.mrb[0].mxu0
    %4000 = vmatprep.mubr.f32.mxu0 0.0
    %4001 = vmatmul.mubr.f32.gmra.mrb[0].mxu0 %v2973
    %v4002 = vpop.f32.mrb[0].mxu0
    %v4003 = vadd.f32 %v2681, %v4002
    %v4004 = vpop.f32.mrb[0].mxu0
    %4005 = vmatprep.mubr.f32.mxu0 0.0
    %4006 = vmatmul.mubr.f32.gmra.mrb[0].mxu0 %v2976
    %v4007 = vpop.f32.mrb[0].mxu0
    %v4008 = vadd.f32 %v2681, %v4007
    %v4009 = vpop.f32.mrb[0].mxu0
    %4010 = vmatprep.mubr.f32.mxu0 0.0
    %4011 = vmatmul.mubr.f32.gmra.mrb[0].mxu0 %v2979
    %v4012 = vpop.f32.mrb[0].mxu0
    %v4013 = vadd.f32 %v2681, %v4012
    %v4014 = vpop.f32.mrb[0].mxu0
    %4015 = vmatprep.mubr.f32.mxu0 0.0
    %4016 = vmatmul.mubr.f32.gmra.mrb[0].mxu0 %v2982
    %v4017 = vpop.f32.mrb[0].mxu0
    %v4018 = vadd.f32 %v2681, %v4017
    %v4019 = vpop.f32.mrb[0].mxu0
    %4020 = vmatprep.mubr.f32.mxu0 0.0
    %4021 = vmatmul.mubr.f32.gmra.mrb[0].mxu0 %v2985
    %v4022 = vpop.f32.mrb[0].mxu0
    %v4023 = vadd.f32 %v2681, %v4022
    %v4024 = vpop.f32.mrb[0].mxu0
    %4025 = vmatprep.mubr.f32.mxu0 0.0
    %4026 = vmatmul.mubr.f32.gmra.mrb[0].mxu0 %v2988
    %v4027 = vpop.f32.mrb[0].mxu0
    %v4028 = vadd.f32 %v2681, %v4027
    %v4029 = vpop.f32.mrb[0].mxu0
    %4030 = vmatprep.mubr.f32.mxu0 0.0
    %4031 = vmatmul.mubr.f32.gmra.mrb[0].mxu0 %v2991
    %v4032 = vpop.f32.mrb[0].mxu0
    %v4033 = vadd.f32 %v2681, %v4032
    %v4034 = vpop.f32.mrb[0].mxu0
    %4035 = vmatprep.mubr.f32.mxu0 0.0
    %4036 = vmatmul.mubr.f32.gmra.mrb[0].mxu0 %v2994
    %v4037 = vpop.f32.mrb[0].mxu0
    %v4038 = vadd.f32 %v2681, %v4037
    %v4039 = vpop.f32.mrb[0].mxu0
    %4040 = vmatprep.mubr.f32.mxu0 0.0
    %4041 = vmatmul.mubr.f32.gmra.mrb[0].mxu0 %v2997
    %v4042 = vpop.f32.mrb[0].mxu0
    %v4043 = vadd.f32 %v2681, %v4042
    %v4044 = vpop.f32.mrb[0].mxu0
    %4045 = vmatprep.mubr.f32.mxu0 0.0
    %4046 = vmatmul.mubr.f32.gmra.mrb[0].mxu0 %v3000
    %v4047 = vpop.f32.mrb[0].mxu0
    %v4048 = vadd.f32 %v2681, %v4047
    %v4049 = vpop.f32.mrb[0].mxu0
    %4050 = vmatprep.mubr.f32.mxu0 0.0
    %4051 = vmatmul.mubr.f32.gmra.mrb[0].mxu0 %v3003
    %v4052 = vpop.f32.mrb[0].mxu0
    %v4053 = vadd.f32 %v2681, %v4052
    %v4054 = vpop.f32.mrb[0].mxu0
    %4055 = vmatprep.mubr.f32.mxu0 0.0
    %4056 = vmatmul.mubr.f32.gmra.mrb[0].mxu0 %v3006
    %v4057 = vpop.f32.mrb[0].mxu0
    %v4058 = vadd.f32 %v2681, %v4057
    %v4059 = vpop.f32.mrb[0].mxu0
    %4060 = vmatprep.mubr.f32.mxu0 0.0
    %4061 = vmatmul.mubr.f32.gmra.mrb[0].mxu0 %v3009
    %v4062 = vpop.f32.mrb[0].mxu0
    %v4063 = vadd.f32 %v2681, %v4062
    %v4064 = vpop.f32.mrb[0].mxu0
    %4065 = vmatprep.mubr.f32.mxu0 0.0
    %4066 = vmatmul.mubr.f32.gmra.mrb[0].mxu0 %v3012
    %v4067 = vpop.f32.mrb[0].mxu0
    %v4068 = vadd.f32 %v2681, %v4067
    %v4069 = vpop.f32.mrb[0].mxu0
    %4070 = vmatprep.mubr.f32.mxu0 0.0
    %4071 = vmatmul.mubr.f32.gmra.mrb[0].mxu0 %v3015
    %v4072 = vpop.f32.mrb[0].mxu0
    %v4073 = vadd.f32 %v2681, %v4072
    %v4074 = vpop.f32.mrb[0].mxu0
    %4075 = vmatprep.mubr.f32.mxu0 0.0
    %4076 = vmatmul.mubr.f32.gmra.mrb[0].mxu0 %v3018
    %v4077 = vpop.f32.mrb[0].mxu0
    %v4078 = vadd.f32 %v2681, %v4077
    %v4079 = vpop.f32.mrb[0].mxu0
    %4080 = vmatprep.mubr.f32.mxu0 0.0
    %4081 = vmatmul.mubr.f32.gmra.mrb[0].mxu0 %v3021
    %v4082 = vpop.f32.mrb[0].mxu0
    %v4083 = vadd.f32 %v2681, %v4082
    %v4084 = vpop.f32.mrb[0].mxu0
    %4085 = vmatprep.mubr.f32.mxu0 0.0
    %4086 = vmatmul.mubr.f32.gmra.mrb[0].mxu0 %v3024
    %v4087 = vpop.f32.mrb[0].mxu0
    %v4088 = vadd.f32 %v2681, %v4087
    %v4089 = vpop.f32.mrb[0].mxu0
    %4090 = vmatprep.mubr.f32.mxu0 0.0
    %4091 = vmatmul.mubr.f32.gmra.mrb[0].mxu0 %v3027
    %v4092 = vpop.f32.mrb[0].mxu0
    %v4093 = vadd.f32 %v2681, %v4092
    %v4094 = vpop.f32.mrb[0].mxu0
    %4095 = vmatprep.mubr.f32.mxu0 0.0
    %4096 = vmatmul.mubr.f32.gmra.mrb[0].mxu0 %v3030
    %v4097 = vpop.f32.mrb[0].mxu0
    %v4098 = vadd.f32 %v2681, %v4097
    %v4099 = vpop.f32.mrb[0].mxu0
    %4100 = vmatprep.mubr.f32.mxu0 0.0
    %4101 = vmatmul.mubr.f32.gmra.mrb[0].mxu0 %v3033
    %v4102 = vpop.f32.mrb[0].mxu0
    %v4103 = vadd.f32 %v2681, %v4102
    %v4104 = vpop.f32.mrb[0].mxu0
    %4105 = vmatprep.mubr.f32.mxu0 0.0
    %4106 = vmatmul.mubr.f32.gmra.mrb[0].mxu0 %v3036
    %v4107 = vpop.f32.mrb[0].mxu0
    %v4108 = vadd.f32 %v2681, %v4107
    %v4109 = vpop.f32.mrb[0].mxu0
    %4110 = vmatprep.mubr.f32.mxu0 0.0
    %4111 = vmatmul.mubr.f32.gmra.mrb[0].mxu0 %v3039
    %v4112 = vpop.f32.mrb[0].mxu0
    %v4113 = vadd.f32 %v2681, %v4112
    %v4114 = vpop.f32.mrb[0].mxu0
    %4115 = vmatprep.mubr.f32.mxu0 0.0
    %4116 = vmatmul.mubr.f32.gmra.mrb[0].mxu0 %v3042
    %v4117 = vpop.f32.mrb[0].mxu0
    %v4118 = vadd.f32 %v2681, %v4117
    %v4119 = vpop.f32.mrb[0].mxu0
    %4120 = vmatprep.mubr.f32.mxu0 0.0
    %4121 = vmatmul.mubr.f32.gmra.mrb[0].mxu0 %v3045
    %v4122 = vpop.f32.mrb[0].mxu0
    %v4123 = vadd.f32 %v2681, %v4122
    %v4124 = vpop.f32.mrb[0].mxu0
    %4125 = vmatprep.mubr.f32.mxu0 0.0
    %4126 = vmatmul.mubr.f32.gmra.mrb[0].mxu0 %v3048
    %v4127 = vpop.f32.mrb[0].mxu0
    %v4128 = vadd.f32 %v2681, %v4127
    %v4129 = vpop.f32.mrb[0].mxu0
    %4130 = vmatprep.mubr.f32.mxu0 0.0
    %4131 = vmatmul.mubr.f32.gmra.mrb[0].mxu0 %v3051
    %v4132 = vpop.f32.mrb[0].mxu0
    %v4133 = vadd.f32 %v2681, %v4132
    %v4134 = vpop.f32.mrb[0].mxu0
    %4135 = vmatprep.mubr.f32.mxu0 0.0
    %4136 = vmatmul.mubr.f32.gmra.mrb[0].mxu0 %v3054
    %v4137 = vpop.f32.mrb[0].mxu0
    %v4138 = vadd.f32 %v2681, %v4137
    %v4139 = vpop.f32.mrb[0].mxu0
    %4140 = vmatprep.mubr.f32.mxu0 0.0
    %4141 = vmatmul.mubr.f32.gmra.mrb[0].mxu0 %v3057
    %v4142 = vpop.f32.mrb[0].mxu0
    %v4143 = vadd.f32 %v2681, %v4142
    %v4144 = vpop.f32.mrb[0].mxu0
    %4145 = vmatprep.mubr.f32.mxu0 0.0
    %4146 = vmatmul.mubr.f32.gmra.mrb[0].mxu0 %v3060
    %v4147 = vpop.f32.mrb[0].mxu0
    %v4148 = vadd.f32 %v2681, %v4147
    %v4149 = vpop.f32.mrb[0].mxu0
    %4150 = vmatprep.mubr.f32.mxu0 0.0
    %4151 = vmatmul.mubr.f32.gmra.mrb[0].mxu0 %v3063
    %v4152 = vpop.f32.mrb[0].mxu0
    %v4153 = vadd.f32 %v2681, %v4152
    %v4154 = vpop.f32.mrb[0].mxu0
    %4155 = vmatprep.mubr.f32.mxu0 0.0
    %4156 = vmatmul.mubr.f32.gmra.mrb[0].mxu0 %v3066
    %v4157 = vpop.f32.mrb[0].mxu0
    %v4158 = vadd.f32 %v2681, %v4157
    %v4159 = vpop.f32.mrb[0].mxu0
    %4160 = vmatprep.mubr.f32.mxu0 0.0
    %4161 = vmatmul.mubr.f32.gmra.mrb[0].mxu0 %v3069
    %v4162 = vpop.f32.mrb[0].mxu0
    %v4163 = vadd.f32 %v2681, %v4162
    %v4164 = vpop.f32.mrb[0].mxu0
    %4165 = vmatprep.mubr.f32.mxu0 0.0
    %4166 = vmatmul.mubr.f32.gmra.mrb[0].mxu0 %v3072
    %v4167 = vpop.f32.mrb[0].mxu0
    %v4168 = vadd.f32 %v2681, %v4167
    %v4169 = vpop.f32.mrb[0].mxu0
    %4170 = vmatprep.mubr.f32.mxu0 0.0
    %4171 = vmatmul.mubr.f32.gmra.mrb[0].mxu0 %v3075
    %v4172 = vpop.f32.mrb[0].mxu0
    %v4173 = vadd.f32 %v2681, %v4172
    %v4174 = vpop.f32.mrb[0].mxu0
    %4175 = vmatprep.mubr.f32.mxu0 0.0
    %4176 = vmatmul.mubr.f32.gmra.mrb[0].mxu0 %v3078
    %v4177 = vpop.f32.mrb[0].mxu0
    %v4178 = vadd.f32 %v2681, %v4177
    %v4179 = vpop.f32.mrb[0].mxu0
    %4180 = vmatprep.mubr.f32.mxu0 0.0
    %4181 = vmatmul.mubr.f32.gmra.mrb[0].mxu0 %v3081
    %v4182 = vpop.f32.mrb[0].mxu0
    %v4183 = vadd.f32 %v2681, %v4182
    %v4184 = vpop.f32.mrb[0].mxu0
    %4185 = vmatprep.mubr.f32.mxu0 0.0
    %4186 = vmatmul.mubr.f32.gmra.mrb[0].mxu0 %v3084
    %v4187 = vpop.f32.mrb[0].mxu0
    %v4188 = vadd.f32 %v2681, %v4187
    %v4189 = vpop.f32.mrb[0].mxu0
    %4190 = vmatprep.mubr.f32.mxu0 0.0
    %4191 = vmatmul.mubr.f32.gmra.mrb[0].mxu0 %v3087
    %v4192 = vpop.f32.mrb[0].mxu0
    %v4193 = vadd.f32 %v2681, %v4192
    %v4194 = vpop.f32.mrb[0].mxu0
    %4195 = vmatprep.mubr.f32.mxu0 0.0
    %4196 = vmatmul.mubr.f32.gmra.mrb[0].mxu0 %v3090
    %v4197 = vpop.f32.mrb[0].mxu0
    %v4198 = vadd.f32 %v2681, %v4197
    %v4199 = vpop.f32.mrb[0].mxu0
    %4200 = vmatprep.mubr.f32.mxu0 0.0
    %4201 = vmatmul.mubr.f32.gmra.mrb[0].mxu0 %v3093
    %v4202 = vpop.f32.mrb[0].mxu0
    %v4203 = vadd.f32 %v2681, %v4202
    %v4204 = vpop.f32.mrb[0].mxu0
    %4205 = vmatprep.mubr.f32.mxu0 0.0
    %4206 = vmatmul.mubr.f32.gmra.mrb[0].mxu0 %v3096
    %v4207 = vpop.f32.mrb[0].mxu0
    %v4208 = vadd.f32 %v2681, %v4207
    %v4209 = vpop.f32.mrb[0].mxu0
    %4210 = vmatprep.mubr.f32.mxu0 0.0
    %4211 = vmatmul.mubr.f32.gmra.mrb[0].mxu0 %v3099
    %v4212 = vpop.f32.mrb[0].mxu0
    %v4213 = vadd.f32 %v2681, %v4212
    %v4214 = vpop.f32.mrb[0].mxu0
    %4215 = vmatprep.mubr.f32.mxu0 0.0
    %4216 = vmatmul.mubr.f32.gmra.mrb[0].mxu0 %v3102
    %v4217 = vpop.f32.mrb[0].mxu0
    %v4218 = vadd.f32 %v2681, %v4217
    %v4219 = vpop.f32.mrb[0].mxu0
    %4220 = vmatprep.mubr.f32.mxu0 0.0
    %4221 = vmatmul.mubr.f32.gmra.mrb[0].mxu0 %v3105
    %v4222 = vpop.f32.mrb[0].mxu0
    %v4223 = vadd.f32 %v2681, %v4222
    %v4224 = vpop.f32.mrb[0].mxu0
    %4225 = vmatprep.mubr.f32.mxu0 0.0
    %4226 = vmatmul.mubr.f32.gmra.mrb[0].mxu0 %v3108
    %v4227 = vpop.f32.mrb[0].mxu0
    %v4228 = vadd.f32 %v2681, %v4227
    %v4229 = vpop.f32.mrb[0].mxu0
    %4230 = vmatprep.mubr.f32.mxu0 0.0
    %4231 = vmatmul.mubr.f32.gmra.mrb[0].mxu0 %v3111
    %v4232 = vpop.f32.mrb[0].mxu0
    %v4233 = vadd.f32 %v2681, %v4232
    %v4234 = vpop.f32.mrb[0].mxu0
    %4235 = vmatprep.mubr.f32.mxu0 0.0
    %4236 = vmatmul.mubr.f32.gmra.mrb[0].mxu0 %v3114
    %v4237 = vpop.f32.mrb[0].mxu0
    %v4238 = vadd.f32 %v2681, %v4237
    %v4239 = vpop.f32.mrb[0].mxu0
    %4240 = vmatprep.mubr.f32.mxu0 0.0
    %4241 = vmatmul.mubr.f32.gmra.mrb[0].mxu0 %v3117
    %v4242 = vpop.f32.mrb[0].mxu0
    %v4243 = vadd.f32 %v2681, %v4242
    %v4244 = vpop.f32.mrb[0].mxu0
    %4245 = vmatprep.mubr.f32.mxu0 0.0
    %4246 = vmatmul.mubr.f32.gmra.mrb[0].mxu0 %v3120
    %v4247 = vpop.f32.mrb[0].mxu0
    %v4248 = vadd.f32 %v2681, %v4247
    %v4249 = vpop.f32.mrb[0].mxu0
    %4250 = vmatprep.mubr.f32.mxu0 0.0
    %4251 = vmatmul.mubr.f32.gmra.mrb[0].mxu0 %v3123
    %v4252 = vpop.f32.mrb[0].mxu0
    %v4253 = vadd.f32 %v2681, %v4252
    %v4254 = vpop.f32.mrb[0].mxu0
    %4255 = vmatprep.mubr.f32.mxu0 0.0
    %4256 = vmatmul.mubr.f32.gmra.mrb[0].mxu0 %v3126
    %v4257 = vpop.f32.mrb[0].mxu0
    %v4258 = vadd.f32 %v2681, %v4257
    %v4259 = vpop.f32.mrb[0].mxu0
    %4260 = vmatprep.mubr.f32.mxu0 0.0
    %4261 = vmatmul.mubr.f32.gmra.mrb[0].mxu0 %v3129
    %v4262 = vpop.f32.mrb[0].mxu0
    %v4263 = vadd.f32 %v2681, %v4262
    %v4264 = vpop.f32.mrb[0].mxu0
    %4265 = vmatprep.mubr.f32.mxu0 0.0
    %4266 = vmatmul.mubr.f32.gmra.mrb[0].mxu0 %v3132
    %v4267 = vpop.f32.mrb[0].mxu0
    %v4268 = vadd.f32 %v2681, %v4267
    %v4269 = vpop.f32.mrb[0].mxu0
    %4270 = vmatprep.mubr.f32.mxu0 0.0
    %4271 = vmatmul.mubr.f32.gmra.mrb[0].mxu0 %v3135
    %v4272 = vpop.f32.mrb[0].mxu0
    %v4273 = vadd.f32 %v2681, %v4272
    %v4274 = vpop.f32.mrb[0].mxu0
    %4275 = vmatprep.mubr.f32.mxu0 0.0
    %4276 = vmatmul.mubr.f32.gmra.mrb[0].mxu0 %v3138
    %v4277 = vpop.f32.mrb[0].mxu0
    %v4278 = vadd.f32 %v2681, %v4277
    %v4279 = vpop.f32.mrb[0].mxu0
    %4280 = vmatprep.mubr.f32.mxu0 0.0
    %4281 = vmatmul.mubr.f32.gmra.mrb[0].mxu0 %v3141
    %v4282 = vpop.f32.mrb[0].mxu0
    %v4283 = vadd.f32 %v2681, %v4282
    %v4284 = vpop.f32.mrb[0].mxu0
    %4285 = vmatprep.mubr.f32.mxu0 0.0
    %4286 = vmatmul.mubr.f32.gmra.mrb[0].mxu0 %v3144
    %v4287 = vpop.f32.mrb[0].mxu0
    %v4288 = vadd.f32 %v2681, %v4287
    %v4289 = vpop.f32.mrb[0].mxu0
    %4290 = vmatprep.mubr.f32.mxu0 0.0
    %4291 = vmatmul.mubr.f32.gmra.mrb[0].mxu0 %v3147
    %v4292 = vpop.f32.mrb[0].mxu0
    %v4293 = vadd.f32 %v2681, %v4292
    %v4294 = vpop.f32.mrb[0].mxu0
    %4295 = vmatprep.mubr.f32.mxu0 0.0
    %4296 = vmatmul.mubr.f32.gmra.mrb[0].mxu0 %v3150
    %v4297 = vpop.f32.mrb[0].mxu0
    %v4298 = vadd.f32 %v2681, %v4297
    %v4299 = vpop.f32.mrb[0].mxu0
    %4300 = vmatprep.mubr.f32.mxu0 0.0
    %4301 = vmatmul.mubr.f32.gmra.mrb[0].mxu0 %v3153
    %v4302 = vpop.f32.mrb[0].mxu0
    %v4303 = vadd.f32 %v2681, %v4302
    %v4304 = vpop.f32.mrb[0].mxu0
    %4305 = vmatprep.mubr.f32.mxu0 0.0
    %4306 = vmatmul.mubr.f32.gmra.mrb[0].mxu0 %v3156
    %v4307 = vpop.f32.mrb[0].mxu0
    %v4308 = vadd.f32 %v2681, %v4307
    %v4309 = vpop.f32.mrb[0].mxu0
    %4310 = vmatprep.mubr.f32.mxu0 0.0
    %4311 = vmatmul.mubr.f32.gmra.mrb[0].mxu0 %v3159
    %v4312 = vpop.f32.mrb[0].mxu0
    %v4313 = vadd.f32 %v2681, %v4312
    %v4314 = vpop.f32.mrb[0].mxu0
    %4315 = vmatprep.mubr.f32.mxu0 0.0
    %4316 = vmatmul.mubr.f32.gmra.mrb[0].mxu0 %v3162
    %v4317 = vpop.f32.mrb[0].mxu0
    %v4318 = vadd.f32 %v2681, %v4317
    %v4319 = vpop.f32.mrb[0].mxu0
    %4320 = vmatprep.mubr.f32.mxu0 0.0
    %4321 = vmatmul.mubr.f32.gmra.mrb[0].mxu0 %v3165
    %v4322 = vpop.f32.mrb[0].mxu0
    %v4323 = vadd.f32 %v2681, %v4322
    %v4324 = vpop.f32.mrb[0].mxu0
    %4325 = vmatprep.mubr.f32.mxu0 0.0
    %4326 = vmatmul.mubr.f32.gmra.mrb[0].mxu0 %v3168
    %v4327 = vpop.f32.mrb[0].mxu0
    %v4328 = vadd.f32 %v2681, %v4327
    %v4329 = vpop.f32.mrb[0].mxu0
    %4330 = vmatprep.mubr.f32.mxu0 0.0
    %4331 = vmatmul.mubr.f32.gmra.mrb[0].mxu0 %v3171
    %v4332 = vpop.f32.mrb[0].mxu0
    %v4333 = vadd.f32 %v2681, %v4332
    %v4334 = vpop.f32.mrb[0].mxu0
    %4335 = vmatprep.mubr.f32.mxu0 0.0
    %4336 = vmatmul.mubr.f32.gmra.mrb[0].mxu0 %v3174
    %v4337 = vpop.f32.mrb[0].mxu0
    %v4338 = vadd.f32 %v2681, %v4337
    %v4339 = vpop.f32.mrb[0].mxu0
    %4340 = vmatprep.mubr.f32.mxu0 0.0
    %4341 = vmatmul.mubr.f32.gmra.mrb[0].mxu0 %v3177
    %v4342 = vpop.f32.mrb[0].mxu0
    %v4343 = vadd.f32 %v2681, %v4342
    %v4344 = vpop.f32.mrb[0].mxu0
    %4345 = vmatprep.mubr.f32.mxu0 0.0
    %4346 = vmatmul.mubr.f32.gmra.mrb[0].mxu0 %v3180
    %v4347 = vpop.f32.mrb[0].mxu0
    %v4348 = vadd.f32 %v2681, %v4347
    %v4349 = vpop.f32.mrb[0].mxu0
    %4350 = vmatprep.mubr.f32.mxu0 0.0
    %4351 = vmatmul.mubr.f32.gmra.mrb[0].mxu0 %v3183
    %v4352 = vpop.f32.mrb[0].mxu0
    %v4353 = vadd.f32 %v2681, %v4352
    %v4354 = vpop.f32.mrb[0].mxu0
    %4355 = vmatprep.mubr.f32.mxu0 0.0
    %4356 = vmatmul.mubr.f32.gmra.mrb[0].mxu0 %v3186
    %v4357 = vpop.f32.mrb[0].mxu0
    %v4358 = vadd.f32 %v2681, %v4357
    %v4359 = vpop.f32.mrb[0].mxu0
    %4360 = vmatprep.mubr.f32.mxu0 0.0
    %4361 = vmatmul.mubr.f32.gmra.mrb[0].mxu0 %v3189
    %v4362 = vpop.f32.mrb[0].mxu0
    %v4363 = vadd.f32 %v2681, %v4362
    %v4364 = vpop.f32.mrb[0].mxu0
    %4365 = vmatprep.mubr.f32.mxu0 0.0
    %4366 = vmatmul.mubr.f32.gmra.mrb[0].mxu0 %v3192
    %v4367 = vpop.f32.mrb[0].mxu0
    %v4368 = vadd.f32 %v2681, %v4367
    %v4369 = vpop.f32.mrb[0].mxu0
    %4370 = vmatprep.mubr.f32.mxu0 0.0
    %4371 = vmatmul.mubr.f32.gmra.mrb[0].mxu0 %v3195
    %v4372 = vpop.f32.mrb[0].mxu0
    %v4373 = vadd.f32 %v2681, %v4372
    %v4374 = vpop.f32.mrb[0].mxu0
    %4375 = vmatprep.mubr.f32.mxu0 0.0
    %4376 = vmatmul.mubr.f32.gmra.mrb[0].mxu0 %v3198
    %v4377 = vpop.f32.mrb[0].mxu0
    %v4378 = vadd.f32 %v2681, %v4377
    %v4379 = vpop.f32.mrb[0].mxu0
    %4380 = vmatprep.mubr.f32.mxu0 0.0
    %4381 = vmatmul.mubr.f32.gmra.mrb[0].mxu0 %v3201
    %v4382 = vpop.f32.mrb[0].mxu0
    %v4383 = vadd.f32 %v2681, %v4382
    %v4384 = vpop.f32.mrb[0].mxu0
    %4385 = vmatprep.mubr.f32.mxu0 0.0
    %4386 = vmatmul.mubr.f32.gmra.mrb[0].mxu0 %v3204
    %v4387 = vpop.f32.mrb[0].mxu0
    %v4388 = vadd.f32 %v2681, %v4387
    %v4389 = vpop.f32.mrb[0].mxu0
    %4390 = vmatprep.mubr.f32.mxu0 0.0
    %4391 = vmatmul.mubr.f32.gmra.mrb[0].mxu0 %v3207
    %v4392 = vpop.f32.mrb[0].mxu0
    %v4393 = vadd.f32 %v2681, %v4392
    %v4394 = vpop.f32.mrb[0].mxu0
    %4395 = vmatprep.mubr.f32.mxu0 0.0
    %4396 = vmatmul.mubr.f32.gmra.mrb[0].mxu0 %v3210
    %v4397 = vpop.f32.mrb[0].mxu0
    %v4398 = vadd.f32 %v2681, %v4397
    %v4399 = vpop.f32.mrb[0].mxu0
    %4400 = vmatprep.mubr.f32.mxu0 0.0
    %4401 = vmatmul.mubr.f32.gmra.mrb[0].mxu0 %v3213
    %v4402 = vpop.f32.mrb[0].mxu0
    %v4403 = vadd.f32 %v2681, %v4402
    %v4404 = vpop.f32.mrb[0].mxu0
    %4405 = vmatprep.mubr.f32.mxu0 0.0
    %4406 = vmatmul.mubr.f32.gmra.mrb[0].mxu0 %v3216
    %v4407 = vpop.f32.mrb[0].mxu0
    %v4408 = vadd.f32 %v2681, %v4407
    %v4409 = vpop.f32.mrb[0].mxu0
    %4410 = vmatprep.mubr.f32.mxu0 0.0
    %4411 = vmatmul.mubr.f32.gmra.mrb[0].mxu0 %v3219
    %v4412 = vpop.f32.mrb[0].mxu0
    %v4413 = vadd.f32 %v2681, %v4412
    %v4414 = vpop.f32.mrb[0].mxu0
    %4415 = vmatprep.mubr.f32.mxu0 0.0
    %4416 = vmatmul.mubr.f32.gmra.mrb[0].mxu0 %v3222
    %v4417 = vpop.f32.mrb[0].mxu0
    %v4418 = vadd.f32 %v2681, %v4417
    %v4419 = vpop.f32.mrb[0].mxu0
    %4420 = vmatprep.mubr.f32.mxu0 0.0
    %4421 = vmatmul.mubr.f32.gmra.mrb[0].mxu0 %v3225
    %v4422 = vpop.f32.mrb[0].mxu0
    %v4423 = vadd.f32 %v2681, %v4422
    %v4424 = vpop.f32.mrb[0].mxu0
    %4425 = vmatprep.mubr.f32.mxu0 0.0
    %4426 = vmatmul.mubr.f32.gmra.mrb[0].mxu0 %v3228
    %v4427 = vpop.f32.mrb[0].mxu0
    %v4428 = vadd.f32 %v2681, %v4427
    %v4429 = vpop.f32.mrb[0].mxu0
    %4430 = vmatprep.mubr.f32.mxu0 0.0
    %4431 = vmatmul.mubr.f32.gmra.mrb[0].mxu0 %v3231
    %v4432 = vpop.f32.mrb[0].mxu0
    %v4433 = vadd.f32 %v2681, %v4432
    %v4434 = vpop.f32.mrb[0].mxu0
    %4435 = vmatprep.mubr.f32.mxu0 0.0
    %4436 = vmatmul.mubr.f32.gmra.mrb[0].mxu0 %v3234
    %v4437 = vpop.f32.mrb[0].mxu0
    %v4438 = vadd.f32 %v2681, %v4437
    %v4439 = vpop.f32.mrb[0].mxu0
    %4440 = vmatprep.mubr.f32.mxu0 0.0
    %4441 = vmatmul.mubr.f32.gmra.mrb[0].mxu0 %v3237
    %v4442 = vpop.f32.mrb[0].mxu0
    %v4443 = vadd.f32 %v2681, %v4442
    %v4444 = vpop.f32.mrb[0].mxu0
    %4445 = vmatprep.mubr.f32.mxu0 0.0
    %4446 = vmatmul.mubr.f32.gmra.mrb[0].mxu0 %v3240
    %v4447 = vpop.f32.mrb[0].mxu0
    %v4448 = vadd.f32 %v2681, %v4447
    %v4449 = vpop.f32.mrb[0].mxu0
    %4450 = vmatprep.mubr.f32.mxu0 0.0
    %4451 = vmatmul.mubr.f32.gmra.mrb[0].mxu0 %v3243
    %v4452 = vpop.f32.mrb[0].mxu0
    %v4453 = vadd.f32 %v2681, %v4452
    %v4454 = vpop.f32.mrb[0].mxu0
    %4455 = vmatprep.mubr.f32.mxu0 0.0
    %4456 = vmatmul.mubr.f32.gmra.mrb[0].mxu0 %v3246
    %v4457 = vpop.f32.mrb[0].mxu0
    %v4458 = vadd.f32 %v2681, %v4457
    %v4459 = vpop.f32.mrb[0].mxu0
    %4460 = vmatprep.mubr.f32.mxu0 0.0
    %4461 = vmatmul.mubr.f32.gmra.mrb[0].mxu0 %v3249
    %v4462 = vpop.f32.mrb[0].mxu0
    %v4463 = vadd.f32 %v2681, %v4462
    %v4464 = vpop.f32.mrb[0].mxu0
    %4465 = vmatprep.mubr.f32.mxu0 0.0
    %4466 = vmatmul.mubr.f32.gmra.mrb[0].mxu0 %v3252
    %v4467 = vpop.f32.mrb[0].mxu0
    %v4468 = vadd.f32 %v2681, %v4467
    %v4469 = vpop.f32.mrb[0].mxu0
    %4470 = vmatprep.mubr.f32.mxu0 0.0
    %4471 = vmatmul.mubr.f32.gmra.mrb[0].mxu0 %v3255
    %v4472 = vpop.f32.mrb[0].mxu0
    %v4473 = vadd.f32 %v2681, %v4472
    %v4474 = vpop.f32.mrb[0].mxu0
    %4475 = vmatprep.mubr.f32.mxu0 0.0
    %4476 = vmatmul.mubr.f32.gmra.mrb[0].mxu0 %v3258
    %v4477 = vpop.f32.mrb[0].mxu0
    %v4478 = vadd.f32 %v2681, %v4477
    %v4479 = vpop.f32.mrb[0].mxu0
    %4480 = vmatprep.mubr.f32.mxu0 0.0
    %4481 = vmatmul.mubr.f32.gmra.mrb[0].mxu0 %v3261
    %v4482 = vpop.f32.mrb[0].mxu0
    %v4483 = vadd.f32 %v2681, %v4482
    %v4484 = vpop.f32.mrb[0].mxu0
    %4485 = vmatprep.mubr.f32.mxu0 0.0
    %4486 = vmatmul.mubr.f32.gmra.mrb[0].mxu0 %v3264
    %v4487 = vpop.f32.mrb[0].mxu0
    %v4488 = vadd.f32 %v2681, %v4487
    %v4489 = vpop.f32.mrb[0].mxu0
    %4490 = vmatprep.mubr.f32.mxu0 0.0
    %4491 = vmatmul.mubr.f32.gmra.mrb[0].mxu0 %v3267
    %v4492 = vpop.f32.mrb[0].mxu0
    %v4493 = vadd.f32 %v2681, %v4492
    %v4494 = vpop.f32.mrb[0].mxu0
    %4495 = vmatprep.mubr.f32.mxu0 0.0
    %4496 = vmatmul.mubr.f32.gmra.mrb[0].mxu0 %v3270
    %v4497 = vpop.f32.mrb[0].mxu0
    %v4498 = vadd.f32 %v2681, %v4497
    %v4499 = vpop.f32.mrb[0].mxu0
    %4500 = vmatprep.mubr.f32.mxu0 0.0
    %4501 = vmatmul.mubr.f32.gmra.mrb[0].mxu0 %v3273
    %v4502 = vpop.f32.mrb[0].mxu0
    %v4503 = vadd.f32 %v2681, %v4502
    %v4504 = vpop.f32.mrb[0].mxu0
    %4505 = vmatprep.mubr.f32.mxu0 0.0
    %4506 = vmatmul.mubr.f32.gmra.mrb[0].mxu0 %v3276
    %v4507 = vpop.f32.mrb[0].mxu0
    %v4508 = vadd.f32 %v2681, %v4507
    %v4509 = vpop.f32.mrb[0].mxu0
    %4510 = vmatprep.mubr.f32.mxu0 0.0
    %4511 = vmatmul.mubr.f32.gmra.mrb[0].mxu0 %v3279
    %v4512 = vpop.f32.mrb[0].mxu0
    %v4513 = vadd.f32 %v2681, %v4512
    %v4514 = vpop.f32.mrb[0].mxu0
    %4515 = vmatprep.mubr.f32.mxu0 0.0
    %4516 = vmatmul.mubr.f32.gmra.mrb[0].mxu0 %v3282
    %v4517 = vpop.f32.mrb[0].mxu0
    %v4518 = vadd.f32 %v2681, %v4517
    %v4519 = vpop.f32.mrb[0].mxu0
    %4520 = vmatprep.mubr.f32.mxu0 0.0
    %4521 = vmatmul.mubr.f32.gmra.mrb[0].mxu0 %v3285
    %v4522 = vpop.f32.mrb[0].mxu0
    %v4523 = vadd.f32 %v2681, %v4522
    %v4524 = vpop.f32.mrb[0].mxu0
    %4525 = vmatprep.mubr.f32.mxu0 0.0
    %4526 = vmatmul.mubr.f32.gmra.mrb[0].mxu0 %v3288
    %v4527 = vpop.f32.mrb[0].mxu0
    %v4528 = vadd.f32 %v2681, %v4527
    %v4529 = vpop.f32.mrb[0].mxu0
    %4530 = vmatprep.mubr.f32.mxu0 0.0
    %4531 = vmatmul.mubr.f32.gmra.mrb[0].mxu0 %v3291
    %v4532 = vpop.f32.mrb[0].mxu0
    %v4533 = vadd.f32 %v2681, %v4532
    %v4534 = vpop.f32.mrb[0].mxu0
    %4535 = vmatprep.mubr.f32.mxu0 0.0
    %4536 = vmatmul.mubr.f32.gmra.mrb[0].mxu0 %v3294
    %v4537 = vpop.f32.mrb[0].mxu0
    %v4538 = vadd.f32 %v2681, %v4537
    %v4539 = vpop.f32.mrb[0].mxu0
    %4540 = vmatprep.mubr.f32.mxu0 0.0
    %4541 = vmatmul.mubr.f32.gmra.mrb[0].mxu0 %v3297
    %v4542 = vpop.f32.mrb[0].mxu0
    %v4543 = vadd.f32 %v2681, %v4542
    %v4544 = vpop.f32.mrb[0].mxu0
    %4545 = vmatprep.mubr.f32.mxu0 0.0
    %4546 = vmatmul.mubr.f32.gmra.mrb[0].mxu0 %v3300
    %v4547 = vpop.f32.mrb[0].mxu0
    %v4548 = vadd.f32 %v2681, %v4547
    %v4549 = vpop.f32.mrb[0].mxu0
    %4550 = vmatprep.mubr.f32.mxu0 0.0
    %4551 = vmatmul.mubr.f32.gmra.mrb[0].mxu0 %v3303
    %v4552 = vpop.f32.mrb[0].mxu0
    %v4553 = vadd.f32 %v2681, %v4552
    %v4554 = vpop.f32.mrb[0].mxu0
    %4555 = vmatprep.mubr.f32.mxu0 0.0
    %4556 = vmatmul.mubr.f32.gmra.mrb[0].mxu0 %v3306
    %v4557 = vpop.f32.mrb[0].mxu0
    %v4558 = vadd.f32 %v2681, %v4557
    %v4559 = vpop.f32.mrb[0].mxu0
    %4560 = vmatprep.mubr.f32.mxu0 0.0
    %4561 = vmatmul.mubr.f32.gmra.mrb[0].mxu0 %v3309
    %v4562 = vpop.f32.mrb[0].mxu0
    %v4563 = vadd.f32 %v2681, %v4562
    %v4564 = vpop.f32.mrb[0].mxu0
    %4565 = vmatprep.mubr.f32.mxu0 0.0
    %4566 = vmatmul.mubr.f32.gmra.mrb[0].mxu0 %v3312
    %v4567 = vpop.f32.mrb[0].mxu0
    %v4568 = vadd.f32 %v2681, %v4567
    %v4569 = vpop.f32.mrb[0].mxu0
    %4570 = vmatprep.mubr.f32.mxu0 0.0
    %4571 = vmatmul.mubr.f32.gmra.mrb[0].mxu0 %v3315
    %v4572 = vpop.f32.mrb[0].mxu0
    %v4573 = vadd.f32 %v2681, %v4572
    %v4574 = vpop.f32.mrb[0].mxu0
    %4575 = vmatprep.mubr.f32.mxu0 0.0
    %4576 = vmatmul.mubr.f32.gmra.mrb[0].mxu0 %v3318
    %v4577 = vpop.f32.mrb[0].mxu0
    %v4578 = vadd.f32 %v2681, %v4577
    %v4579 = vpop.f32.mrb[0].mxu0
    %4580 = vmatprep.mubr.f32.mxu0 0.0
    %4581 = vmatmul.mubr.f32.gmra.mrb[0].mxu0 %v3321
    %v4582 = vpop.f32.mrb[0].mxu0
    %v4583 = vadd.f32 %v2681, %v4582
    %v4584 = vpop.f32.mrb[0].mxu0
    %4585 = vmatprep.mubr.f32.mxu0 0.0
    %4586 = vmatmul.mubr.f32.gmra.mrb[0].mxu0 %v3324
    %v4587 = vpop.f32.mrb[0].mxu0
    %v4588 = vadd.f32 %v2681, %v4587
    %v4589 = vpop.f32.mrb[0].mxu0
    %4590 = vmatprep.mubr.f32.mxu0 0.0
    %4591 = vmatmul.mubr.f32.gmra.mrb[0].mxu0 %v3327
    %v4592 = vpop.f32.mrb[0].mxu0
    %v4593 = vadd.f32 %v2681, %v4592
    %v4594 = vpop.f32.mrb[0].mxu0
    %4595 = vmatprep.mubr.f32.mxu0 0.0
    %4596 = vmatmul.mubr.f32.gmra.mrb[0].mxu0 %v3330
    %v4597 = vpop.f32.mrb[0].mxu0
    %v4598 = vadd.f32 %v2681, %v4597
    %v4599 = vpop.f32.mrb[0].mxu0
    %4600 = vmatprep.mubr.f32.mxu0 0.0
    %4601 = vmatmul.mubr.f32.gmra.mrb[0].mxu0 %v3333
    %v4602 = vpop.f32.mrb[0].mxu0
    %v4603 = vadd.f32 %v2681, %v4602
    %v4604 = vpop.f32.mrb[0].mxu0
    %4605 = vmatprep.mubr.f32.mxu0 0.0
    %4606 = vmatmul.mubr.f32.gmra.mrb[0].mxu0 %v3336
    %v4607 = vpop.f32.mrb[0].mxu0
    %v4608 = vadd.f32 %v2681, %v4607
    %v4609 = vpop.f32.mrb[0].mxu0
    %4610 = vmatprep.mubr.f32.mxu0 0.0
    %4611 = vmatmul.mubr.f32.gmra.mrb[0].mxu0 %v3339
    %v4612 = vpop.f32.mrb[0].mxu0
    %v4613 = vadd.f32 %v2681, %v4612
    %v4614 = vpop.f32.mrb[0].mxu0
    %4615 = vmatprep.mubr.f32.mxu0 0.0
    %4616 = vmatmul.mubr.f32.gmra.mrb[0].mxu0 %v3342
    %v4617 = vpop.f32.mrb[0].mxu0
    %v4618 = vadd.f32 %v2681, %v4617
    %v4619 = vpop.f32.mrb[0].mxu0
    %4620 = vmatprep.mubr.f32.mxu0 0.0
    %4621 = vmatmul.mubr.f32.gmra.mrb[0].mxu0 %v3345
    %v4622 = vpop.f32.mrb[0].mxu0
    %v4623 = vadd.f32 %v2681, %v4622
    %v4624 = vpop.f32.mrb[0].mxu0
    %4625 = vmatprep.mubr.f32.mxu0 0.0
    %4626 = vmatmul.mubr.f32.gmra.mrb[0].mxu0 %v3348
    %v4627 = vpop.f32.mrb[0].mxu0
    %v4628 = vadd.f32 %v2681, %v4627
    %v4629 = vpop.f32.mrb[0].mxu0
    %4630 = vmatprep.mubr.f32.mxu0 0.0
    %4631 = vmatmul.mubr.f32.gmra.mrb[0].mxu0 %v3351
    %v4632 = vpop.f32.mrb[0].mxu0
    %v4633 = vadd.f32 %v2681, %v4632
    %v4634 = vpop.f32.mrb[0].mxu0
    %4635 = vmatprep.mubr.f32.mxu0 0.0
    %4636 = vmatmul.mubr.f32.gmra.mrb[0].mxu0 %v3354
    %v4637 = vpop.f32.mrb[0].mxu0
    %v4638 = vadd.f32 %v2681, %v4637
    %v4639 = vpop.f32.mrb[0].mxu0
    %4640 = vmatprep.mubr.f32.mxu0 0.0
    %4641 = vmatmul.mubr.f32.gmra.mrb[0].mxu0 %v3357
    %v4642 = vpop.f32.mrb[0].mxu0
    %v4643 = vadd.f32 %v2681, %v4642
    %v4644 = vpop.f32.mrb[0].mxu0
    %4645 = vmatprep.mubr.f32.mxu0 0.0
    %4646 = vmatmul.mubr.f32.gmra.mrb[0].mxu0 %v3360
    %v4647 = vpop.f32.mrb[0].mxu0
    %v4648 = vadd.f32 %v2681, %v4647
    %v4649 = vpop.f32.mrb[0].mxu0
    %4650 = vmatprep.mubr.f32.mxu0 0.0
    %4651 = vmatmul.mubr.f32.gmra.mrb[0].mxu0 %v3363
    %v4652 = vpop.f32.mrb[0].mxu0
    %v4653 = vadd.f32 %v2681, %v4652
    %v4654 = vpop.f32.mrb[0].mxu0
    %4655 = vmatprep.mubr.f32.mxu0 0.0
    %4656 = vmatmul.mubr.f32.gmra.mrb[0].mxu0 %v3366
    %v4657 = vpop.f32.mrb[0].mxu0
    %v4658 = vadd.f32 %v2681, %v4657
    %v4659 = vpop.f32.mrb[0].mxu0
    %4660 = vmatprep.mubr.f32.mxu0 0.0
    %4661 = vmatmul.mubr.f32.gmra.mrb[0].mxu0 %v3369
    %v4662 = vpop.f32.mrb[0].mxu0
    %v4663 = vadd.f32 %v2681, %v4662
    %v4664 = vpop.f32.mrb[0].mxu0
    %4665 = vmatprep.mubr.f32.mxu0 0.0
    %4666 = vmatmul.mubr.f32.gmra.mrb[0].mxu0 %v3372
    %v4667 = vpop.f32.mrb[0].mxu0
    %v4668 = vadd.f32 %v2681, %v4667
    %v4669 = vpop.f32.mrb[0].mxu0
    %4670 = vmatprep.mubr.f32.mxu0 0.0
    %4671 = vmatmul.mubr.f32.gmra.mrb[0].mxu0 %v3375
    %v4672 = vpop.f32.mrb[0].mxu0
    %v4673 = vadd.f32 %v2681, %v4672
    %v4674 = vpop.f32.mrb[0].mxu0
    %4675 = vmatprep.mubr.f32.mxu0 0.0
    %4676 = vmatmul.mubr.f32.gmra.mrb[0].mxu0 %v3378
    %v4677 = vpop.f32.mrb[0].mxu0
    %v4678 = vadd.f32 %v2681, %v4677
    %v4679 = vpop.f32.mrb[0].mxu0
    %4680 = vmatprep.mubr.f32.mxu0 0.0
    %4681 = vmatmul.mubr.f32.gmra.mrb[0].mxu0 %v3381
    %v4682 = vpop.f32.mrb[0].mxu0
    %v4683 = vadd.f32 %v2681, %v4682
    %v4684 = vpop.f32.mrb[0].mxu0
    %4685 = vmatprep.mubr.f32.mxu0 0.0
    %4686 = vmatmul.mubr.f32.gmra.mrb[0].mxu0 %v3384
    %v4687 = vpop.f32.mrb[0].mxu0
    %v4688 = vadd.f32 %v2681, %v4687
    %v4689 = vpop.f32.mrb[0].mxu0
    %4690 = vmatprep.mubr.f32.mxu0 0.0
    %4691 = vmatmul.mubr.f32.gmra.mrb[0].mxu0 %v3387
    %v4692 = vpop.f32.mrb[0].mxu0
    %v4693 = vadd.f32 %v2681, %v4692
    %v4694 = vpop.f32.mrb[0].mxu0
    %4695 = vmatprep.mubr.f32.mxu0 0.0
    %4696 = vmatmul.mubr.f32.gmra.mrb[0].mxu0 %v3390
    %v4697 = vpop.f32.mrb[0].mxu0
    %v4698 = vadd.f32 %v2681, %v4697
    %v4699 = vpop.f32.mrb[0].mxu0
    %4700 = vmatprep.mubr.f32.mxu0 0.0
    %4701 = vmatmul.mubr.f32.gmra.mrb[0].mxu0 %v3393
    %v4702 = vpop.f32.mrb[0].mxu0
    %v4703 = vadd.f32 %v2681, %v4702
    %v4704 = vpop.f32.mrb[0].mxu0
    %4705 = vmatprep.mubr.f32.mxu0 0.0
    %4706 = vmatmul.mubr.f32.gmra.mrb[0].mxu0 %v3396
    %v4707 = vpop.f32.mrb[0].mxu0
    %v4708 = vadd.f32 %v2681, %v4707
    %v4709 = vpop.f32.mrb[0].mxu0
    %4710 = vmatprep.mubr.f32.mxu0 0.0
    %4711 = vmatmul.mubr.f32.gmra.mrb[0].mxu0 %v3399
    %v4712 = vpop.f32.mrb[0].mxu0
    %v4713 = vadd.f32 %v2681, %v4712
    %v4714 = vpop.f32.mrb[0].mxu0
    %4715 = vmatprep.mubr.f32.mxu0 0.0
    %4716 = vmatmul.mubr.f32.gmra.mrb[0].mxu0 %v3402
    %v4717 = vpop.f32.mrb[0].mxu0
    %v4718 = vadd.f32 %v2681, %v4717
    %v4719 = vpop.f32.mrb[0].mxu0
    %4720 = vmatprep.mubr.f32.mxu0 0.0
    %4721 = vmatmul.mubr.f32.gmra.mrb[0].mxu0 %v3405
    %v4722 = vpop.f32.mrb[0].mxu0
    %v4723 = vadd.f32 %v2681, %v4722
    %v4724 = vpop.f32.mrb[0].mxu0
    %4725 = vmatprep.mubr.f32.mxu0 0.0
    %4726 = vmatmul.mubr.f32.gmra.mrb[0].mxu0 %v3408
    %v4727 = vpop.f32.mrb[0].mxu0
    %v4728 = vadd.f32 %v2681, %v4727
    %v4729 = vpop.f32.mrb[0].mxu0
    %4730 = vmatprep.mubr.f32.mxu0 0.0
    %4731 = vmatmul.mubr.f32.gmra.mrb[0].mxu0 %v3411
    %v4732 = vpop.f32.mrb[0].mxu0
    %v4733 = vadd.f32 %v2681, %v4732
    %v4734 = vpop.f32.mrb[0].mxu0
    %4735 = vmatprep.mubr.f32.mxu0 0.0
    %4736 = vmatmul.mubr.f32.gmra.mrb[0].mxu0 %v3414
    %v4737 = vpop.f32.mrb[0].mxu0
    %v4738 = vadd.f32 %v2681, %v4737
    %v4739 = vpop.f32.mrb[0].mxu0
    %4740 = vmatprep.mubr.f32.mxu0 0.0
    %4741 = vmatmul.mubr.f32.gmra.mrb[0].mxu0 %v3417
    %v4742 = vpop.f32.mrb[0].mxu0
    %v4743 = vadd.f32 %v2681, %v4742
    %v4744 = vpop.f32.mrb[0].mxu0
    %4745 = vmatprep.mubr.f32.mxu0 0.0
    %4746 = vmatmul.mubr.f32.gmra.mrb[0].mxu0 %v3420
    %v4747 = vpop.f32.mrb[0].mxu0
    %v4748 = vadd.f32 %v2681, %v4747
    %v4749 = vpop.f32.mrb[0].mxu0
    %4750 = vmatprep.mubr.f32.mxu0 0.0
    %4751 = vmatmul.mubr.f32.gmra.mrb[0].mxu0 %v3423
    %v4752 = vpop.f32.mrb[0].mxu0
    %v4753 = vadd.f32 %v2681, %v4752
    %v4754 = vpop.f32.mrb[0].mxu0
    %4755 = vmatprep.mubr.f32.mxu0 0.0
    %4756 = vmatmul.mubr.f32.gmra.mrb[0].mxu0 %v3426
    %v4757 = vpop.f32.mrb[0].mxu0
    %v4758 = vadd.f32 %v2681, %v4757
    %v4759 = vpop.f32.mrb[0].mxu0
    %4760 = vmatprep.mubr.f32.mxu0 0.0
    %4761 = vmatmul.mubr.f32.gmra.mrb[0].mxu0 %v3429
    %v4762 = vpop.f32.mrb[0].mxu0
    %v4763 = vadd.f32 %v2681, %v4762
    %v4764 = vpop.f32.mrb[0].mxu0
    %4765 = vmatprep.mubr.f32.mxu0 0.0
    %4766 = vmatmul.mubr.f32.gmra.mrb[0].mxu0 %v3432
    %v4767 = vpop.f32.mrb[0].mxu0
    %v4768 = vadd.f32 %v2681, %v4767
    %v4769 = vpop.f32.mrb[0].mxu0
    %4770 = vmatprep.mubr.f32.mxu0 0.0
    %4771 = vmatmul.mubr.f32.gmra.mrb[0].mxu0 %v3435
    %v4772 = vpop.f32.mrb[0].mxu0
    %v4773 = vadd.f32 %v2681, %v4772
    %v4774 = vpop.f32.mrb[0].mxu0
    %4775 = vmatprep.mubr.f32.mxu0 0.0
    %4776 = vmatmul.mubr.f32.gmra.mrb[0].mxu0 %v3438
    %v4777 = vpop.f32.mrb[0].mxu0
    %v4778 = vadd.f32 %v2681, %v4777
    %v4779 = vpop.f32.mrb[0].mxu0
    %4780 = vmatprep.mubr.f32.mxu0 0.0
    %4781 = vmatmul.mubr.f32.gmra.mrb[0].mxu0 %v3441
    %v4782 = vpop.f32.mrb[0].mxu0
    %v4783 = vadd.f32 %v2681, %v4782
    %v4784 = vpop.f32.mrb[0].mxu0
    %4785 = vmatprep.mubr.f32.mxu0 0.0
    %4786 = vmatmul.mubr.f32.gmra.mrb[0].mxu0 %v3444
    %v4787 = vpop.f32.mrb[0].mxu0
    %v4788 = vadd.f32 %v2681, %v4787
    %v4789 = vpop.f32.mrb[0].mxu0
    %4790 = vmatprep.mubr.f32.mxu0 0.0
    %4791 = vmatmul.mubr.f32.gmra.mrb[0].mxu0 %v3447
    %v4792 = vpop.f32.mrb[0].mxu0
    %v4793 = vadd.f32 %v2681, %v4792
    %v4794 = vpop.f32.mrb[0].mxu0
    %4795 = vmatprep.mubr.f32.mxu0 0.0
    %4796 = vmatmul.mubr.f32.gmra.mrb[0].mxu0 %v3450
    %v4797 = vpop.f32.mrb[0].mxu0
    %v4798 = vadd.f32 %v2681, %v4797
    %v4799 = vpop.f32.mrb[0].mxu0
    %4800 = vdwg.mxu0
    %v4801 = vmax.f32 %v3523, 0.0
    %v4802 = vmax.f32 %v3528, 0.0
    %v4803 = vmax.f32 %v3533, 0.0
    %v4804 = vmax.f32 %v3538, 0.0
    %v4805 = vmax.f32 %v3543, 0.0
    %v4806 = vmax.f32 %v3548, 0.0
    %v4807 = vmax.f32 %v3553, 0.0
    %v4808 = vmax.f32 %v3558, 0.0
    %v4809 = vmax.f32 %v3563, 0.0
    %v4810 = vmax.f32 %v3568, 0.0
    %v4811 = vmax.f32 %v3573, 0.0
    %v4812 = vmax.f32 %v3578, 0.0
    %v4813 = vmax.f32 %v3583, 0.0
    %v4814 = vmax.f32 %v3588, 0.0
    %v4815 = vmax.f32 %v3593, 0.0
    %v4816 = vmax.f32 %v3598, 0.0
    %v4817 = vmax.f32 %v3603, 0.0
    %v4818 = vmax.f32 %v3608, 0.0
    %v4819 = vmax.f32 %v3613, 0.0
    %v4820 = vmax.f32 %v3618, 0.0
    %v4821 = vmax.f32 %v3623, 0.0
    %v4822 = vmax.f32 %v3628, 0.0
    %v4823 = vmax.f32 %v3633, 0.0
    %v4824 = vmax.f32 %v3638, 0.0
    %v4825 = vmax.f32 %v3643, 0.0
    %v4826 = vmax.f32 %v3648, 0.0
    %v4827 = vmax.f32 %v3653, 0.0
    %v4828 = vmax.f32 %v3658, 0.0
    %v4829 = vmax.f32 %v3663, 0.0
    %v4830 = vmax.f32 %v3668, 0.0
    %v4831 = vmax.f32 %v3673, 0.0
    %v4832 = vmax.f32 %v3678, 0.0
    %v4833 = vmax.f32 %v3683, 0.0
    %v4834 = vmax.f32 %v3688, 0.0
    %v4835 = vmax.f32 %v3693, 0.0
    %v4836 = vmax.f32 %v3698, 0.0
    %v4837 = vmax.f32 %v3703, 0.0
    %v4838 = vmax.f32 %v3708, 0.0
    %v4839 = vmax.f32 %v3713, 0.0
    %v4840 = vmax.f32 %v3718, 0.0
    %v4841 = vmax.f32 %v3723, 0.0
    %v4842 = vmax.f32 %v3728, 0.0
    %v4843 = vmax.f32 %v3733, 0.0
    %v4844 = vmax.f32 %v3738, 0.0
    %v4845 = vmax.f32 %v3743, 0.0
    %v4846 = vmax.f32 %v3748, 0.0
    %v4847 = vmax.f32 %v3753, 0.0
    %v4848 = vmax.f32 %v3758, 0.0
    %v4849 = vmax.f32 %v3763, 0.0
    %v4850 = vmax.f32 %v3768, 0.0
    %v4851 = vmax.f32 %v3773, 0.0
    %v4852 = vmax.f32 %v3778, 0.0
    %v4853 = vmax.f32 %v3783, 0.0
    %v4854 = vmax.f32 %v3788, 0.0
    %v4855 = vmax.f32 %v3793, 0.0
    %v4856 = vmax.f32 %v3798, 0.0
    %v4857 = vmax.f32 %v3803, 0.0
    %v4858 = vmax.f32 %v3808, 0.0
    %v4859 = vmax.f32 %v3813, 0.0
    %v4860 = vmax.f32 %v3818, 0.0
    %v4861 = vmax.f32 %v3823, 0.0
    %v4862 = vmax.f32 %v3828, 0.0
    %v4863 = vmax.f32 %v3833, 0.0
    %v4864 = vmax.f32 %v3838, 0.0
    %v4865 = vmax.f32 %v3843, 0.0
    %v4866 = vmax.f32 %v3848, 0.0
    %v4867 = vmax.f32 %v3853, 0.0
    %v4868 = vmax.f32 %v3858, 0.0
    %v4869 = vmax.f32 %v3863, 0.0
    %v4870 = vmax.f32 %v3868, 0.0
    %v4871 = vmax.f32 %v3873, 0.0
    %v4872 = vmax.f32 %v3878, 0.0
    %v4873 = vmax.f32 %v3883, 0.0
    %v4874 = vmax.f32 %v3888, 0.0
    %v4875 = vmax.f32 %v3893, 0.0
    %v4876 = vmax.f32 %v3898, 0.0
    %v4877 = vmax.f32 %v3903, 0.0
    %v4878 = vmax.f32 %v3908, 0.0
    %v4879 = vmax.f32 %v3913, 0.0
    %v4880 = vmax.f32 %v3918, 0.0
    %v4881 = vmax.f32 %v3923, 0.0
    %v4882 = vmax.f32 %v3928, 0.0
    %v4883 = vmax.f32 %v3933, 0.0
    %v4884 = vmax.f32 %v3938, 0.0
    %v4885 = vmax.f32 %v3943, 0.0
    %v4886 = vmax.f32 %v3948, 0.0
    %v4887 = vmax.f32 %v3953, 0.0
    %v4888 = vmax.f32 %v3958, 0.0
    %v4889 = vmax.f32 %v3963, 0.0
    %v4890 = vmax.f32 %v3968, 0.0
    %v4891 = vmax.f32 %v3973, 0.0
    %v4892 = vmax.f32 %v3978, 0.0
    %v4893 = vmax.f32 %v3983, 0.0
    %v4894 = vmax.f32 %v3988, 0.0
    %v4895 = vmax.f32 %v3993, 0.0
    %v4896 = vmax.f32 %v3998, 0.0
    %v4897 = vmax.f32 %v4003, 0.0
    %v4898 = vmax.f32 %v4008, 0.0
    %v4899 = vmax.f32 %v4013, 0.0
    %v4900 = vmax.f32 %v4018, 0.0
    %v4901 = vmax.f32 %v4023, 0.0
    %v4902 = vmax.f32 %v4028, 0.0
    %v4903 = vmax.f32 %v4033, 0.0
    %v4904 = vmax.f32 %v4038, 0.0
    %v4905 = vmax.f32 %v4043, 0.0
    %v4906 = vmax.f32 %v4048, 0.0
    %v4907 = vmax.f32 %v4053, 0.0
    %v4908 = vmax.f32 %v4058, 0.0
    %v4909 = vmax.f32 %v4063, 0.0
    %v4910 = vmax.f32 %v4068, 0.0
    %v4911 = vmax.f32 %v4073, 0.0
    %v4912 = vmax.f32 %v4078, 0.0
    %v4913 = vmax.f32 %v4083, 0.0
    %v4914 = vmax.f32 %v4088, 0.0
    %v4915 = vmax.f32 %v4093, 0.0
    %v4916 = vmax.f32 %v4098, 0.0
    %v4917 = vmax.f32 %v4103, 0.0
    %v4918 = vmax.f32 %v4108, 0.0
    %v4919 = vmax.f32 %v4113, 0.0
    %v4920 = vmax.f32 %v4118, 0.0
    %v4921 = vmax.f32 %v4123, 0.0
    %v4922 = vmax.f32 %v4128, 0.0
    %v4923 = vmax.f32 %v4133, 0.0
    %v4924 = vmax.f32 %v4138, 0.0
    %v4925 = vmax.f32 %v4143, 0.0
    %v4926 = vmax.f32 %v4148, 0.0
    %v4927 = vmax.f32 %v4153, 0.0
    %v4928 = vmax.f32 %v4158, 0.0
    %v4929 = vmax.f32 %v4163, 0.0
    %v4930 = vmax.f32 %v4168, 0.0
    %v4931 = vmax.f32 %v4173, 0.0
    %v4932 = vmax.f32 %v4178, 0.0
    %v4933 = vmax.f32 %v4183, 0.0
    %v4934 = vmax.f32 %v4188, 0.0
    %v4935 = vmax.f32 %v4193, 0.0
    %v4936 = vmax.f32 %v4198, 0.0
    %v4937 = vmax.f32 %v4203, 0.0
    %v4938 = vmax.f32 %v4208, 0.0
    %v4939 = vmax.f32 %v4213, 0.0
    %v4940 = vmax.f32 %v4218, 0.0
    %v4941 = vmax.f32 %v4223, 0.0
    %v4942 = vmax.f32 %v4228, 0.0
    %v4943 = vmax.f32 %v4233, 0.0
    %v4944 = vmax.f32 %v4238, 0.0
    %v4945 = vmax.f32 %v4243, 0.0
    %v4946 = vmax.f32 %v4248, 0.0
    %v4947 = vmax.f32 %v4253, 0.0
    %v4948 = vmax.f32 %v4258, 0.0
    %v4949 = vmax.f32 %v4263, 0.0
    %v4950 = vmax.f32 %v4268, 0.0
    %v4951 = vmax.f32 %v4273, 0.0
    %v4952 = vmax.f32 %v4278, 0.0
    %v4953 = vmax.f32 %v4283, 0.0
    %v4954 = vmax.f32 %v4288, 0.0
    %v4955 = vmax.f32 %v4293, 0.0
    %v4956 = vmax.f32 %v4298, 0.0
    %v4957 = vmax.f32 %v4303, 0.0
    %v4958 = vmax.f32 %v4308, 0.0
    %v4959 = vmax.f32 %v4313, 0.0
    %v4960 = vmax.f32 %v4318, 0.0
    %v4961 = vmax.f32 %v4323, 0.0
    %v4962 = vmax.f32 %v4328, 0.0
    %v4963 = vmax.f32 %v4333, 0.0
    %v4964 = vmax.f32 %v4338, 0.0
    %v4965 = vmax.f32 %v4343, 0.0
    %v4966 = vmax.f32 %v4348, 0.0
    %v4967 = vmax.f32 %v4353, 0.0
    %v4968 = vmax.f32 %v4358, 0.0
    %v4969 = vmax.f32 %v4363, 0.0
    %v4970 = vmax.f32 %v4368, 0.0
    %v4971 = vmax.f32 %v4373, 0.0
    %v4972 = vmax.f32 %v4378, 0.0
    %v4973 = vmax.f32 %v4383, 0.0
    %v4974 = vmax.f32 %v4388, 0.0
    %v4975 = vmax.f32 %v4393, 0.0
    %v4976 = vmax.f32 %v4398, 0.0
    %v4977 = vmax.f32 %v4403, 0.0
    %v4978 = vmax.f32 %v4408, 0.0
    %v4979 = vmax.f32 %v4413, 0.0
    %v4980 = vmax.f32 %v4418, 0.0
    %v4981 = vmax.f32 %v4423, 0.0
    %v4982 = vmax.f32 %v4428, 0.0
    %v4983 = vmax.f32 %v4433, 0.0
    %v4984 = vmax.f32 %v4438, 0.0
    %v4985 = vmax.f32 %v4443, 0.0
    %v4986 = vmax.f32 %v4448, 0.0
    %v4987 = vmax.f32 %v4453, 0.0
    %v4988 = vmax.f32 %v4458, 0.0
    %v4989 = vmax.f32 %v4463, 0.0
    %v4990 = vmax.f32 %v4468, 0.0
    %v4991 = vmax.f32 %v4473, 0.0
    %v4992 = vmax.f32 %v4478, 0.0
    %v4993 = vmax.f32 %v4483, 0.0
    %v4994 = vmax.f32 %v4488, 0.0
    %v4995 = vmax.f32 %v4493, 0.0
    %v4996 = vmax.f32 %v4498, 0.0
    %v4997 = vmax.f32 %v4503, 0.0
    %v4998 = vmax.f32 %v4508, 0.0
    %v4999 = vmax.f32 %v4513, 0.0
    %v5000 = vmax.f32 %v4518, 0.0
    %v5001 = vmax.f32 %v4523, 0.0
    %v5002 = vmax.f32 %v4528, 0.0
    %v5003 = vmax.f32 %v4533, 0.0
    %v5004 = vmax.f32 %v4538, 0.0
    %v5005 = vmax.f32 %v4543, 0.0
    %v5006 = vmax.f32 %v4548, 0.0
    %v5007 = vmax.f32 %v4553, 0.0
    %v5008 = vmax.f32 %v4558, 0.0
    %v5009 = vmax.f32 %v4563, 0.0
    %v5010 = vmax.f32 %v4568, 0.0
    %v5011 = vmax.f32 %v4573, 0.0
    %v5012 = vmax.f32 %v4578, 0.0
    %v5013 = vmax.f32 %v4583, 0.0
    %v5014 = vmax.f32 %v4588, 0.0
    %v5015 = vmax.f32 %v4593, 0.0
    %v5016 = vmax.f32 %v4598, 0.0
    %v5017 = vmax.f32 %v4603, 0.0
    %v5018 = vmax.f32 %v4608, 0.0
    %v5019 = vmax.f32 %v4613, 0.0
    %v5020 = vmax.f32 %v4618, 0.0
    %v5021 = vmax.f32 %v4623, 0.0
    %v5022 = vmax.f32 %v4628, 0.0
    %v5023 = vmax.f32 %v4633, 0.0
    %v5024 = vmax.f32 %v4638, 0.0
    %v5025 = vmax.f32 %v4643, 0.0
    %v5026 = vmax.f32 %v4648, 0.0
    %v5027 = vmax.f32 %v4653, 0.0
    %v5028 = vmax.f32 %v4658, 0.0
    %v5029 = vmax.f32 %v4663, 0.0
    %v5030 = vmax.f32 %v4668, 0.0
    %v5031 = vmax.f32 %v4673, 0.0
    %v5032 = vmax.f32 %v4678, 0.0
    %v5033 = vmax.f32 %v4683, 0.0
    %v5034 = vmax.f32 %v4688, 0.0
    %v5035 = vmax.f32 %v4693, 0.0
    %v5036 = vmax.f32 %v4698, 0.0
    %v5037 = vmax.f32 %v4703, 0.0
    %v5038 = vmax.f32 %v4708, 0.0
    %v5039 = vmax.f32 %v4713, 0.0
    %v5040 = vmax.f32 %v4718, 0.0
    %v5041 = vmax.f32 %v4723, 0.0
    %v5042 = vmax.f32 %v4728, 0.0
    %v5043 = vmax.f32 %v4733, 0.0
    %v5044 = vmax.f32 %v4738, 0.0
    %v5045 = vmax.f32 %v4743, 0.0
    %v5046 = vmax.f32 %v4748, 0.0
    %v5047 = vmax.f32 %v4753, 0.0
    %v5048 = vmax.f32 %v4758, 0.0
    %v5049 = vmax.f32 %v4763, 0.0
    %v5050 = vmax.f32 %v4768, 0.0
    %v5051 = vmax.f32 %v4773, 0.0
    %v5052 = vmax.f32 %v4778, 0.0
    %v5053 = vmax.f32 %v4783, 0.0
    %v5054 = vmax.f32 %v4788, 0.0
    %v5055 = vmax.f32 %v4793, 0.0
    %v5056 = vmax.f32 %v4798, 0.0
    %v5057 = vld [vmem:[%s5] sm:$0x1]
    %v5058 = vld [vmem:[#allocation2] sm:$0x1]
    %5060 = vset.pattern.permute.xlu0 0
    %5061 = vperm.xlu0 %5060, %v5058
    %v5062 = vpop.permute.xlu0 %5061
    %v5064 = vlaneseq
    %v5065 = vshrl.u32 %v5064, 7
    %v5066 = vsub.s32 0, %v5065
    %v5067 = vrot.slane %v5062, %v5066
    %v5069 = vsel %vm2683, %v5057, 0
    %v5072 = vsel %vm2683, %v4801, 0
    %v5075 = vsel %vm2683, %v4802, 0
    %v5078 = vsel %vm2683, %v4803, 0
    %v5081 = vsel %vm2683, %v4804, 0
    %v5084 = vsel %vm2683, %v4805, 0
    %v5087 = vsel %vm2683, %v4806, 0
    %v5090 = vsel %vm2683, %v4807, 0
    %v5093 = vsel %vm2683, %v4808, 0
    %v5096 = vsel %vm2683, %v4809, 0
    %v5099 = vsel %vm2683, %v4810, 0
    %v5102 = vsel %vm2683, %v4811, 0
    %v5105 = vsel %vm2683, %v4812, 0
    %v5108 = vsel %vm2683, %v4813, 0
    %v5111 = vsel %vm2683, %v4814, 0
    %v5114 = vsel %vm2683, %v4815, 0
    %v5117 = vsel %vm2683, %v4816, 0
    %v5120 = vsel %vm2683, %v4817, 0
    %v5123 = vsel %vm2683, %v4818, 0
    %v5126 = vsel %vm2683, %v4819, 0
    %v5129 = vsel %vm2683, %v4820, 0
    %v5132 = vsel %vm2683, %v4821, 0
    %v5135 = vsel %vm2683, %v4822, 0
    %v5138 = vsel %vm2683, %v4823, 0
    %v5141 = vsel %vm2683, %v4824, 0
    %v5144 = vsel %vm2683, %v4825, 0
    %v5147 = vsel %vm2683, %v4826, 0
    %v5150 = vsel %vm2683, %v4827, 0
    %v5153 = vsel %vm2683, %v4828, 0
    %v5156 = vsel %vm2683, %v4829, 0
    %v5159 = vsel %vm2683, %v4830, 0
    %v5162 = vsel %vm2683, %v4831, 0
    %v5165 = vsel %vm2683, %v4832, 0
    %v5168 = vsel %vm2683, %v4833, 0
    %v5171 = vsel %vm2683, %v4834, 0
    %v5174 = vsel %vm2683, %v4835, 0
    %v5177 = vsel %vm2683, %v4836, 0
    %v5180 = vsel %vm2683, %v4837, 0
    %v5183 = vsel %vm2683, %v4838, 0
    %v5186 = vsel %vm2683, %v4839, 0
    %v5189 = vsel %vm2683, %v4840, 0
    %v5192 = vsel %vm2683, %v4841, 0
    %v5195 = vsel %vm2683, %v4842, 0
    %v5198 = vsel %vm2683, %v4843, 0
    %v5201 = vsel %vm2683, %v4844, 0
    %v5204 = vsel %vm2683, %v4845, 0
    %v5207 = vsel %vm2683, %v4846, 0
    %v5210 = vsel %vm2683, %v4847, 0
    %v5213 = vsel %vm2683, %v4848, 0
    %v5216 = vsel %vm2683, %v4849, 0
    %v5219 = vsel %vm2683, %v4850, 0
    %v5222 = vsel %vm2683, %v4851, 0
    %v5225 = vsel %vm2683, %v4852, 0
    %v5228 = vsel %vm2683, %v4853, 0
    %v5231 = vsel %vm2683, %v4854, 0
    %v5234 = vsel %vm2683, %v4855, 0
    %v5237 = vsel %vm2683, %v4856, 0
    %v5240 = vsel %vm2683, %v4857, 0
    %v5243 = vsel %vm2683, %v4858, 0
    %v5246 = vsel %vm2683, %v4859, 0
    %v5249 = vsel %vm2683, %v4860, 0
    %v5252 = vsel %vm2683, %v4861, 0
    %v5255 = vsel %vm2683, %v4862, 0
    %v5258 = vsel %vm2683, %v4863, 0
    %v5261 = vsel %vm2683, %v4864, 0
    %v5264 = vsel %vm2683, %v4865, 0
    %v5267 = vsel %vm2683, %v4866, 0
    %v5270 = vsel %vm2683, %v4867, 0
    %v5273 = vsel %vm2683, %v4868, 0
    %v5276 = vsel %vm2683, %v4869, 0
    %v5279 = vsel %vm2683, %v4870, 0
    %v5282 = vsel %vm2683, %v4871, 0
    %v5285 = vsel %vm2683, %v4872, 0
    %v5288 = vsel %vm2683, %v4873, 0
    %v5291 = vsel %vm2683, %v4874, 0
    %v5294 = vsel %vm2683, %v4875, 0
    %v5297 = vsel %vm2683, %v4876, 0
    %v5300 = vsel %vm2683, %v4877, 0
    %v5303 = vsel %vm2683, %v4878, 0
    %v5306 = vsel %vm2683, %v4879, 0
    %v5309 = vsel %vm2683, %v4880, 0
    %v5312 = vsel %vm2683, %v4881, 0
    %v5315 = vsel %vm2683, %v4882, 0
    %v5318 = vsel %vm2683, %v4883, 0
    %v5321 = vsel %vm2683, %v4884, 0
    %v5324 = vsel %vm2683, %v4885, 0
    %v5327 = vsel %vm2683, %v4886, 0
    %v5330 = vsel %vm2683, %v4887, 0
    %v5333 = vsel %vm2683, %v4888, 0
    %v5336 = vsel %vm2683, %v4889, 0
    %v5339 = vsel %vm2683, %v4890, 0
    %v5342 = vsel %vm2683, %v4891, 0
    %v5345 = vsel %vm2683, %v4892, 0
    %v5348 = vsel %vm2683, %v4893, 0
    %v5351 = vsel %vm2683, %v4894, 0
    %v5354 = vsel %vm2683, %v4895, 0
    %v5357 = vsel %vm2683, %v4896, 0
    %v5360 = vsel %vm2683, %v4897, 0
    %v5363 = vsel %vm2683, %v4898, 0
    %v5366 = vsel %vm2683, %v4899, 0
    %v5369 = vsel %vm2683, %v4900, 0
    %v5372 = vsel %vm2683, %v4901, 0
    %v5375 = vsel %vm2683, %v4902, 0
    %v5378 = vsel %vm2683, %v4903, 0
    %v5381 = vsel %vm2683, %v4904, 0
    %v5384 = vsel %vm2683, %v4905, 0
    %v5387 = vsel %vm2683, %v4906, 0
    %v5390 = vsel %vm2683, %v4907, 0
    %v5393 = vsel %vm2683, %v4908, 0
    %v5396 = vsel %vm2683, %v4909, 0
    %v5399 = vsel %vm2683, %v4910, 0
    %v5402 = vsel %vm2683, %v4911, 0
    %v5405 = vsel %vm2683, %v4912, 0
    %v5408 = vsel %vm2683, %v4913, 0
    %v5411 = vsel %vm2683, %v4914, 0
    %v5414 = vsel %vm2683, %v4915, 0
    %v5417 = vsel %vm2683, %v4916, 0
    %v5420 = vsel %vm2683, %v4917, 0
    %v5423 = vsel %vm2683, %v4918, 0
    %v5426 = vsel %vm2683, %v4919, 0
    %v5429 = vsel %vm2683, %v4920, 0
    %v5432 = vsel %vm2683, %v4921, 0
    %v5435 = vsel %vm2683, %v4922, 0
    %v5438 = vsel %vm2683, %v4923, 0
    %v5441 = vsel %vm2683, %v4924, 0
    %v5444 = vsel %vm2683, %v4925, 0
    %v5447 = vsel %vm2683, %v4926, 0
    %v5450 = vsel %vm2683, %v4927, 0
    %v5453 = vsel %vm2683, %v4928, 0
    %v5456 = vsel %vm2683, %v4929, 0
    %v5459 = vsel %vm2683, %v4930, 0
    %v5462 = vsel %vm2683, %v4931, 0
    %v5465 = vsel %vm2683, %v4932, 0
    %v5468 = vsel %vm2683, %v4933, 0
    %v5471 = vsel %vm2683, %v4934, 0
    %v5474 = vsel %vm2683, %v4935, 0
    %v5477 = vsel %vm2683, %v4936, 0
    %v5480 = vsel %vm2683, %v4937, 0
    %v5483 = vsel %vm2683, %v4938, 0
    %v5486 = vsel %vm2683, %v4939, 0
    %v5489 = vsel %vm2683, %v4940, 0
    %v5492 = vsel %vm2683, %v4941, 0
    %v5495 = vsel %vm2683, %v4942, 0
    %v5498 = vsel %vm2683, %v4943, 0
    %v5501 = vsel %vm2683, %v4944, 0
    %v5504 = vsel %vm2683, %v4945, 0
    %v5507 = vsel %vm2683, %v4946, 0
    %v5510 = vsel %vm2683, %v4947, 0
    %v5513 = vsel %vm2683, %v4948, 0
    %v5516 = vsel %vm2683, %v4949, 0
    %v5519 = vsel %vm2683, %v4950, 0
    %v5522 = vsel %vm2683, %v4951, 0
    %v5525 = vsel %vm2683, %v4952, 0
    %v5528 = vsel %vm2683, %v4953, 0
    %v5531 = vsel %vm2683, %v4954, 0
    %v5534 = vsel %vm2683, %v4955, 0
    %v5537 = vsel %vm2683, %v4956, 0
    %v5540 = vsel %vm2683, %v4957, 0
    %v5543 = vsel %vm2683, %v4958, 0
    %v5546 = vsel %vm2683, %v4959, 0
    %v5549 = vsel %vm2683, %v4960, 0
    %v5552 = vsel %vm2683, %v4961, 0
    %v5555 = vsel %vm2683, %v4962, 0
    %v5558 = vsel %vm2683, %v4963, 0
    %v5561 = vsel %vm2683, %v4964, 0
    %v5564 = vsel %vm2683, %v4965, 0
    %v5567 = vsel %vm2683, %v4966, 0
    %v5570 = vsel %vm2683, %v4967, 0
    %v5573 = vsel %vm2683, %v4968, 0
    %v5576 = vsel %vm2683, %v4969, 0
    %v5579 = vsel %vm2683, %v4970, 0
    %v5582 = vsel %vm2683, %v4971, 0
    %v5585 = vsel %vm2683, %v4972, 0
    %v5588 = vsel %vm2683, %v4973, 0
    %v5591 = vsel %vm2683, %v4974, 0
    %v5594 = vsel %vm2683, %v4975, 0
    %v5597 = vsel %vm2683, %v4976, 0
    %v5600 = vsel %vm2683, %v4977, 0
    %v5603 = vsel %vm2683, %v4978, 0
    %v5606 = vsel %vm2683, %v4979, 0
    %v5609 = vsel %vm2683, %v4980, 0
    %v5612 = vsel %vm2683, %v4981, 0
    %v5615 = vsel %vm2683, %v4982, 0
    %v5618 = vsel %vm2683, %v4983, 0
    %v5621 = vsel %vm2683, %v4984, 0
    %v5624 = vsel %vm2683, %v4985, 0
    %v5627 = vsel %vm2683, %v4986, 0
    %v5630 = vsel %vm2683, %v4987, 0
    %v5633 = vsel %vm2683, %v4988, 0
    %v5636 = vsel %vm2683, %v4989, 0
    %v5639 = vsel %vm2683, %v4990, 0
    %v5642 = vsel %vm2683, %v4991, 0
    %v5645 = vsel %vm2683, %v4992, 0
    %v5648 = vsel %vm2683, %v4993, 0
    %v5651 = vsel %vm2683, %v4994, 0
    %v5654 = vsel %vm2683, %v4995, 0
    %v5657 = vsel %vm2683, %v4996, 0
    %v5660 = vsel %vm2683, %v4997, 0
    %v5663 = vsel %vm2683, %v4998, 0
    %v5666 = vsel %vm2683, %v4999, 0
    %v5669 = vsel %vm2683, %v5000, 0
    %v5672 = vsel %vm2683, %v5001, 0
    %v5675 = vsel %vm2683, %v5002, 0
    %v5678 = vsel %vm2683, %v5003, 0
    %v5681 = vsel %vm2683, %v5004, 0
    %v5684 = vsel %vm2683, %v5005, 0
    %v5687 = vsel %vm2683, %v5006, 0
    %v5690 = vsel %vm2683, %v5007, 0
    %v5693 = vsel %vm2683, %v5008, 0
    %v5696 = vsel %vm2683, %v5009, 0
    %v5699 = vsel %vm2683, %v5010, 0
    %v5702 = vsel %vm2683, %v5011, 0
    %v5705 = vsel %vm2683, %v5012, 0
    %v5708 = vsel %vm2683, %v5013, 0
    %v5711 = vsel %vm2683, %v5014, 0
    %v5714 = vsel %vm2683, %v5015, 0
    %v5717 = vsel %vm2683, %v5016, 0
    %v5720 = vsel %vm2683, %v5017, 0
    %v5723 = vsel %vm2683, %v5018, 0
    %v5726 = vsel %vm2683, %v5019, 0
    %v5729 = vsel %vm2683, %v5020, 0
    %v5732 = vsel %vm2683, %v5021, 0
    %v5735 = vsel %vm2683, %v5022, 0
    %v5738 = vsel %vm2683, %v5023, 0
    %v5741 = vsel %vm2683, %v5024, 0
    %v5744 = vsel %vm2683, %v5025, 0
    %v5747 = vsel %vm2683, %v5026, 0
    %v5750 = vsel %vm2683, %v5027, 0
    %v5753 = vsel %vm2683, %v5028, 0
    %v5756 = vsel %vm2683, %v5029, 0
    %v5759 = vsel %vm2683, %v5030, 0
    %v5762 = vsel %vm2683, %v5031, 0
    %v5765 = vsel %vm2683, %v5032, 0
    %v5768 = vsel %vm2683, %v5033, 0
    %v5771 = vsel %vm2683, %v5034, 0
    %v5774 = vsel %vm2683, %v5035, 0
    %v5777 = vsel %vm2683, %v5036, 0
    %v5780 = vsel %vm2683, %v5037, 0
    %v5783 = vsel %vm2683, %v5038, 0
    %v5786 = vsel %vm2683, %v5039, 0
    %v5789 = vsel %vm2683, %v5040, 0
    %v5792 = vsel %vm2683, %v5041, 0
    %v5795 = vsel %vm2683, %v5042, 0
    %v5798 = vsel %vm2683, %v5043, 0
    %v5801 = vsel %vm2683, %v5044, 0
    %v5804 = vsel %vm2683, %v5045, 0
    %v5807 = vsel %vm2683, %v5046, 0
    %v5810 = vsel %vm2683, %v5047, 0
    %v5813 = vsel %vm2683, %v5048, 0
    %v5816 = vsel %vm2683, %v5049, 0
    %v5819 = vsel %vm2683, %v5050, 0
    %v5822 = vsel %vm2683, %v5051, 0
    %v5825 = vsel %vm2683, %v5052, 0
    %v5828 = vsel %vm2683, %v5053, 0
    %v5831 = vsel %vm2683, %v5054, 0
    %v5834 = vsel %vm2683, %v5055, 0
    %v5837 = vsel %vm2683, %v5056, 0
    %5839 = vmatprep.subr.mxu0 0.0
    %5840 = vmatpush1.xpose.msra.mxu0 %v5072
    %5841 = vmatprep.subr.mxu0 0.0
    %5842 = vmatpush1.xpose.msra.mxu0 %v5075
    %5843 = vmatprep.subr.mxu0 0.0
    %5844 = vmatpush1.xpose.msra.mxu0 %v5078
    %5845 = vmatprep.subr.mxu0 0.0
    %5846 = vmatpush1.xpose.msra.mxu0 %v5081
    %5847 = vmatprep.subr.mxu0 0.0
    %5848 = vmatpush1.xpose.msra.mxu0 %v5084
    %5849 = vmatprep.subr.mxu0 0.0
    %5850 = vmatpush1.xpose.msra.mxu0 %v5087
    %5851 = vmatprep.subr.mxu0 0.0
    %5852 = vmatpush1.xpose.msra.mxu0 %v5090
    %5853 = vmatprep.subr.mxu0 0.0
    %5854 = vmatpush1.xpose.msra.mxu0 %v5093
    %5855 = vmatprep.subr.mxu0 0.0
    %5856 = vmatpush1.xpose.msra.mxu0 %v5096
    %5857 = vmatprep.subr.mxu0 0.0
    %5858 = vmatpush1.xpose.msra.mxu0 %v5099
    %5859 = vmatprep.subr.mxu0 0.0
    %5860 = vmatpush1.xpose.msra.mxu0 %v5102
    %5861 = vmatprep.subr.mxu0 0.0
    %5862 = vmatpush1.xpose.msra.mxu0 %v5105
    %5863 = vmatprep.subr.mxu0 0.0
    %5864 = vmatpush1.xpose.msra.mxu0 %v5108
    %5865 = vmatprep.subr.mxu0 0.0
    %5866 = vmatpush1.xpose.msra.mxu0 %v5111
    %5867 = vmatprep.subr.mxu0 0.0
    %5868 = vmatpush1.xpose.msra.mxu0 %v5114
    %5869 = vmatprep.subr.mxu0 0.0
    %5870 = vmatpush1.xpose.msra.mxu0 %v5117
    %5871 = vmatprep.subr.mxu0 0.0
    %5872 = vmatpush1.xpose.msra.mxu0 %v5120
    %5873 = vmatprep.subr.mxu0 0.0
    %5874 = vmatpush1.xpose.msra.mxu0 %v5123
    %5875 = vmatprep.subr.mxu0 0.0
    %5876 = vmatpush1.xpose.msra.mxu0 %v5126
    %5877 = vmatprep.subr.mxu0 0.0
    %5878 = vmatpush1.xpose.msra.mxu0 %v5129
    %5879 = vmatprep.subr.mxu0 0.0
    %5880 = vmatpush1.xpose.msra.mxu0 %v5132
    %5881 = vmatprep.subr.mxu0 0.0
    %5882 = vmatpush1.xpose.msra.mxu0 %v5135
    %5883 = vmatprep.subr.mxu0 0.0
    %5884 = vmatpush1.xpose.msra.mxu0 %v5138
    %5885 = vmatprep.subr.mxu0 0.0
    %5886 = vmatpush1.xpose.msra.mxu0 %v5141
    %5887 = vmatprep.subr.mxu0 0.0
    %5888 = vmatpush1.xpose.msra.mxu0 %v5144
    %5889 = vmatprep.subr.mxu0 0.0
    %5890 = vmatpush1.xpose.msra.mxu0 %v5147
    %5891 = vmatprep.subr.mxu0 0.0
    %5892 = vmatpush1.xpose.msra.mxu0 %v5150
    %5893 = vmatprep.subr.mxu0 0.0
    %5894 = vmatpush1.xpose.msra.mxu0 %v5153
    %5895 = vmatprep.subr.mxu0 0.0
    %5896 = vmatpush1.xpose.msra.mxu0 %v5156
    %5897 = vmatprep.subr.mxu0 0.0
    %5898 = vmatpush1.xpose.msra.mxu0 %v5159
    %5899 = vmatprep.subr.mxu0 0.0
    %5900 = vmatpush1.xpose.msra.mxu0 %v5162
    %5901 = vmatprep.subr.mxu0 0.0
    %5902 = vmatpush1.xpose.msra.mxu0 %v5165
    %5903 = vmatprep.mubr.f32.mxu0 0.0
    %5904 = vmatmul.mubr.f32.gmra.mrb[0].mxu0 %v5069
    %v5905 = vpop.f32.mrb[0].mxu0
    %v5906 = vadd.f32 %v5067, %v5905
    %v5907 = vpop.f32.mrb[0].mxu0
    %v5908 = vadd.f32 %v5067, %v5907
    %5909 = vdwg.mxu0
    %5910 = vmatprep.subr.mxu0 0.0
    %5911 = vmatpush1.xpose.msra.mxu0 %v5168
    %5912 = vmatprep.subr.mxu0 0.0
    %5913 = vmatpush1.xpose.msra.mxu0 %v5171
    %5914 = vmatprep.subr.mxu0 0.0
    %5915 = vmatpush1.xpose.msra.mxu0 %v5174
    %5916 = vmatprep.subr.mxu0 0.0
    %5917 = vmatpush1.xpose.msra.mxu0 %v5177
    %5918 = vmatprep.subr.mxu0 0.0
    %5919 = vmatpush1.xpose.msra.mxu0 %v5180
    %5920 = vmatprep.subr.mxu0 0.0
    %5921 = vmatpush1.xpose.msra.mxu0 %v5183
    %5922 = vmatprep.subr.mxu0 0.0
    %5923 = vmatpush1.xpose.msra.mxu0 %v5186
    %5924 = vmatprep.subr.mxu0 0.0
    %5925 = vmatpush1.xpose.msra.mxu0 %v5189
    %5926 = vmatprep.subr.mxu0 0.0
    %5927 = vmatpush1.xpose.msra.mxu0 %v5192
    %5928 = vmatprep.subr.mxu0 0.0
    %5929 = vmatpush1.xpose.msra.mxu0 %v5195
    %5930 = vmatprep.subr.mxu0 0.0
    %5931 = vmatpush1.xpose.msra.mxu0 %v5198
    %5932 = vmatprep.subr.mxu0 0.0
    %5933 = vmatpush1.xpose.msra.mxu0 %v5201
    %5934 = vmatprep.subr.mxu0 0.0
    %5935 = vmatpush1.xpose.msra.mxu0 %v5204
    %5936 = vmatprep.subr.mxu0 0.0
    %5937 = vmatpush1.xpose.msra.mxu0 %v5207
    %5938 = vmatprep.subr.mxu0 0.0
    %5939 = vmatpush1.xpose.msra.mxu0 %v5210
    %5940 = vmatprep.subr.mxu0 0.0
    %5941 = vmatpush1.xpose.msra.mxu0 %v5213
    %5942 = vmatprep.subr.mxu0 0.0
    %5943 = vmatpush1.xpose.msra.mxu0 %v5216
    %5944 = vmatprep.subr.mxu0 0.0
    %5945 = vmatpush1.xpose.msra.mxu0 %v5219
    %5946 = vmatprep.subr.mxu0 0.0
    %5947 = vmatpush1.xpose.msra.mxu0 %v5222
    %5948 = vmatprep.subr.mxu0 0.0
    %5949 = vmatpush1.xpose.msra.mxu0 %v5225
    %5950 = vmatprep.subr.mxu0 0.0
    %5951 = vmatpush1.xpose.msra.mxu0 %v5228
    %5952 = vmatprep.subr.mxu0 0.0
    %5953 = vmatpush1.xpose.msra.mxu0 %v5231
    %5954 = vmatprep.subr.mxu0 0.0
    %5955 = vmatpush1.xpose.msra.mxu0 %v5234
    %5956 = vmatprep.subr.mxu0 0.0
    %5957 = vmatpush1.xpose.msra.mxu0 %v5237
    %5958 = vmatprep.subr.mxu0 0.0
    %5959 = vmatpush1.xpose.msra.mxu0 %v5240
    %5960 = vmatprep.subr.mxu0 0.0
    %5961 = vmatpush1.xpose.msra.mxu0 %v5243
    %5962 = vmatprep.subr.mxu0 0.0
    %5963 = vmatpush1.xpose.msra.mxu0 %v5246
    %5964 = vmatprep.subr.mxu0 0.0
    %5965 = vmatpush1.xpose.msra.mxu0 %v5249
    %5966 = vmatprep.subr.mxu0 0.0
    %5967 = vmatpush1.xpose.msra.mxu0 %v5252
    %5968 = vmatprep.subr.mxu0 0.0
    %5969 = vmatpush1.xpose.msra.mxu0 %v5255
    %5970 = vmatprep.subr.mxu0 0.0
    %5971 = vmatpush1.xpose.msra.mxu0 %v5258
    %5972 = vmatprep.subr.mxu0 0.0
    %5973 = vmatpush1.xpose.msra.mxu0 %v5261
    %5974 = vmatprep.mubr.f32.mxu0 0.0
    %5975 = vmatmul.mubr.f32.gmra.mrb[0].mxu0 %v5069
    %v5976 = vpop.f32.mrb[0].mxu0
    %v5977 = vadd.f32 %v5067, %v5976
    %v5978 = vpop.f32.mrb[0].mxu0
    %v5979 = vadd.f32 %v5067, %v5978
    %5980 = vdwg.mxu0
    %5981 = vmatprep.subr.mxu0 0.0
    %5982 = vmatpush1.xpose.msra.mxu0 %v5264
    %5983 = vmatprep.subr.mxu0 0.0
    %5984 = vmatpush1.xpose.msra.mxu0 %v5267
    %5985 = vmatprep.subr.mxu0 0.0
    %5986 = vmatpush1.xpose.msra.mxu0 %v5270
    %5987 = vmatprep.subr.mxu0 0.0
    %5988 = vmatpush1.xpose.msra.mxu0 %v5273
    %5989 = vmatprep.subr.mxu0 0.0
    %5990 = vmatpush1.xpose.msra.mxu0 %v5276
    %5991 = vmatprep.subr.mxu0 0.0
    %5992 = vmatpush1.xpose.msra.mxu0 %v5279
    %5993 = vmatprep.subr.mxu0 0.0
    %5994 = vmatpush1.xpose.msra.mxu0 %v5282
    %5995 = vmatprep.subr.mxu0 0.0
    %5996 = vmatpush1.xpose.msra.mxu0 %v5285
    %5997 = vmatprep.subr.mxu0 0.0
    %5998 = vmatpush1.xpose.msra.mxu0 %v5288
    %5999 = vmatprep.subr.mxu0 0.0
    %6000 = vmatpush1.xpose.msra.mxu0 %v5291
    %6001 = vmatprep.subr.mxu0 0.0
    %6002 = vmatpush1.xpose.msra.mxu0 %v5294
    %6003 = vmatprep.subr.mxu0 0.0
    %6004 = vmatpush1.xpose.msra.mxu0 %v5297
    %6005 = vmatprep.subr.mxu0 0.0
    %6006 = vmatpush1.xpose.msra.mxu0 %v5300
    %6007 = vmatprep.subr.mxu0 0.0
    %6008 = vmatpush1.xpose.msra.mxu0 %v5303
    %6009 = vmatprep.subr.mxu0 0.0
    %6010 = vmatpush1.xpose.msra.mxu0 %v5306
    %6011 = vmatprep.subr.mxu0 0.0
    %6012 = vmatpush1.xpose.msra.mxu0 %v5309
    %6013 = vmatprep.subr.mxu0 0.0
    %6014 = vmatpush1.xpose.msra.mxu0 %v5312
    %6015 = vmatprep.subr.mxu0 0.0
    %6016 = vmatpush1.xpose.msra.mxu0 %v5315
    %6017 = vmatprep.subr.mxu0 0.0
    %6018 = vmatpush1.xpose.msra.mxu0 %v5318
    %6019 = vmatprep.subr.mxu0 0.0
    %6020 = vmatpush1.xpose.msra.mxu0 %v5321
    %6021 = vmatprep.subr.mxu0 0.0
    %6022 = vmatpush1.xpose.msra.mxu0 %v5324
    %6023 = vmatprep.subr.mxu0 0.0
    %6024 = vmatpush1.xpose.msra.mxu0 %v5327
    %6025 = vmatprep.subr.mxu0 0.0
    %6026 = vmatpush1.xpose.msra.mxu0 %v5330
    %6027 = vmatprep.subr.mxu0 0.0
    %6028 = vmatpush1.xpose.msra.mxu0 %v5333
    %6029 = vmatprep.subr.mxu0 0.0
    %6030 = vmatpush1.xpose.msra.mxu0 %v5336
    %6031 = vmatprep.subr.mxu0 0.0
    %6032 = vmatpush1.xpose.msra.mxu0 %v5339
    %6033 = vmatprep.subr.mxu0 0.0
    %6034 = vmatpush1.xpose.msra.mxu0 %v5342
    %6035 = vmatprep.subr.mxu0 0.0
    %6036 = vmatpush1.xpose.msra.mxu0 %v5345
    %6037 = vmatprep.subr.mxu0 0.0
    %6038 = vmatpush1.xpose.msra.mxu0 %v5348
    %6039 = vmatprep.subr.mxu0 0.0
    %6040 = vmatpush1.xpose.msra.mxu0 %v5351
    %6041 = vmatprep.subr.mxu0 0.0
    %6042 = vmatpush1.xpose.msra.mxu0 %v5354
    %6043 = vmatprep.subr.mxu0 0.0
    %6044 = vmatpush1.xpose.msra.mxu0 %v5357
    %6045 = vmatprep.mubr.f32.mxu0 0.0
    %6046 = vmatmul.mubr.f32.gmra.mrb[0].mxu0 %v5069
    %v6047 = vpop.f32.mrb[0].mxu0
    %v6048 = vadd.f32 %v5067, %v6047
    %v6049 = vpop.f32.mrb[0].mxu0
    %v6050 = vadd.f32 %v5067, %v6049
    %6051 = vdwg.mxu0
    %6052 = vmatprep.subr.mxu0 0.0
    %6053 = vmatpush1.xpose.msra.mxu0 %v5360
    %6054 = vmatprep.subr.mxu0 0.0
    %6055 = vmatpush1.xpose.msra.mxu0 %v5363
    %6056 = vmatprep.subr.mxu0 0.0
    %6057 = vmatpush1.xpose.msra.mxu0 %v5366
    %6058 = vmatprep.subr.mxu0 0.0
    %6059 = vmatpush1.xpose.msra.mxu0 %v5369
    %6060 = vmatprep.subr.mxu0 0.0
    %6061 = vmatpush1.xpose.msra.mxu0 %v5372
    %6062 = vmatprep.subr.mxu0 0.0
    %6063 = vmatpush1.xpose.msra.mxu0 %v5375
    %6064 = vmatprep.subr.mxu0 0.0
    %6065 = vmatpush1.xpose.msra.mxu0 %v5378
    %6066 = vmatprep.subr.mxu0 0.0
    %6067 = vmatpush1.xpose.msra.mxu0 %v5381
    %6068 = vmatprep.subr.mxu0 0.0
    %6069 = vmatpush1.xpose.msra.mxu0 %v5384
    %6070 = vmatprep.subr.mxu0 0.0
    %6071 = vmatpush1.xpose.msra.mxu0 %v5387
    %6072 = vmatprep.subr.mxu0 0.0
    %6073 = vmatpush1.xpose.msra.mxu0 %v5390
    %6074 = vmatprep.subr.mxu0 0.0
    %6075 = vmatpush1.xpose.msra.mxu0 %v5393
    %6076 = vmatprep.subr.mxu0 0.0
    %6077 = vmatpush1.xpose.msra.mxu0 %v5396
    %6078 = vmatprep.subr.mxu0 0.0
    %6079 = vmatpush1.xpose.msra.mxu0 %v5399
    %6080 = vmatprep.subr.mxu0 0.0
    %6081 = vmatpush1.xpose.msra.mxu0 %v5402
    %6082 = vmatprep.subr.mxu0 0.0
    %6083 = vmatpush1.xpose.msra.mxu0 %v5405
    %6084 = vmatprep.subr.mxu0 0.0
    %6085 = vmatpush1.xpose.msra.mxu0 %v5408
    %6086 = vmatprep.subr.mxu0 0.0
    %6087 = vmatpush1.xpose.msra.mxu0 %v5411
    %6088 = vmatprep.subr.mxu0 0.0
    %6089 = vmatpush1.xpose.msra.mxu0 %v5414
    %6090 = vmatprep.subr.mxu0 0.0
    %6091 = vmatpush1.xpose.msra.mxu0 %v5417
    %6092 = vmatprep.subr.mxu0 0.0
    %6093 = vmatpush1.xpose.msra.mxu0 %v5420
    %6094 = vmatprep.subr.mxu0 0.0
    %6095 = vmatpush1.xpose.msra.mxu0 %v5423
    %6096 = vmatprep.subr.mxu0 0.0
    %6097 = vmatpush1.xpose.msra.mxu0 %v5426
    %6098 = vmatprep.subr.mxu0 0.0
    %6099 = vmatpush1.xpose.msra.mxu0 %v5429
    %6100 = vmatprep.subr.mxu0 0.0
    %6101 = vmatpush1.xpose.msra.mxu0 %v5432
    %6102 = vmatprep.subr.mxu0 0.0
    %6103 = vmatpush1.xpose.msra.mxu0 %v5435
    %6104 = vmatprep.subr.mxu0 0.0
    %6105 = vmatpush1.xpose.msra.mxu0 %v5438
    %6106 = vmatprep.subr.mxu0 0.0
    %6107 = vmatpush1.xpose.msra.mxu0 %v5441
    %6108 = vmatprep.subr.mxu0 0.0
    %6109 = vmatpush1.xpose.msra.mxu0 %v5444
    %6110 = vmatprep.subr.mxu0 0.0
    %6111 = vmatpush1.xpose.msra.mxu0 %v5447
    %6112 = vmatprep.subr.mxu0 0.0
    %6113 = vmatpush1.xpose.msra.mxu0 %v5450
    %6114 = vmatprep.subr.mxu0 0.0
    %6115 = vmatpush1.xpose.msra.mxu0 %v5453
    %6116 = vmatprep.mubr.f32.mxu0 0.0
    %6117 = vmatmul.mubr.f32.gmra.mrb[0].mxu0 %v5069
    %v6118 = vpop.f32.mrb[0].mxu0
    %v6119 = vadd.f32 %v5067, %v6118
    %v6120 = vpop.f32.mrb[0].mxu0
    %v6121 = vadd.f32 %v5067, %v6120
    %6122 = vdwg.mxu0
    %6123 = vmatprep.subr.mxu0 0.0
    %6124 = vmatpush1.xpose.msra.mxu0 %v5456
    %6125 = vmatprep.subr.mxu0 0.0
    %6126 = vmatpush1.xpose.msra.mxu0 %v5459
    %6127 = vmatprep.subr.mxu0 0.0
    %6128 = vmatpush1.xpose.msra.mxu0 %v5462
    %6129 = vmatprep.subr.mxu0 0.0
    %6130 = vmatpush1.xpose.msra.mxu0 %v5465
    %6131 = vmatprep.subr.mxu0 0.0
    %6132 = vmatpush1.xpose.msra.mxu0 %v5468
    %6133 = vmatprep.subr.mxu0 0.0
    %6134 = vmatpush1.xpose.msra.mxu0 %v5471
    %6135 = vmatprep.subr.mxu0 0.0
    %6136 = vmatpush1.xpose.msra.mxu0 %v5474
    %6137 = vmatprep.subr.mxu0 0.0
    %6138 = vmatpush1.xpose.msra.mxu0 %v5477
    %6139 = vmatprep.subr.mxu0 0.0
    %6140 = vmatpush1.xpose.msra.mxu0 %v5480
    %6141 = vmatprep.subr.mxu0 0.0
    %6142 = vmatpush1.xpose.msra.mxu0 %v5483
    %6143 = vmatprep.subr.mxu0 0.0
    %6144 = vmatpush1.xpose.msra.mxu0 %v5486
    %6145 = vmatprep.subr.mxu0 0.0
    %6146 = vmatpush1.xpose.msra.mxu0 %v5489
    %6147 = vmatprep.subr.mxu0 0.0
    %6148 = vmatpush1.xpose.msra.mxu0 %v5492
    %6149 = vmatprep.subr.mxu0 0.0
    %6150 = vmatpush1.xpose.msra.mxu0 %v5495
    %6151 = vmatprep.subr.mxu0 0.0
    %6152 = vmatpush1.xpose.msra.mxu0 %v5498
    %6153 = vmatprep.subr.mxu0 0.0
    %6154 = vmatpush1.xpose.msra.mxu0 %v5501
    %6155 = vmatprep.subr.mxu0 0.0
    %6156 = vmatpush1.xpose.msra.mxu0 %v5504
    %6157 = vmatprep.subr.mxu0 0.0
    %6158 = vmatpush1.xpose.msra.mxu0 %v5507
    %6159 = vmatprep.subr.mxu0 0.0
    %6160 = vmatpush1.xpose.msra.mxu0 %v5510
    %6161 = vmatprep.subr.mxu0 0.0
    %6162 = vmatpush1.xpose.msra.mxu0 %v5513
    %6163 = vmatprep.subr.mxu0 0.0
    %6164 = vmatpush1.xpose.msra.mxu0 %v5516
    %6165 = vmatprep.subr.mxu0 0.0
    %6166 = vmatpush1.xpose.msra.mxu0 %v5519
    %6167 = vmatprep.subr.mxu0 0.0
    %6168 = vmatpush1.xpose.msra.mxu0 %v5522
    %6169 = vmatprep.subr.mxu0 0.0
    %6170 = vmatpush1.xpose.msra.mxu0 %v5525
    %6171 = vmatprep.subr.mxu0 0.0
    %6172 = vmatpush1.xpose.msra.mxu0 %v5528
    %6173 = vmatprep.subr.mxu0 0.0
    %6174 = vmatpush1.xpose.msra.mxu0 %v5531
    %6175 = vmatprep.subr.mxu0 0.0
    %6176 = vmatpush1.xpose.msra.mxu0 %v5534
    %6177 = vmatprep.subr.mxu0 0.0
    %6178 = vmatpush1.xpose.msra.mxu0 %v5537
    %6179 = vmatprep.subr.mxu0 0.0
    %6180 = vmatpush1.xpose.msra.mxu0 %v5540
    %6181 = vmatprep.subr.mxu0 0.0
    %6182 = vmatpush1.xpose.msra.mxu0 %v5543
    %6183 = vmatprep.subr.mxu0 0.0
    %6184 = vmatpush1.xpose.msra.mxu0 %v5546
    %6185 = vmatprep.subr.mxu0 0.0
    %6186 = vmatpush1.xpose.msra.mxu0 %v5549
    %6187 = vmatprep.mubr.f32.mxu0 0.0
    %6188 = vmatmul.mubr.f32.gmra.mrb[0].mxu0 %v5069
    %v6189 = vpop.f32.mrb[0].mxu0
    %v6190 = vadd.f32 %v5067, %v6189
    %v6191 = vpop.f32.mrb[0].mxu0
    %v6192 = vadd.f32 %v5067, %v6191
    %6193 = vdwg.mxu0
    %6194 = vmatprep.subr.mxu0 0.0
    %6195 = vmatpush1.xpose.msra.mxu0 %v5552
    %6196 = vmatprep.subr.mxu0 0.0
    %6197 = vmatpush1.xpose.msra.mxu0 %v5555
    %6198 = vmatprep.subr.mxu0 0.0
    %6199 = vmatpush1.xpose.msra.mxu0 %v5558
    %6200 = vmatprep.subr.mxu0 0.0
    %6201 = vmatpush1.xpose.msra.mxu0 %v5561
    %6202 = vmatprep.subr.mxu0 0.0
    %6203 = vmatpush1.xpose.msra.mxu0 %v5564
    %6204 = vmatprep.subr.mxu0 0.0
    %6205 = vmatpush1.xpose.msra.mxu0 %v5567
    %6206 = vmatprep.subr.mxu0 0.0
    %6207 = vmatpush1.xpose.msra.mxu0 %v5570
    %6208 = vmatprep.subr.mxu0 0.0
    %6209 = vmatpush1.xpose.msra.mxu0 %v5573
    %6210 = vmatprep.subr.mxu0 0.0
    %6211 = vmatpush1.xpose.msra.mxu0 %v5576
    %6212 = vmatprep.subr.mxu0 0.0
    %6213 = vmatpush1.xpose.msra.mxu0 %v5579
    %6214 = vmatprep.subr.mxu0 0.0
    %6215 = vmatpush1.xpose.msra.mxu0 %v5582
    %6216 = vmatprep.subr.mxu0 0.0
    %6217 = vmatpush1.xpose.msra.mxu0 %v5585
    %6218 = vmatprep.subr.mxu0 0.0
    %6219 = vmatpush1.xpose.msra.mxu0 %v5588
    %6220 = vmatprep.subr.mxu0 0.0
    %6221 = vmatpush1.xpose.msra.mxu0 %v5591
    %6222 = vmatprep.subr.mxu0 0.0
    %6223 = vmatpush1.xpose.msra.mxu0 %v5594
    %6224 = vmatprep.subr.mxu0 0.0
    %6225 = vmatpush1.xpose.msra.mxu0 %v5597
    %6226 = vmatprep.subr.mxu0 0.0
    %6227 = vmatpush1.xpose.msra.mxu0 %v5600
    %6228 = vmatprep.subr.mxu0 0.0
    %6229 = vmatpush1.xpose.msra.mxu0 %v5603
    %6230 = vmatprep.subr.mxu0 0.0
    %6231 = vmatpush1.xpose.msra.mxu0 %v5606
    %6232 = vmatprep.subr.mxu0 0.0
    %6233 = vmatpush1.xpose.msra.mxu0 %v5609
    %6234 = vmatprep.subr.mxu0 0.0
    %6235 = vmatpush1.xpose.msra.mxu0 %v5612
    %6236 = vmatprep.subr.mxu0 0.0
    %6237 = vmatpush1.xpose.msra.mxu0 %v5615
    %6238 = vmatprep.subr.mxu0 0.0
    %6239 = vmatpush1.xpose.msra.mxu0 %v5618
    %6240 = vmatprep.subr.mxu0 0.0
    %6241 = vmatpush1.xpose.msra.mxu0 %v5621
    %6242 = vmatprep.subr.mxu0 0.0
    %6243 = vmatpush1.xpose.msra.mxu0 %v5624
    %6244 = vmatprep.subr.mxu0 0.0
    %6245 = vmatpush1.xpose.msra.mxu0 %v5627
    %6246 = vmatprep.subr.mxu0 0.0
    %6247 = vmatpush1.xpose.msra.mxu0 %v5630
    %6248 = vmatprep.subr.mxu0 0.0
    %6249 = vmatpush1.xpose.msra.mxu0 %v5633
    %6250 = vmatprep.subr.mxu0 0.0
    %6251 = vmatpush1.xpose.msra.mxu0 %v5636
    %6252 = vmatprep.subr.mxu0 0.0
    %6253 = vmatpush1.xpose.msra.mxu0 %v5639
    %6254 = vmatprep.subr.mxu0 0.0
    %6255 = vmatpush1.xpose.msra.mxu0 %v5642
    %6256 = vmatprep.subr.mxu0 0.0
    %6257 = vmatpush1.xpose.msra.mxu0 %v5645
    %6258 = vmatprep.mubr.f32.mxu0 0.0
    %6259 = vmatmul.mubr.f32.gmra.mrb[0].mxu0 %v5069
    %v6260 = vpop.f32.mrb[0].mxu0
    %v6261 = vadd.f32 %v5067, %v6260
    %v6262 = vpop.f32.mrb[0].mxu0
    %v6263 = vadd.f32 %v5067, %v6262
    %6264 = vdwg.mxu0
    %6265 = vmatprep.subr.mxu0 0.0
    %6266 = vmatpush1.xpose.msra.mxu0 %v5648
    %6267 = vmatprep.subr.mxu0 0.0
    %6268 = vmatpush1.xpose.msra.mxu0 %v5651
    %6269 = vmatprep.subr.mxu0 0.0
    %6270 = vmatpush1.xpose.msra.mxu0 %v5654
    %6271 = vmatprep.subr.mxu0 0.0
    %6272 = vmatpush1.xpose.msra.mxu0 %v5657
    %6273 = vmatprep.subr.mxu0 0.0
    %6274 = vmatpush1.xpose.msra.mxu0 %v5660
    %6275 = vmatprep.subr.mxu0 0.0
    %6276 = vmatpush1.xpose.msra.mxu0 %v5663
    %6277 = vmatprep.subr.mxu0 0.0
    %6278 = vmatpush1.xpose.msra.mxu0 %v5666
    %6279 = vmatprep.subr.mxu0 0.0
    %6280 = vmatpush1.xpose.msra.mxu0 %v5669
    %6281 = vmatprep.subr.mxu0 0.0
    %6282 = vmatpush1.xpose.msra.mxu0 %v5672
    %6283 = vmatprep.subr.mxu0 0.0
    %6284 = vmatpush1.xpose.msra.mxu0 %v5675
    %6285 = vmatprep.subr.mxu0 0.0
    %6286 = vmatpush1.xpose.msra.mxu0 %v5678
    %6287 = vmatprep.subr.mxu0 0.0
    %6288 = vmatpush1.xpose.msra.mxu0 %v5681
    %6289 = vmatprep.subr.mxu0 0.0
    %6290 = vmatpush1.xpose.msra.mxu0 %v5684
    %6291 = vmatprep.subr.mxu0 0.0
    %6292 = vmatpush1.xpose.msra.mxu0 %v5687
    %6293 = vmatprep.subr.mxu0 0.0
    %6294 = vmatpush1.xpose.msra.mxu0 %v5690
    %6295 = vmatprep.subr.mxu0 0.0
    %6296 = vmatpush1.xpose.msra.mxu0 %v5693
    %6297 = vmatprep.subr.mxu0 0.0
    %6298 = vmatpush1.xpose.msra.mxu0 %v5696
    %6299 = vmatprep.subr.mxu0 0.0
    %6300 = vmatpush1.xpose.msra.mxu0 %v5699
    %6301 = vmatprep.subr.mxu0 0.0
    %6302 = vmatpush1.xpose.msra.mxu0 %v5702
    %6303 = vmatprep.subr.mxu0 0.0
    %6304 = vmatpush1.xpose.msra.mxu0 %v5705
    %6305 = vmatprep.subr.mxu0 0.0
    %6306 = vmatpush1.xpose.msra.mxu0 %v5708
    %6307 = vmatprep.subr.mxu0 0.0
    %6308 = vmatpush1.xpose.msra.mxu0 %v5711
    %6309 = vmatprep.subr.mxu0 0.0
    %6310 = vmatpush1.xpose.msra.mxu0 %v5714
    %6311 = vmatprep.subr.mxu0 0.0
    %6312 = vmatpush1.xpose.msra.mxu0 %v5717
    %6313 = vmatprep.subr.mxu0 0.0
    %6314 = vmatpush1.xpose.msra.mxu0 %v5720
    %6315 = vmatprep.subr.mxu0 0.0
    %6316 = vmatpush1.xpose.msra.mxu0 %v5723
    %6317 = vmatprep.subr.mxu0 0.0
    %6318 = vmatpush1.xpose.msra.mxu0 %v5726
    %6319 = vmatprep.subr.mxu0 0.0
    %6320 = vmatpush1.xpose.msra.mxu0 %v5729
    %6321 = vmatprep.subr.mxu0 0.0
    %6322 = vmatpush1.xpose.msra.mxu0 %v5732
    %6323 = vmatprep.subr.mxu0 0.0
    %6324 = vmatpush1.xpose.msra.mxu0 %v5735
    %6325 = vmatprep.subr.mxu0 0.0
    %6326 = vmatpush1.xpose.msra.mxu0 %v5738
    %6327 = vmatprep.subr.mxu0 0.0
    %6328 = vmatpush1.xpose.msra.mxu0 %v5741
    %6329 = vmatprep.mubr.f32.mxu0 0.0
    %6330 = vmatmul.mubr.f32.gmra.mrb[0].mxu0 %v5069
    %v6331 = vpop.f32.mrb[0].mxu0
    %v6332 = vadd.f32 %v5067, %v6331
    %v6333 = vpop.f32.mrb[0].mxu0
    %v6334 = vadd.f32 %v5067, %v6333
    %6335 = vdwg.mxu0
    %6336 = vmatprep.subr.mxu0 0.0
    %6337 = vmatpush1.xpose.msra.mxu0 %v5744
    %6338 = vmatprep.subr.mxu0 0.0
    %6339 = vmatpush1.xpose.msra.mxu0 %v5747
    %6340 = vmatprep.subr.mxu0 0.0
    %6341 = vmatpush1.xpose.msra.mxu0 %v5750
    %6342 = vmatprep.subr.mxu0 0.0
    %6343 = vmatpush1.xpose.msra.mxu0 %v5753
    %6344 = vmatprep.subr.mxu0 0.0
    %6345 = vmatpush1.xpose.msra.mxu0 %v5756
    %6346 = vmatprep.subr.mxu0 0.0
    %6347 = vmatpush1.xpose.msra.mxu0 %v5759
    %6348 = vmatprep.subr.mxu0 0.0
    %6349 = vmatpush1.xpose.msra.mxu0 %v5762
    %6350 = vmatprep.subr.mxu0 0.0
    %6351 = vmatpush1.xpose.msra.mxu0 %v5765
    %6352 = vmatprep.subr.mxu0 0.0
    %6353 = vmatpush1.xpose.msra.mxu0 %v5768
    %6354 = vmatprep.subr.mxu0 0.0
    %6355 = vmatpush1.xpose.msra.mxu0 %v5771
    %6356 = vmatprep.subr.mxu0 0.0
    %6357 = vmatpush1.xpose.msra.mxu0 %v5774
    %6358 = vmatprep.subr.mxu0 0.0
    %6359 = vmatpush1.xpose.msra.mxu0 %v5777
    %6360 = vmatprep.subr.mxu0 0.0
    %6361 = vmatpush1.xpose.msra.mxu0 %v5780
    %6362 = vmatprep.subr.mxu0 0.0
    %6363 = vmatpush1.xpose.msra.mxu0 %v5783
    %6364 = vmatprep.subr.mxu0 0.0
    %6365 = vmatpush1.xpose.msra.mxu0 %v5786
    %6366 = vmatprep.subr.mxu0 0.0
    %6367 = vmatpush1.xpose.msra.mxu0 %v5789
    %6368 = vmatprep.subr.mxu0 0.0
    %6369 = vmatpush1.xpose.msra.mxu0 %v5792
    %6370 = vmatprep.subr.mxu0 0.0
    %6371 = vmatpush1.xpose.msra.mxu0 %v5795
    %6372 = vmatprep.subr.mxu0 0.0
    %6373 = vmatpush1.xpose.msra.mxu0 %v5798
    %6374 = vmatprep.subr.mxu0 0.0
    %6375 = vmatpush1.xpose.msra.mxu0 %v5801
    %6376 = vmatprep.subr.mxu0 0.0
    %6377 = vmatpush1.xpose.msra.mxu0 %v5804
    %6378 = vmatprep.subr.mxu0 0.0
    %6379 = vmatpush1.xpose.msra.mxu0 %v5807
    %6380 = vmatprep.subr.mxu0 0.0
    %6381 = vmatpush1.xpose.msra.mxu0 %v5810
    %6382 = vmatprep.subr.mxu0 0.0
    %6383 = vmatpush1.xpose.msra.mxu0 %v5813
    %6384 = vmatprep.subr.mxu0 0.0
    %6385 = vmatpush1.xpose.msra.mxu0 %v5816
    %6386 = vmatprep.subr.mxu0 0.0
    %6387 = vmatpush1.xpose.msra.mxu0 %v5819
    %6388 = vmatprep.subr.mxu0 0.0
    %6389 = vmatpush1.xpose.msra.mxu0 %v5822
    %6390 = vmatprep.subr.mxu0 0.0
    %6391 = vmatpush1.xpose.msra.mxu0 %v5825
    %6392 = vmatprep.subr.mxu0 0.0
    %6393 = vmatpush1.xpose.msra.mxu0 %v5828
    %6394 = vmatprep.subr.mxu0 0.0
    %6395 = vmatpush1.xpose.msra.mxu0 %v5831
    %6396 = vmatprep.subr.mxu0 0.0
    %6397 = vmatpush1.xpose.msra.mxu0 %v5834
    %6398 = vmatprep.subr.mxu0 0.0
    %6399 = vmatpush1.xpose.msra.mxu0 %v5837
    %6400 = vmatprep.mubr.f32.mxu0 0.0
    %6401 = vmatmul.mubr.f32.gmra.mrb[0].mxu0 %v5069
    %v6402 = vpop.f32.mrb[0].mxu0
    %v6403 = vadd.f32 %v5067, %v6402
    %v6404 = vpop.f32.mrb[0].mxu0
    %v6405 = vadd.f32 %v5067, %v6404
    %6406 = vdwg.mxu0
    %v6423 = vcombine.low %v5906, %v5908
    %v6424 = vcombine.low %v5977, %v5979
    %v6425 = vcombine.low %v6048, %v6050
    %v6426 = vcombine.low %v6119, %v6121
    %v6428 = vunpack.c.l.s4 1966171168
    %v6429 = vunpack.c.0.s8 %v6428
    %v6430 = vlaneseq
    %v6431 = vshrl.u32 %v6430, 7
    %v6432 = vsub.s32 %v6429, %v6431
    %v6433 = vrot.slane %v6423, %v6432
    %v6435 = vunpack.c.l.s4 1966171168
    %v6436 = vunpack.c.0.s8 %v6435
    %v6437 = vlaneseq
    %v6438 = vshrl.u32 %v6437, 7
    %v6439 = vsub.s32 %v6436, %v6438
    %v6440 = vrot.slane %v6424, %v6439
    %v6442 = vunpack.c.l.s4 1966171168
    %v6443 = vunpack.c.0.s8 %v6442
    %v6444 = vlaneseq
    %v6445 = vshrl.u32 %v6444, 7
    %v6446 = vsub.s32 %v6443, %v6445
    %v6447 = vrot.slane %v6425, %v6446
    %v6449 = vunpack.c.l.s4 1966171168
    %v6450 = vunpack.c.0.s8 %v6449
    %v6451 = vlaneseq
    %v6452 = vshrl.u32 %v6451, 7
    %v6453 = vsub.s32 %v6450, %v6452
    %v6454 = vrot.slane %v6426, %v6453
    %v6455 = vcombine.low %v6433, %v6440
    %v6456 = vcombine.low %v6447, %v6454
    %v6458 = vunpack.c.l.s4 1966171168
    %v6459 = vunpack.c.0.s8 %v6458
    %v6460 = vlaneseq
    %v6461 = vshrl.u32 %v6460, 7
    %v6462 = vsub.s32 %v6459, %v6461
    %v6463 = vrot.slane %v6455, %v6462
    %v6465 = vunpack.c.l.s4 1966171168
    %v6466 = vunpack.c.0.s8 %v6465
    %v6467 = vlaneseq
    %v6468 = vshrl.u32 %v6467, 7
    %v6469 = vsub.s32 %v6466, %v6468
    %v6470 = vrot.slane %v6456, %v6469
    %v6471 = vcombine.low %v6463, %v6470
    %v6472 = vcombine.low %v6190, %v6192
    %v6473 = vcombine.low %v6261, %v6263
    %v6474 = vcombine.low %v6332, %v6334
    %v6475 = vcombine.low %v6403, %v6405
    %v6477 = vunpack.c.l.s4 1966171168
    %v6478 = vunpack.c.0.s8 %v6477
    %v6479 = vlaneseq
    %v6480 = vshrl.u32 %v6479, 7
    %v6481 = vsub.s32 %v6478, %v6480
    %v6482 = vrot.slane %v6472, %v6481
    %v6484 = vunpack.c.l.s4 1966171168
    %v6485 = vunpack.c.0.s8 %v6484
    %v6486 = vlaneseq
    %v6487 = vshrl.u32 %v6486, 7
    %v6488 = vsub.s32 %v6485, %v6487
    %v6489 = vrot.slane %v6473, %v6488
    %v6491 = vunpack.c.l.s4 1966171168
    %v6492 = vunpack.c.0.s8 %v6491
    %v6493 = vlaneseq
    %v6494 = vshrl.u32 %v6493, 7
    %v6495 = vsub.s32 %v6492, %v6494
    %v6496 = vrot.slane %v6474, %v6495
    %v6498 = vunpack.c.l.s4 1966171168
    %v6499 = vunpack.c.0.s8 %v6498
    %v6500 = vlaneseq
    %v6501 = vshrl.u32 %v6500, 7
    %v6502 = vsub.s32 %v6499, %v6501
    %v6503 = vrot.slane %v6475, %v6502
    %v6504 = vcombine.low %v6482, %v6489
    %v6505 = vcombine.low %v6496, %v6503
    %v6507 = vunpack.c.l.s4 1966171168
    %v6508 = vunpack.c.0.s8 %v6507
    %v6509 = vlaneseq
    %v6510 = vshrl.u32 %v6509, 7
    %v6511 = vsub.s32 %v6508, %v6510
    %v6512 = vrot.slane %v6504, %v6511
    %v6514 = vunpack.c.l.s4 1966171168
    %v6515 = vunpack.c.0.s8 %v6514
    %v6516 = vlaneseq
    %v6517 = vshrl.u32 %v6516, 7
    %v6518 = vsub.s32 %v6515, %v6517
    %v6519 = vrot.slane %v6505, %v6518
    %v6520 = vcombine.low %v6512, %v6519
    %6523 = vst [vmem:[#allocation3] sm:$0xff] %v6471
    %6524 = vst [vmem:[#allocation3 + $0x8] sm:$0xff] %v6520
    // Predicated region
    $region30: #{tpu_custom_call.1} parent=1 // pred_check
      _
    $region31: #{tpu_custom_call.1} parent=1 // pred_check_branch
      %6526 = sbr.rel (0) target = $region33
    $region32: #{tpu_custom_call.1} parent=1 // pred_region
      %s6528 = ssub.s32 256, 256
      %6529 = vsyncadd [#allocation4], %s6528
      %s6531 = sshll.u32 [#allocation3], 4
      %s6532 = int_to_ptr.vmem [resolvable:$true] %s6531
      %6534 = dma.vmem_to_hbm [thread:$0]  %s6532, 256, %s7, [#allocation4]
    $region33: #{tpu_custom_call.1} parent=1 // pred_fallthru
      _
    // Predicated region
    $region34: #{tpu_custom_call.1} parent=1 // pred_check
      _
    $region35: #{tpu_custom_call.1} parent=1 // pred_check_branch
      %6536 = sbr.rel (0) target = $region37
    $region36: #{tpu_custom_call.1} parent=1 // pred_region
      %6537 = dma.done [#allocation4], 256
    $region37: #{tpu_custom_call.1} parent=1 // pred_fallthru
      _
    %6538 = vsyncpa [#allocation4], 1

</llo_original>
